<compile_context>
chip_gen: v7x
topology: tpu7x:2x2x1
jax: 0.10.0
libtpu: 0.0.40
codegen_flags: <defaults>
</compile_context>

<pallas_src>
import math

import jax
import jax.numpy as jnp
import numpy as np
from jax import lax
from jax.experimental import pallas as pl
from jax.experimental.pallas import tpu as pltpu


# ----------------------------- shared math helpers -----------------------------
def _layernorm(x, g, b, eps=1e-5):
    mu = jnp.mean(x, axis=-1, keepdims=True)
    var = jnp.mean(jnp.square(x - mu), axis=-1, keepdims=True)
    return (x - mu) * lax.rsqrt(var + eps) * g + b


def _mish(x):
    # x * tanh(softplus(x)); softplus with PyTorch-style threshold for stability.
    sp = jnp.where(x > 20.0, x, jnp.log1p(jnp.exp(jnp.minimum(x, 20.0))))
    return x * jnp.tanh(sp)


def distance_expansion(x, size):
    # crakn DistanceExpansion: (1 - (d - i/size))**2 for i in [0, size)  (reference path only)
    centers = jnp.arange(size, dtype=jnp.float32) / float(size)
    out = (1.0 - (x[..., None] - centers)) ** 2
    return out.reshape(x.shape[0], x.shape[1], -1)


# --------------------------------- fused kernel ----------------------------------
def _pst_fused_kernel(feat_ref, wrow_ref,
                      wpa_ref, wpb_ref, bpf_ref, wc_ref, bc_ref,
                      lng_ref, lnb_ref,
                      wq_ref, bq_ref, wk_ref, bk_ref, wv_ref, bv_ref,
                      wfold_ref, bfold_ref, wf_ref, bf_ref,
                      g2_ref, b2_ref, wd_ref, bd_ref, wo2_ref, bo2_ref,
                      o_ref):
    f32 = jnp.float32
    # All static shape info derived from the Refs.
    Bb, N, _ = feat_ref.shape
    k = wpa_ref.shape[0]
    A = wc_ref.shape[0]
    E = wc_ref.shape[1]
    HE = wq_ref.shape[-1]
    H = HE // E
    L = lng_ref.shape[0]
    M = Bb * N

    feat = feat_ref[...]                      # (Bb, N, 1+k+A) fused per-row features
    w_col = feat[:, :, 0:1]                   # (Bb, N, 1)  PDD row weights
    d = feat[:, :, 1:1 + k]                   # (Bb, N, k)  raw PDD distances
    comp = feat[:, :, 1 + k:]                 # (Bb, N, A)  pre-featurized atom vectors
    w_row = wrow_ref[...]                     # (Bb, 1, N)  transposed weights (host-side)

    # ---- embedding (DistanceExpansion folded into WpA / WpB / bp_fold), wide M = Bb*N ----
    u = (1.0 - d).reshape(M, k)
    str_emb = (jnp.dot(u * u, wpa_ref[...], preferred_element_type=f32)
               + jnp.dot(u, wpb_ref[...], preferred_element_type=f32)
               + bpf_ref[...])
    comp_emb = jnp.dot(comp.reshape(M, A), wc_ref[...], preferred_element_type=f32) + bc_ref[...]
    x = comp_emb + str_emb                    # (M, E)
    x_init = x

    # Additive attention-mask bias (0 / -9e15), built once; per-key softmax weights w_row.
    keep_col = w_col > 0.0                    # (Bb, N, 1)
    keep_row = w_row > 0.0                    # (Bb, 1, N)
    mask_bias = jnp.where(jnp.logical_and(keep_col, keep_row), 0.0, -9e15)   # (Bb, N, N)

    # ---- encoder layers: weights stacked over L, activations resident in VMEM/vregs ----
    def layer_body(l, x):
        g = lng_ref[l]                        # (1, E) shared LayerNorm (ln reused 3x)
        b = lnb_ref[l]
        xn = _layernorm(x, g, b)

        # Wide head-major QKV (scale 1/sqrt(E) folded into Wq/bq): 3 lane-dense matmuls.
        qw = jnp.dot(xn, wq_ref[l], preferred_element_type=f32) + bq_ref[l]   # (M, HE)
        kw = jnp.dot(xn, wk_ref[l], preferred_element_type=f32) + bk_ref[l]
        vw = jnp.dot(xn, wv_ref[l], preferred_element_type=f32) + bv_ref[l]
        q3 = qw.reshape(Bb, N, HE)
        k3 = kw.reshape(Bb, N, HE)
        v3 = vw.reshape(Bb, N, HE)

        heads = []
        for h in range(H):                    # small static head loop; per-head attention
            s = h * E
            qh = q3[:, :, s:s + E]
            kh = k3[:, :, s:s + E]
            vh = v3[:, :, s:s + E]
            logits = jnp.einsum('bqe,bke->bqk', qh, kh,
                                preferred_element_type=f32) + mask_bias
            m = jnp.max(logits, axis=-1, keepdims=True)
            e = jnp.exp(logits - m) * w_row                       # weighted softmax numerator
            denom = jnp.sum(e, axis=-1, keepdims=True)
            attn = e * pl.reciprocal(denom, approx=True)
            heads.append(jnp.einsum('bqk,bke->bqe', attn, vh,
                                    preferred_element_type=f32))  # (Bb, N, E)

        # Head-major (M, HE) buffer -> ONE folded (o_proj @ encoder.out) matmul.
        head_cat = jnp.concatenate(heads, axis=-1).reshape(M, HE)
        att = jnp.dot(head_cat, wfold_ref[l], preferred_element_type=f32) + bfold_ref[l]

        out1 = x + att
        out2 = _layernorm(out1, g, b)
        ffn = _mish(jnp.dot(out2, wf_ref[l], preferred_element_type=f32) + bf_ref[l])
        return _layernorm(out1 + ffn, g, b)

    x = lax.fori_loop(0, L, layer_body, x, unroll=True)

    # ---- weighted pooling + decoder + output (output_level == 'crystal') ----
    pooled = jnp.sum(w_col * (x + x_init).reshape(Bb, N, E), axis=1)          # (Bb, E)
    z = _layernorm(pooled, g2_ref[...], b2_ref[...])
    z = _mish(jnp.dot(z, wd_ref[...], preferred_element_type=f32) + bd_ref[...])
    o_ref[0] = jnp.dot(z, wo2_ref[...], preferred_element_type=f32) + bo2_ref[...]  # lane-dense


# ----------------------- kernel-side parameter preparation ------------------------
def prepare_kernel_params(params, cfg):
    E, H, L = cfg["E"], cfg["H"], cfg["encoders"]
    k, S = cfg["k"], cfg["expansion"]
    O = cfg["output_features"]
    OP = ((O + 127) // 128) * 128
    HE = H * E

    # Fold DistanceExpansion into the PDD embedding weight.
    # expanded[j*S+i] = (1 - (d_j - c_i))^2 = u_j^2 + 2*c_i*u_j + c_i^2 with u_j = 1 - d_j.
    centers = jnp.arange(S, dtype=jnp.float32) / float(S)
    Wp3 = params["Wp"].reshape(k, S, E)
    WpA = jnp.sum(Wp3, axis=1)                                            # u^2 coefficients
    WpB = jnp.sum(2.0 * centers[None, :, None] * Wp3, axis=1)             # u coefficients
    bpf = params["bp"] + jnp.sum((centers ** 2)[None, :, None] * Wp3, axis=(0, 1))[None, :]

    def stack(field):
        return jnp.stack([enc[field] for enc in params["encoders"]])

    scale = 1.0 / math.sqrt(E)        # head_dim == embedding_features (MHA embed_dim = E*H)
    Wq, bq, Wk, bk, Wv, bv, Wfold, bfold = ([] for _ in range(8))
    for enc in params["encoders"]:
        # qkv_proj columns are laid out per head as [q(E) | k(E) | v(E)]; regroup head-major.
        Wqkv = enc["Wqkv"].reshape(E, H, 3, E)
        bqkv = enc["bqkv"].reshape(1, H, 3, E)
        Wq.append(Wqkv[:, :, 0, :].reshape(E, HE) * scale)   # 1/sqrt(head_dim) folded in
        bq.append(bqkv[:, :, 0, :].reshape(1, HE) * scale)
        Wk.append(Wqkv[:, :, 1, :].reshape(E, HE))
        bk.append(bqkv[:, :, 1, :].reshape(1, HE))
        Wv.append(Wqkv[:, :, 2, :].reshape(E, HE))
        bv.append(bqkv[:, :, 2, :].reshape(1, HE))
        # Fold o_proj followed by encoder.out (both Linear, dropout p=0) into one (HE, E) matrix.
        Wfold.append(enc["Wo"] @ enc["Wout"])
        bfold.append(enc["bo"] @ enc["Wout"] + enc["bout"])

    Wo2p = jnp.zeros((E, OP), jnp.float32).at[:, :O].set(params["Wo2"])
    bo2p = jnp.zeros((1, OP), jnp.float32).at[:, :O].set(params["bo2"])

    return dict(
        WpA=WpA, WpB=WpB, bpf=bpf, Wc=params["Wc"], bc=params["bc"],
        ln_g=stack("ln_g"), ln_b=stack("ln_b"),
        Wq=jnp.stack(Wq), bq=jnp.stack(bq), Wk=jnp.stack(Wk), bk=jnp.stack(bk),
        Wv=jnp.stack(Wv), bv=jnp.stack(bv),
        Wfold=jnp.stack(Wfold), bfold=jnp.stack(bfold),
        Wf=stack("Wf"), bf=stack("bf"),
        g2=params["g2"], b2=params["b2"], Wd=params["Wd"], bd=params["bd"],
        Wo2p=Wo2p, bo2p=bo2p, OP=OP)


# -------------------------------- pallas wrapper -----------------------------------
def _rep_spec(shape):
    # Replicated weight block (fetched once; block index never changes).
    n = len(shape)
    return pl.BlockSpec(shape, lambda b, n=n: (0,) * n)


def pst_forward(str_fea, comp_fea, params, cfg, block_b=None):
    kp = prepare_kernel_params(params, cfg)
    B, N, _ = str_fea.shape
    E, H, L, k, A = cfg["E"], cfg["H"], cfg["encoders"], cfg["k"], cfg["A"]
    O = cfg["output_features"]
    OP = kp["OP"]
    HE = H * E
    F = 1 + k + A

    # Batch elements per grid step: target ~256 matmul rows (v6e/v7x MXU), 128 is plenty on v5e.
    # VMEM stays tiny at these feature widths; re-check against v7x's 64 MiB if E/N/Bb grow.
    if block_b is None:
        block_b = max(1, min(B, max(1, 256 // N)))
    n_blocks = pl.cdiv(B, block_b)
    Bpad = n_blocks * block_b

    if Bpad != B:
        # Edge-replicate the last element so padded rows have nonzero weights (no 0/0 softmax);
        # their outputs are sliced off below.
        reps = Bpad - B
        str_fea = jnp.concatenate(
            [str_fea, jnp.broadcast_to(str_fea[-1:], (reps,) + str_fea.shape[1:])], axis=0)
        comp_fea = jnp.concatenate(
            [comp_fea, jnp.broadcast_to(comp_fea[-1:], (reps,) + comp_fea.shape[1:])], axis=0)

    # TODO(synk): AtomFeaturizer is a file-backed (mat2vec.csv) embedding lookup;
    # comp_fea is treated as the already-featurized atom vectors.
    feat = jnp.concatenate([str_fea, comp_fea], axis=-1)          # (Bpad, N, 1+k+A), 1 DMA/step
    w_row = jnp.transpose(str_fea[:, :, 0:1], (0, 2, 1))          # (Bpad, 1, N)

    per_batch_args = [feat, w_row]
    per_batch_specs = [
        pl.BlockSpec((block_b, N, F), lambda b: (b, 0, 0)),
        pl.BlockSpec((block_b, 1, N), lambda b: (b, 0, 0)),
    ]
    rep_args = [kp["WpA"], kp["WpB"], kp["bpf"], kp["Wc"], kp["bc"],
                kp["ln_g"], kp["ln_b"],
                kp["Wq"], kp["bq"], kp["Wk"], kp["bk"], kp["Wv"], kp["bv"],
                kp["Wfold"], kp["bfold"], kp["Wf"], kp["bf"],
                kp["g2"], kp["b2"], kp["Wd"], kp["bd"], kp["Wo2p"], kp["bo2p"]]
    args = per_batch_args + rep_args
    in_specs = per_batch_specs + [_rep_spec(a.shape) for a in rep_args]

    # Advisory cost estimate for XLA scheduling around the custom call.
    flops_embed = 2 * N * (2 * k + A) * E
    flops_layer = (3 * 2 * N * E * HE + H * 4 * N * N * E + 2 * N * HE * E + 2 * N * E * E)
    flops_decode = 2 * E * E + 2 * E * OP
    cost = pl.CostEstimate(
        flops=int(B * (flops_embed + L * flops_layer + flops_decode)),
        transcendentals=int(B * (L * (H * N * N + 3 * N * E) + 3 * E)),
        bytes_accessed=int(sum(int(a.size) * 4 for a in args) + Bpad * OP * 4))

    out = pl.pallas_call(
        _pst_fused_kernel,
        out_shape=jax.ShapeDtypeStruct((n_blocks, block_b, OP), jnp.float32),
        grid=(n_blocks,),
        in_specs=in_specs,
        out_specs=pl.BlockSpec((1, block_b, OP), lambda b: (b, 0, 0)),
        compiler_params=pltpu.CompilerParams(
            dimension_semantics=("parallel",),            # grid steps shard across TCs on v7x
            vmem_limit_bytes=32 * 1024 * 1024),
        cost_estimate=cost,
    )(*args)
    return out.reshape(Bpad, OP)[:B, :O]


# ------------------------------ pure-JAX reference --------------------------------
def _encoder_ref(x, weights, p, H):
    B, N, E = x.shape
    xn = _layernorm(x, p["ln_g"], p["ln_b"])
    keep = weights > 0.0
    mask = jnp.logical_and(keep, jnp.swapaxes(keep, -2, -1))            # (B,N,N)
    qkv = xn @ p["Wqkv"] + p["bqkv"]
    qkv = qkv.reshape(B, N, H, 3 * E).transpose(0, 2, 1, 3)
    q, k, v = qkv[..., :E], qkv[..., E:2 * E], qkv[..., 2 * E:]
    logits = jnp.einsum("bhqe,bhke->bhqk", q, k) / math.sqrt(E)
    logits = jnp.where(mask[:, None], logits, -9e15)
    m = jnp.max(logits, axis=-1, keepdims=True)
    e = jnp.exp(logits - m) * jnp.swapaxes(weights, -2, -1)[:, None]
    attn = e / jnp.sum(e, axis=-1, keepdims=True)
    vals = jnp.einsum("bhqk,bhke->bhqe", attn, v)
    vals = vals.transpose(0, 2, 1, 3).reshape(B, N, H * E)
    att = vals @ p["Wo"] + p["bo"]
    att_out = att @ p["Wout"] + p["bout"]
    out1 = x + att_out
    out2 = _layernorm(out1, p["ln_g"], p["ln_b"])
    ffn = _mish(out2 @ p["Wf"] + p["bf"])
    return _layernorm(out1 + ffn, p["ln_g"], p["ln_b"])


def pst_reference(str_fea, comp_fea, params, cfg):
    weights = str_fea[:, :, 0:1]
    comp_features = comp_fea @ params["Wc"] + params["bc"]
    expanded = distance_expansion(str_fea[:, :, 1:], cfg["expansion"])
    str_features = expanded @ params["Wp"] + params["bp"]
    x = comp_features + str_features
    x_init = x
    for p_enc in params["encoders"]:
        x = _encoder_ref(x, weights, p_enc, cfg["H"])
    pooled = jnp.sum(weights * (x + x_init), axis=1)
    z = _layernorm(pooled, params["g2"], params["b2"])
    z = _mish(z @ params["Wd"] + params["bd"])
    return z @ params["Wo2"] + params["bo2"]


# --------------------------------- parameters -------------------------------------
def _dense(key, fan_in, fan_out, zero_bias=False):
    kw, kb = jax.random.split(key)
    lim = math.sqrt(6.0 / (fan_in + fan_out))
    W = jax.random.uniform(kw, (fan_in, fan_out), jnp.float32, -lim, lim)
    if zero_bias:
        b = jnp.zeros((1, fan_out), jnp.float32)
    else:
        b = jax.random.uniform(kb, (1, fan_out), jnp.float32, -0.05, 0.05)
    return W, b


def init_params(key, cfg):
    E, H, A = cfg["E"], cfg["H"], cfg["A"]
    KS = cfg["k"] * cfg["expansion"]
    keys = jax.random.split(key, 4 + cfg["encoders"])
    Wp, bp = _dense(keys[0], KS, E)
    Wc, bc = _dense(keys[1], A, E)
    encoders = []
    for li in range(cfg["encoders"]):
        ek = jax.random.split(keys[4 + li], 6)
        Wqkv, bqkv = _dense(ek[0], E, 3 * E * H, zero_bias=True)      # qkv_proj (bias=0)
        Wo, bo = _dense(ek[1], E * H, E * H, zero_bias=True)          # o_proj (bias=0)
        Wout, bout = _dense(ek[2], E * H, E)                          # encoder.out
        Wf, bf = _dense(ek[3], E, E)                                  # ffn linear
        ln_g = jnp.ones((1, E), jnp.float32)
        ln_b = jnp.zeros((1, E), jnp.float32)
        encoders.append(dict(ln_g=ln_g, ln_b=ln_b, Wqkv=Wqkv, bqkv=bqkv,
                             Wo=Wo, bo=bo, Wout=Wout, bout=bout, Wf=Wf, bf=bf))
    Wd, bd = _dense(keys[2], E, E)                                     # decoder[0]
    Wo2, bo2 = _dense(keys[3], E, cfg["output_features"])              # out
    return dict(Wp=Wp, bp=bp, Wc=Wc, bc=bc, encoders=encoders,
                g2=jnp.ones((1, E), jnp.float32), b2=jnp.zeros((1, E), jnp.float32),
                Wd=Wd, bd=bd, Wo2=Wo2, bo2=bo2)


# ------------------------------------ main ----------------------------------------
if __name__ == "__main__":
    cfg = dict(E=32, H=4, A=16, k=5, expansion=4, encoders=2, output_features=1)
    B, N = 2, 8

    root = jax.random.PRNGKey(0)
    kparam, k1, k2 = jax.random.split(root, 3)
    params = init_params(kparam, cfg)

    # str_fea: (B, N, 1 + k) -- column 0 is the PDD row weight, rest are distances.
    str_fea = jax.random.uniform(k1, (B, N, 1 + cfg["k"]), jnp.float32, 0.05, 1.0)
    str_fea = str_fea.at[1, N - 1, 0].set(0.0)   # a zero-weight (padded) atom to exercise the mask
    # comp_fea: (B, N, A) -- pre-featurized atom vectors (see AtomFeaturizer TODO above).
    comp_fea = jax.random.normal(k2, (B, N, cfg["A"]), jnp.float32)

    fwd = jax.jit(lambda s, c: pst_forward(s, c, params, cfg))
    out = jax.block_until_ready(fwd(str_fea, comp_fea))

    ref = jax.block_until_ready(pst_reference(str_fea, comp_fea, params, cfg))
    assert out.shape == (B, cfg["output_features"]), out.shape
    np.testing.assert_allclose(np.asarray(out), np.asarray(ref), rtol=5e-3, atol=5e-3)
    print("KERNEL_OK")
</pallas_src>

<mosaic_0001>
module attributes {stable_mosaic.version = 11 : i64} {
  func.func @_pst_fused_kernel(%arg0: i32, %arg1: memref<2x8x22xf32, #tpu.memory_space<vmem>>, %arg2: memref<2x1x8xf32, #tpu.memory_space<vmem>>, %arg3: memref<5x32xf32, #tpu.memory_space<vmem>>, %arg4: memref<5x32xf32, #tpu.memory_space<vmem>>, %arg5: memref<1x32xf32, #tpu.memory_space<vmem>>, %arg6: memref<16x32xf32, #tpu.memory_space<vmem>>, %arg7: memref<1x32xf32, #tpu.memory_space<vmem>>, %arg8: memref<2x1x32xf32, #tpu.memory_space<vmem>>, %arg9: memref<2x1x32xf32, #tpu.memory_space<vmem>>, %arg10: memref<2x32x128xf32, #tpu.memory_space<vmem>>, %arg11: memref<2x1x128xf32, #tpu.memory_space<vmem>>, %arg12: memref<2x32x128xf32, #tpu.memory_space<vmem>>, %arg13: memref<2x1x128xf32, #tpu.memory_space<vmem>>, %arg14: memref<2x32x128xf32, #tpu.memory_space<vmem>>, %arg15: memref<2x1x128xf32, #tpu.memory_space<vmem>>, %arg16: memref<2x128x32xf32, #tpu.memory_space<vmem>>, %arg17: memref<2x1x32xf32, #tpu.memory_space<vmem>>, %arg18: memref<2x32x32xf32, #tpu.memory_space<vmem>>, %arg19: memref<2x1x32xf32, #tpu.memory_space<vmem>>, %arg20: memref<1x32xf32, #tpu.memory_space<vmem>>, %arg21: memref<1x32xf32, #tpu.memory_space<vmem>>, %arg22: memref<32x32xf32, #tpu.memory_space<vmem>>, %arg23: memref<1x32xf32, #tpu.memory_space<vmem>>, %arg24: memref<32x128xf32, #tpu.memory_space<vmem>>, %arg25: memref<1x128xf32, #tpu.memory_space<vmem>>, %arg26: memref<1x2x128xf32, #tpu.memory_space<vmem>>) attributes {dimension_semantics = [#tpu.dimension_semantics<parallel>], iteration_bounds = array<i64: 1>, scalar_prefetch = 0 : i64, scratch_operands = 0 : i64, tpu.core_type = #tpu.core_type<tc>, window_params = [{transform_indices = @transform_0, window_bounds = array<i64: 2, 8, 22>}, {transform_indices = @transform_1, window_bounds = array<i64: 2, 1, 8>}, {pipeline_mode = #tpu.pipeline_mode<synchronous>, transform_indices = @transform_2, window_bounds = array<i64: 5, 32>}, {pipeline_mode = #tpu.pipeline_mode<synchronous>, transform_indices = @transform_3, window_bounds = array<i64: 5, 32>}, {pipeline_mode = #tpu.pipeline_mode<synchronous>, transform_indices = @transform_4, window_bounds = array<i64: 1, 32>}, {pipeline_mode = #tpu.pipeline_mode<synchronous>, transform_indices = @transform_5, window_bounds = array<i64: 16, 32>}, {pipeline_mode = #tpu.pipeline_mode<synchronous>, transform_indices = @transform_6, window_bounds = array<i64: 1, 32>}, {pipeline_mode = #tpu.pipeline_mode<synchronous>, transform_indices = @transform_7, window_bounds = array<i64: 2, 1, 32>}, {pipeline_mode = #tpu.pipeline_mode<synchronous>, transform_indices = @transform_8, window_bounds = array<i64: 2, 1, 32>}, {pipeline_mode = #tpu.pipeline_mode<synchronous>, transform_indices = @transform_9, window_bounds = array<i64: 2, 32, 128>}, {pipeline_mode = #tpu.pipeline_mode<synchronous>, transform_indices = @transform_10, window_bounds = array<i64: 2, 1, 128>}, {pipeline_mode = #tpu.pipeline_mode<synchronous>, transform_indices = @transform_11, window_bounds = array<i64: 2, 32, 128>}, {pipeline_mode = #tpu.pipeline_mode<synchronous>, transform_indices = @transform_12, window_bounds = array<i64: 2, 1, 128>}, {pipeline_mode = #tpu.pipeline_mode<synchronous>, transform_indices = @transform_13, window_bounds = array<i64: 2, 32, 128>}, {pipeline_mode = #tpu.pipeline_mode<synchronous>, transform_indices = @transform_14, window_bounds = array<i64: 2, 1, 128>}, {pipeline_mode = #tpu.pipeline_mode<synchronous>, transform_indices = @transform_15, window_bounds = array<i64: 2, 128, 32>}, {pipeline_mode = #tpu.pipeline_mode<synchronous>, transform_indices = @transform_16, window_bounds = array<i64: 2, 1, 32>}, {pipeline_mode = #tpu.pipeline_mode<synchronous>, transform_indices = @transform_17, window_bounds = array<i64: 2, 32, 32>}, {pipeline_mode = #tpu.pipeline_mode<synchronous>, transform_indices = @transform_18, window_bounds = array<i64: 2, 1, 32>}, {pipeline_mode = #tpu.pipeline_mode<synchronous>, transform_indices = @transform_19, window_bounds = array<i64: 1, 32>}, {pipeline_mode = #tpu.pipeline_mode<synchronous>, transform_indices = @transform_20, window_bounds = array<i64: 1, 32>}, {pipeline_mode = #tpu.pipeline_mode<synchronous>, transform_indices = @transform_21, window_bounds = array<i64: 32, 32>}, {pipeline_mode = #tpu.pipeline_mode<synchronous>, transform_indices = @transform_22, window_bounds = array<i64: 1, 32>}, {pipeline_mode = #tpu.pipeline_mode<synchronous>, transform_indices = @transform_23, window_bounds = array<i64: 32, 128>}, {pipeline_mode = #tpu.pipeline_mode<synchronous>, transform_indices = @transform_24, window_bounds = array<i64: 1, 128>}, {transform_indices = @transform_25, window_bounds = array<i64: 1, 2, 128>}]} {
    %c0 = arith.constant 0 : index
    %c0_0 = arith.constant 0 : index
    %c0_1 = arith.constant 0 : index
    %0 = vector.load %arg1[%c0, %c0_0, %c0_1] : memref<2x8x22xf32, #tpu.memory_space<vmem>>, vector<2x8x22xf32>
    %1 = vector.extract_strided_slice %0 {offsets = [0, 0, 0], sizes = [2, 8, 1], strides = [1, 1, 1]} : vector<2x8x22xf32> to vector<2x8x1xf32>
    %2 = vector.extract_strided_slice %0 {offsets = [0, 0, 1], sizes = [2, 8, 5], strides = [1, 1, 1]} : vector<2x8x22xf32> to vector<2x8x5xf32>
    %3 = vector.extract_strided_slice %0 {offsets = [0, 0, 6], sizes = [2, 8, 16], strides = [1, 1, 1]} : vector<2x8x22xf32> to vector<2x8x16xf32>
    %c0_2 = arith.constant 0 : index
    %c0_3 = arith.constant 0 : index
    %c0_4 = arith.constant 0 : index
    %4 = vector.load %arg2[%c0_2, %c0_3, %c0_4] : memref<2x1x8xf32, #tpu.memory_space<vmem>>, vector<2x1x8xf32>
    %cst = arith.constant 1.000000e+00 : f32
    %5 = vector.broadcast %cst : f32 to vector<2x8x5xf32>
    %6 = arith.subf %5, %2 : vector<2x8x5xf32>
    %7 = vector.shape_cast %6 : vector<2x8x5xf32> to vector<16x5xf32>
    %8 = arith.mulf %7, %7 : vector<16x5xf32>
    %c0_5 = arith.constant 0 : index
    %c0_6 = arith.constant 0 : index
    %9 = vector.load %arg3[%c0_5, %c0_6] : memref<5x32xf32, #tpu.memory_space<vmem>>, vector<5x32xf32>
    %cst_7 = arith.constant dense<0.000000e+00> : vector<16x32xf32>
    %10 = tpu.matmul %8, %9, %cst_7 {dimension_numbers = #tpu.dot_dimension_numbers<[1], [0], [0], [1], [0, 0, 1, 1], [], []>} : vector<16x5xf32>, vector<5x32xf32>, vector<16x32xf32> -> vector<16x32xf32>
    %c0_8 = arith.constant 0 : index
    %c0_9 = arith.constant 0 : index
    %11 = vector.load %arg4[%c0_8, %c0_9] : memref<5x32xf32, #tpu.memory_space<vmem>>, vector<5x32xf32>
    %cst_10 = arith.constant dense<0.000000e+00> : vector<16x32xf32>
    %12 = tpu.matmul %7, %11, %cst_10 {dimension_numbers = #tpu.dot_dimension_numbers<[1], [0], [0], [1], [0, 0, 1, 1], [], []>} : vector<16x5xf32>, vector<5x32xf32>, vector<16x32xf32> -> vector<16x32xf32>
    %13 = arith.addf %10, %12 : vector<16x32xf32>
    %c0_11 = arith.constant 0 : index
    %c0_12 = arith.constant 0 : index
    %14 = vector.load %arg5[%c0_11, %c0_12] : memref<1x32xf32, #tpu.memory_space<vmem>>, vector<1x32xf32>
    %15 = vector.broadcast %14 : vector<1x32xf32> to vector<16x32xf32>
    %16 = arith.addf %13, %15 : vector<16x32xf32>
    %17 = vector.shape_cast %3 : vector<2x8x16xf32> to vector<16x16xf32>
    %c0_13 = arith.constant 0 : index
    %c0_14 = arith.constant 0 : index
    %18 = vector.load %arg6[%c0_13, %c0_14] : memref<16x32xf32, #tpu.memory_space<vmem>>, vector<16x32xf32>
    %cst_15 = arith.constant dense<0.000000e+00> : vector<16x32xf32>
    %19 = tpu.matmul %17, %18, %cst_15 {dimension_numbers = #tpu.dot_dimension_numbers<[1], [0], [0], [1], [0, 0, 1, 1], [], []>} : vector<16x16xf32>, vector<16x32xf32>, vector<16x32xf32> -> vector<16x32xf32>
    %c0_16 = arith.constant 0 : index
    %c0_17 = arith.constant 0 : index
    %20 = vector.load %arg7[%c0_16, %c0_17] : memref<1x32xf32, #tpu.memory_space<vmem>>, vector<1x32xf32>
    %21 = vector.broadcast %20 : vector<1x32xf32> to vector<16x32xf32>
    %22 = arith.addf %19, %21 : vector<16x32xf32>
    %23 = arith.addf %22, %16 : vector<16x32xf32>
    %cst_18 = arith.constant 0.000000e+00 : f32
    %24 = vector.broadcast %cst_18 : f32 to vector<2x8x1xf32>
    %25 = arith.cmpf ogt, %1, %24 : vector<2x8x1xf32>
    %cst_19 = arith.constant 0.000000e+00 : f32
    %26 = vector.broadcast %cst_19 : f32 to vector<2x1x8xf32>
    %27 = arith.cmpf ogt, %4, %26 : vector<2x1x8xf32>
    %28 = vector.broadcast %25 : vector<2x8x1xi1> to vector<2x8x8xi1>
    %29 = vector.broadcast %27 : vector<2x1x8xi1> to vector<2x8x8xi1>
    %30 = arith.andi %28, %29 : vector<2x8x8xi1>
    %cst_20 = arith.constant 0.000000e+00 : f32
    %cst_21 = arith.constant -9.000000e+15 : f32
    %31 = vector.broadcast %cst_20 : f32 to vector<2x8x8xf32>
    %32 = vector.broadcast %cst_21 : f32 to vector<2x8x8xf32>
    %33 = arith.select %30, %31, %32 : vector<2x8x8xi1>, vector<2x8x8xf32>
    %c0_i32 = arith.constant 0 : i32
    %34 = arith.index_cast %c0_i32 : i32 to index
    %c0_22 = arith.constant 0 : index
    %c0_23 = arith.constant 0 : index
    %35 = vector.load %arg8[%34, %c0_22, %c0_23] : memref<2x1x32xf32, #tpu.memory_space<vmem>>, vector<1x1x32xf32>
    %36 = vector.shape_cast %35 : vector<1x1x32xf32> to vector<1x32xf32>
    %37 = arith.index_cast %c0_i32 : i32 to index
    %c0_24 = arith.constant 0 : index
    %c0_25 = arith.constant 0 : index
    %38 = vector.load %arg9[%37, %c0_24, %c0_25] : memref<2x1x32xf32, #tpu.memory_space<vmem>>, vector<1x1x32xf32>
    %39 = vector.shape_cast %38 : vector<1x1x32xf32> to vector<1x32xf32>
    %cst_26 = arith.constant dense<0.000000e+00> : vector<16xf32>
    %40 = vector.multi_reduction <add>, %23, %cst_26 [1] : vector<16x32xf32> to vector<16xf32>
    %41 = vector.shape_cast %40 : vector<16xf32> to vector<16x1xf32>
    %cst_27 = arith.constant 3.200000e+01 : f32
    %42 = vector.broadcast %cst_27 : f32 to vector<16x1xf32>
    %43 = arith.divf %41, %42 : vector<16x1xf32>
    %44 = vector.broadcast %43 : vector<16x1xf32> to vector<16x32xf32>
    %45 = arith.subf %23, %44 : vector<16x32xf32>
    %46 = arith.mulf %45, %45 : vector<16x32xf32>
    %cst_28 = arith.constant dense<0.000000e+00> : vector<16xf32>
    %47 = vector.multi_reduction <add>, %46, %cst_28 [1] : vector<16x32xf32> to vector<16xf32>
    %48 = vector.shape_cast %47 : vector<16xf32> to vector<16x1xf32>
    %cst_29 = arith.constant 3.200000e+01 : f32
    %49 = vector.broadcast %cst_29 : f32 to vector<16x1xf32>
    %50 = arith.divf %48, %49 : vector<16x1xf32>
    %51 = vector.broadcast %43 : vector<16x1xf32> to vector<16x32xf32>
    %52 = arith.subf %23, %51 : vector<16x32xf32>
    %cst_30 = arith.constant 9.99999974E-6 : f32
    %53 = vector.broadcast %cst_30 : f32 to vector<16x1xf32>
    %54 = arith.addf %50, %53 : vector<16x1xf32>
    %55 = math.rsqrt %54 : vector<16x1xf32>
    %56 = vector.broadcast %55 : vector<16x1xf32> to vector<16x32xf32>
    %57 = arith.mulf %52, %56 : vector<16x32xf32>
    %58 = vector.broadcast %36 : vector<1x32xf32> to vector<16x32xf32>
    %59 = arith.mulf %57, %58 : vector<16x32xf32>
    %60 = vector.broadcast %39 : vector<1x32xf32> to vector<16x32xf32>
    %61 = arith.addf %59, %60 : vector<16x32xf32>
    %62 = arith.index_cast %c0_i32 : i32 to index
    %c0_31 = arith.constant 0 : index
    %c0_32 = arith.constant 0 : index
    %63 = vector.load %arg10[%62, %c0_31, %c0_32] : memref<2x32x128xf32, #tpu.memory_space<vmem>>, vector<1x32x128xf32>
    %64 = vector.shape_cast %63 : vector<1x32x128xf32> to vector<32x128xf32>
    %cst_33 = arith.constant dense<0.000000e+00> : vector<16x128xf32>
    %65 = tpu.matmul %61, %64, %cst_33 {dimension_numbers = #tpu.dot_dimension_numbers<[1], [0], [0], [1], [0, 0, 1, 1], [], []>} : vector<16x32xf32>, vector<32x128xf32>, vector<16x128xf32> -> vector<16x128xf32>
    %66 = arith.index_cast %c0_i32 : i32 to index
    %c0_34 = arith.constant 0 : index
    %c0_35 = arith.constant 0 : index
    %67 = vector.load %arg11[%66, %c0_34, %c0_35] : memref<2x1x128xf32, #tpu.memory_space<vmem>>, vector<1x1x128xf32>
    %68 = vector.shape_cast %67 : vector<1x1x128xf32> to vector<1x128xf32>
    %69 = vector.broadcast %68 : vector<1x128xf32> to vector<16x128xf32>
    %70 = arith.addf %65, %69 : vector<16x128xf32>
    %71 = arith.index_cast %c0_i32 : i32 to index
    %c0_36 = arith.constant 0 : index
    %c0_37 = arith.constant 0 : index
    %72 = vector.load %arg12[%71, %c0_36, %c0_37] : memref<2x32x128xf32, #tpu.memory_space<vmem>>, vector<1x32x128xf32>
    %73 = vector.shape_cast %72 : vector<1x32x128xf32> to vector<32x128xf32>
    %cst_38 = arith.constant dense<0.000000e+00> : vector<16x128xf32>
    %74 = tpu.matmul %61, %73, %cst_38 {dimension_numbers = #tpu.dot_dimension_numbers<[1], [0], [0], [1], [0, 0, 1, 1], [], []>} : vector<16x32xf32>, vector<32x128xf32>, vector<16x128xf32> -> vector<16x128xf32>
    %75 = arith.index_cast %c0_i32 : i32 to index
    %c0_39 = arith.constant 0 : index
    %c0_40 = arith.constant 0 : index
    %76 = vector.load %arg13[%75, %c0_39, %c0_40] : memref<2x1x128xf32, #tpu.memory_space<vmem>>, vector<1x1x128xf32>
    %77 = vector.shape_cast %76 : vector<1x1x128xf32> to vector<1x128xf32>
    %78 = vector.broadcast %77 : vector<1x128xf32> to vector<16x128xf32>
    %79 = arith.addf %74, %78 : vector<16x128xf32>
    %80 = arith.index_cast %c0_i32 : i32 to index
    %c0_41 = arith.constant 0 : index
    %c0_42 = arith.constant 0 : index
    %81 = vector.load %arg14[%80, %c0_41, %c0_42] : memref<2x32x128xf32, #tpu.memory_space<vmem>>, vector<1x32x128xf32>
    %82 = vector.shape_cast %81 : vector<1x32x128xf32> to vector<32x128xf32>
    %cst_43 = arith.constant dense<0.000000e+00> : vector<16x128xf32>
    %83 = tpu.matmul %61, %82, %cst_43 {dimension_numbers = #tpu.dot_dimension_numbers<[1], [0], [0], [1], [0, 0, 1, 1], [], []>} : vector<16x32xf32>, vector<32x128xf32>, vector<16x128xf32> -> vector<16x128xf32>
    %84 = arith.index_cast %c0_i32 : i32 to index
    %c0_44 = arith.constant 0 : index
    %c0_45 = arith.constant 0 : index
    %85 = vector.load %arg15[%84, %c0_44, %c0_45] : memref<2x1x128xf32, #tpu.memory_space<vmem>>, vector<1x1x128xf32>
    %86 = vector.shape_cast %85 : vector<1x1x128xf32> to vector<1x128xf32>
    %87 = vector.broadcast %86 : vector<1x128xf32> to vector<16x128xf32>
    %88 = arith.addf %83, %87 : vector<16x128xf32>
    %89 = vector.shape_cast %70 : vector<16x128xf32> to vector<2x8x128xf32>
    %90 = vector.shape_cast %79 : vector<16x128xf32> to vector<2x8x128xf32>
    %91 = vector.shape_cast %88 : vector<16x128xf32> to vector<2x8x128xf32>
    %92 = vector.extract_strided_slice %89 {offsets = [0, 0, 0], sizes = [2, 8, 32], strides = [1, 1, 1]} : vector<2x8x128xf32> to vector<2x8x32xf32>
    %93 = vector.extract_strided_slice %90 {offsets = [0, 0, 0], sizes = [2, 8, 32], strides = [1, 1, 1]} : vector<2x8x128xf32> to vector<2x8x32xf32>
    %94 = vector.extract_strided_slice %91 {offsets = [0, 0, 0], sizes = [2, 8, 32], strides = [1, 1, 1]} : vector<2x8x128xf32> to vector<2x8x32xf32>
    "tpu.trace_start"() <{level = 10 : i32, message = "bqe,bke->bqk"}> : () -> ()
    %cst_46 = arith.constant dense<0.000000e+00> : vector<2x8x8xf32>
    %95 = tpu.matmul %92, %93, %cst_46 {dimension_numbers = #tpu.dot_dimension_numbers<[2], [2], [1], [1], [0, 0, 0, 1, 1, 1], [0], [0]>} : vector<2x8x32xf32>, vector<2x8x32xf32>, vector<2x8x8xf32> -> vector<2x8x8xf32>
    "tpu.trace_stop"() : () -> ()
    %96 = arith.addf %95, %33 : vector<2x8x8xf32>
    %cst_47 = arith.constant dense<0xFF800000> : vector<2x8xf32>
    %97 = vector.multi_reduction <maximumf>, %96, %cst_47 [2] : vector<2x8x8xf32> to vector<2x8xf32>
    %98 = vector.shape_cast %97 : vector<2x8xf32> to vector<2x8x1xf32>
    %99 = vector.broadcast %98 : vector<2x8x1xf32> to vector<2x8x8xf32>
    %100 = arith.subf %96, %99 : vector<2x8x8xf32>
    %101 = math.exp %100 : vector<2x8x8xf32>
    %102 = vector.broadcast %4 : vector<2x1x8xf32> to vector<2x8x8xf32>
    %103 = arith.mulf %101, %102 : vector<2x8x8xf32>
    %cst_48 = arith.constant dense<0.000000e+00> : vector<2x8xf32>
    %104 = vector.multi_reduction <add>, %103, %cst_48 [2] : vector<2x8x8xf32> to vector<2x8xf32>
    %105 = vector.shape_cast %104 : vector<2x8xf32> to vector<2x8x1xf32>
    %106 = tpu.reciprocal %105 {approx = true} : vector<2x8x1xf32> -> vector<2x8x1xf32>
    %107 = vector.broadcast %106 : vector<2x8x1xf32> to vector<2x8x8xf32>
    %108 = arith.mulf %103, %107 : vector<2x8x8xf32>
    "tpu.trace_start"() <{level = 10 : i32, message = "bqk,bke->bqe"}> : () -> ()
    %cst_49 = arith.constant dense<0.000000e+00> : vector<2x8x32xf32>
    %109 = tpu.matmul %108, %94, %cst_49 {dimension_numbers = #tpu.dot_dimension_numbers<[2], [1], [1], [2], [0, 0, 0, 1, 1, 2], [0], [0]>} : vector<2x8x8xf32>, vector<2x8x32xf32>, vector<2x8x32xf32> -> vector<2x8x32xf32>
    "tpu.trace_stop"() : () -> ()
    %110 = vector.extract_strided_slice %89 {offsets = [0, 0, 32], sizes = [2, 8, 32], strides = [1, 1, 1]} : vector<2x8x128xf32> to vector<2x8x32xf32>
    %111 = vector.extract_strided_slice %90 {offsets = [0, 0, 32], sizes = [2, 8, 32], strides = [1, 1, 1]} : vector<2x8x128xf32> to vector<2x8x32xf32>
    %112 = vector.extract_strided_slice %91 {offsets = [0, 0, 32], sizes = [2, 8, 32], strides = [1, 1, 1]} : vector<2x8x128xf32> to vector<2x8x32xf32>
    "tpu.trace_start"() <{level = 10 : i32, message = "bqe,bke->bqk"}> : () -> ()
    %cst_50 = arith.constant dense<0.000000e+00> : vector<2x8x8xf32>
    %113 = tpu.matmul %110, %111, %cst_50 {dimension_numbers = #tpu.dot_dimension_numbers<[2], [2], [1], [1], [0, 0, 0, 1, 1, 1], [0], [0]>} : vector<2x8x32xf32>, vector<2x8x32xf32>, vector<2x8x8xf32> -> vector<2x8x8xf32>
    "tpu.trace_stop"() : () -> ()
    %114 = arith.addf %113, %33 : vector<2x8x8xf32>
    %cst_51 = arith.constant dense<0xFF800000> : vector<2x8xf32>
    %115 = vector.multi_reduction <maximumf>, %114, %cst_51 [2] : vector<2x8x8xf32> to vector<2x8xf32>
    %116 = vector.shape_cast %115 : vector<2x8xf32> to vector<2x8x1xf32>
    %117 = vector.broadcast %116 : vector<2x8x1xf32> to vector<2x8x8xf32>
    %118 = arith.subf %114, %117 : vector<2x8x8xf32>
    %119 = math.exp %118 : vector<2x8x8xf32>
    %120 = vector.broadcast %4 : vector<2x1x8xf32> to vector<2x8x8xf32>
    %121 = arith.mulf %119, %120 : vector<2x8x8xf32>
    %cst_52 = arith.constant dense<0.000000e+00> : vector<2x8xf32>
    %122 = vector.multi_reduction <add>, %121, %cst_52 [2] : vector<2x8x8xf32> to vector<2x8xf32>
    %123 = vector.shape_cast %122 : vector<2x8xf32> to vector<2x8x1xf32>
    %124 = tpu.reciprocal %123 {approx = true} : vector<2x8x1xf32> -> vector<2x8x1xf32>
    %125 = vector.broadcast %124 : vector<2x8x1xf32> to vector<2x8x8xf32>
    %126 = arith.mulf %121, %125 : vector<2x8x8xf32>
    "tpu.trace_start"() <{level = 10 : i32, message = "bqk,bke->bqe"}> : () -> ()
    %cst_53 = arith.constant dense<0.000000e+00> : vector<2x8x32xf32>
    %127 = tpu.matmul %126, %112, %cst_53 {dimension_numbers = #tpu.dot_dimension_numbers<[2], [1], [1], [2], [0, 0, 0, 1, 1, 2], [0], [0]>} : vector<2x8x8xf32>, vector<2x8x32xf32>, vector<2x8x32xf32> -> vector<2x8x32xf32>
    "tpu.trace_stop"() : () -> ()
    %128 = vector.extract_strided_slice %89 {offsets = [0, 0, 64], sizes = [2, 8, 32], strides = [1, 1, 1]} : vector<2x8x128xf32> to vector<2x8x32xf32>
    %129 = vector.extract_strided_slice %90 {offsets = [0, 0, 64], sizes = [2, 8, 32], strides = [1, 1, 1]} : vector<2x8x128xf32> to vector<2x8x32xf32>
    %130 = vector.extract_strided_slice %91 {offsets = [0, 0, 64], sizes = [2, 8, 32], strides = [1, 1, 1]} : vector<2x8x128xf32> to vector<2x8x32xf32>
    "tpu.trace_start"() <{level = 10 : i32, message = "bqe,bke->bqk"}> : () -> ()
    %cst_54 = arith.constant dense<0.000000e+00> : vector<2x8x8xf32>
    %131 = tpu.matmul %128, %129, %cst_54 {dimension_numbers = #tpu.dot_dimension_numbers<[2], [2], [1], [1], [0, 0, 0, 1, 1, 1], [0], [0]>} : vector<2x8x32xf32>, vector<2x8x32xf32>, vector<2x8x8xf32> -> vector<2x8x8xf32>
    "tpu.trace_stop"() : () -> ()
    %132 = arith.addf %131, %33 : vector<2x8x8xf32>
    %cst_55 = arith.constant dense<0xFF800000> : vector<2x8xf32>
    %133 = vector.multi_reduction <maximumf>, %132, %cst_55 [2] : vector<2x8x8xf32> to vector<2x8xf32>
    %134 = vector.shape_cast %133 : vector<2x8xf32> to vector<2x8x1xf32>
    %135 = vector.broadcast %134 : vector<2x8x1xf32> to vector<2x8x8xf32>
    %136 = arith.subf %132, %135 : vector<2x8x8xf32>
    %137 = math.exp %136 : vector<2x8x8xf32>
    %138 = vector.broadcast %4 : vector<2x1x8xf32> to vector<2x8x8xf32>
    %139 = arith.mulf %137, %138 : vector<2x8x8xf32>
    %cst_56 = arith.constant dense<0.000000e+00> : vector<2x8xf32>
    %140 = vector.multi_reduction <add>, %139, %cst_56 [2] : vector<2x8x8xf32> to vector<2x8xf32>
    %141 = vector.shape_cast %140 : vector<2x8xf32> to vector<2x8x1xf32>
    %142 = tpu.reciprocal %141 {approx = true} : vector<2x8x1xf32> -> vector<2x8x1xf32>
    %143 = vector.broadcast %142 : vector<2x8x1xf32> to vector<2x8x8xf32>
    %144 = arith.mulf %139, %143 : vector<2x8x8xf32>
    "tpu.trace_start"() <{level = 10 : i32, message = "bqk,bke->bqe"}> : () -> ()
    %cst_57 = arith.constant dense<0.000000e+00> : vector<2x8x32xf32>
    %145 = tpu.matmul %144, %130, %cst_57 {dimension_numbers = #tpu.dot_dimension_numbers<[2], [1], [1], [2], [0, 0, 0, 1, 1, 2], [0], [0]>} : vector<2x8x8xf32>, vector<2x8x32xf32>, vector<2x8x32xf32> -> vector<2x8x32xf32>
    "tpu.trace_stop"() : () -> ()
    %146 = vector.extract_strided_slice %89 {offsets = [0, 0, 96], sizes = [2, 8, 32], strides = [1, 1, 1]} : vector<2x8x128xf32> to vector<2x8x32xf32>
    %147 = vector.extract_strided_slice %90 {offsets = [0, 0, 96], sizes = [2, 8, 32], strides = [1, 1, 1]} : vector<2x8x128xf32> to vector<2x8x32xf32>
    %148 = vector.extract_strided_slice %91 {offsets = [0, 0, 96], sizes = [2, 8, 32], strides = [1, 1, 1]} : vector<2x8x128xf32> to vector<2x8x32xf32>
    "tpu.trace_start"() <{level = 10 : i32, message = "bqe,bke->bqk"}> : () -> ()
    %cst_58 = arith.constant dense<0.000000e+00> : vector<2x8x8xf32>
    %149 = tpu.matmul %146, %147, %cst_58 {dimension_numbers = #tpu.dot_dimension_numbers<[2], [2], [1], [1], [0, 0, 0, 1, 1, 1], [0], [0]>} : vector<2x8x32xf32>, vector<2x8x32xf32>, vector<2x8x8xf32> -> vector<2x8x8xf32>
    "tpu.trace_stop"() : () -> ()
    %150 = arith.addf %149, %33 : vector<2x8x8xf32>
    %cst_59 = arith.constant dense<0xFF800000> : vector<2x8xf32>
    %151 = vector.multi_reduction <maximumf>, %150, %cst_59 [2] : vector<2x8x8xf32> to vector<2x8xf32>
    %152 = vector.shape_cast %151 : vector<2x8xf32> to vector<2x8x1xf32>
    %153 = vector.broadcast %152 : vector<2x8x1xf32> to vector<2x8x8xf32>
    %154 = arith.subf %150, %153 : vector<2x8x8xf32>
    %155 = math.exp %154 : vector<2x8x8xf32>
    %156 = vector.broadcast %4 : vector<2x1x8xf32> to vector<2x8x8xf32>
    %157 = arith.mulf %155, %156 : vector<2x8x8xf32>
    %cst_60 = arith.constant dense<0.000000e+00> : vector<2x8xf32>
    %158 = vector.multi_reduction <add>, %157, %cst_60 [2] : vector<2x8x8xf32> to vector<2x8xf32>
    %159 = vector.shape_cast %158 : vector<2x8xf32> to vector<2x8x1xf32>
    %160 = tpu.reciprocal %159 {approx = true} : vector<2x8x1xf32> -> vector<2x8x1xf32>
    %161 = vector.broadcast %160 : vector<2x8x1xf32> to vector<2x8x8xf32>
    %162 = arith.mulf %157, %161 : vector<2x8x8xf32>
    "tpu.trace_start"() <{level = 10 : i32, message = "bqk,bke->bqe"}> : () -> ()
    %cst_61 = arith.constant dense<0.000000e+00> : vector<2x8x32xf32>
    %163 = tpu.matmul %162, %148, %cst_61 {dimension_numbers = #tpu.dot_dimension_numbers<[2], [1], [1], [2], [0, 0, 0, 1, 1, 2], [0], [0]>} : vector<2x8x8xf32>, vector<2x8x32xf32>, vector<2x8x32xf32> -> vector<2x8x32xf32>
    "tpu.trace_stop"() : () -> ()
    %164 = tpu.concatenate %109, %127, %145, %163 in 2 : vector<2x8x32xf32>, vector<2x8x32xf32>, vector<2x8x32xf32>, vector<2x8x32xf32> -> vector<2x8x128xf32>
    %165 = vector.shape_cast %164 : vector<2x8x128xf32> to vector<16x128xf32>
    %166 = arith.index_cast %c0_i32 : i32 to index
    %c0_62 = arith.constant 0 : index
    %c0_63 = arith.constant 0 : index
    %167 = vector.load %arg16[%166, %c0_62, %c0_63] : memref<2x128x32xf32, #tpu.memory_space<vmem>>, vector<1x128x32xf32>
    %168 = vector.shape_cast %167 : vector<1x128x32xf32> to vector<128x32xf32>
    %cst_64 = arith.constant dense<0.000000e+00> : vector<16x32xf32>
    %169 = tpu.matmul %165, %168, %cst_64 {dimension_numbers = #tpu.dot_dimension_numbers<[1], [0], [0], [1], [0, 0, 1, 1], [], []>} : vector<16x128xf32>, vector<128x32xf32>, vector<16x32xf32> -> vector<16x32xf32>
    %170 = arith.index_cast %c0_i32 : i32 to index
    %c0_65 = arith.constant 0 : index
    %c0_66 = arith.constant 0 : index
    %171 = vector.load %arg17[%170, %c0_65, %c0_66] : memref<2x1x32xf32, #tpu.memory_space<vmem>>, vector<1x1x32xf32>
    %172 = vector.shape_cast %171 : vector<1x1x32xf32> to vector<1x32xf32>
    %173 = vector.broadcast %172 : vector<1x32xf32> to vector<16x32xf32>
    %174 = arith.addf %169, %173 : vector<16x32xf32>
    %175 = arith.addf %23, %174 : vector<16x32xf32>
    %cst_67 = arith.constant dense<0.000000e+00> : vector<16xf32>
    %176 = vector.multi_reduction <add>, %175, %cst_67 [1] : vector<16x32xf32> to vector<16xf32>
    %177 = vector.shape_cast %176 : vector<16xf32> to vector<16x1xf32>
    %cst_68 = arith.constant 3.200000e+01 : f32
    %178 = vector.broadcast %cst_68 : f32 to vector<16x1xf32>
    %179 = arith.divf %177, %178 : vector<16x1xf32>
    %180 = vector.broadcast %179 : vector<16x1xf32> to vector<16x32xf32>
    %181 = arith.subf %175, %180 : vector<16x32xf32>
    %182 = arith.mulf %181, %181 : vector<16x32xf32>
    %cst_69 = arith.constant dense<0.000000e+00> : vector<16xf32>
    %183 = vector.multi_reduction <add>, %182, %cst_69 [1] : vector<16x32xf32> to vector<16xf32>
    %184 = vector.shape_cast %183 : vector<16xf32> to vector<16x1xf32>
    %cst_70 = arith.constant 3.200000e+01 : f32
    %185 = vector.broadcast %cst_70 : f32 to vector<16x1xf32>
    %186 = arith.divf %184, %185 : vector<16x1xf32>
    %187 = vector.broadcast %179 : vector<16x1xf32> to vector<16x32xf32>
    %188 = arith.subf %175, %187 : vector<16x32xf32>
    %cst_71 = arith.constant 9.99999974E-6 : f32
    %189 = vector.broadcast %cst_71 : f32 to vector<16x1xf32>
    %190 = arith.addf %186, %189 : vector<16x1xf32>
    %191 = math.rsqrt %190 : vector<16x1xf32>
    %192 = vector.broadcast %191 : vector<16x1xf32> to vector<16x32xf32>
    %193 = arith.mulf %188, %192 : vector<16x32xf32>
    %194 = vector.broadcast %36 : vector<1x32xf32> to vector<16x32xf32>
    %195 = arith.mulf %193, %194 : vector<16x32xf32>
    %196 = vector.broadcast %39 : vector<1x32xf32> to vector<16x32xf32>
    %197 = arith.addf %195, %196 : vector<16x32xf32>
    %198 = arith.index_cast %c0_i32 : i32 to index
    %c0_72 = arith.constant 0 : index
    %c0_73 = arith.constant 0 : index
    %199 = vector.load %arg18[%198, %c0_72, %c0_73] : memref<2x32x32xf32, #tpu.memory_space<vmem>>, vector<1x32x32xf32>
    %200 = vector.shape_cast %199 : vector<1x32x32xf32> to vector<32x32xf32>
    %cst_74 = arith.constant dense<0.000000e+00> : vector<16x32xf32>
    %201 = tpu.matmul %197, %200, %cst_74 {dimension_numbers = #tpu.dot_dimension_numbers<[1], [0], [0], [1], [0, 0, 1, 1], [], []>} : vector<16x32xf32>, vector<32x32xf32>, vector<16x32xf32> -> vector<16x32xf32>
    %202 = arith.index_cast %c0_i32 : i32 to index
    %c0_75 = arith.constant 0 : index
    %c0_76 = arith.constant 0 : index
    %203 = vector.load %arg19[%202, %c0_75, %c0_76] : memref<2x1x32xf32, #tpu.memory_space<vmem>>, vector<1x1x32xf32>
    %204 = vector.shape_cast %203 : vector<1x1x32xf32> to vector<1x32xf32>
    %205 = vector.broadcast %204 : vector<1x32xf32> to vector<16x32xf32>
    %206 = arith.addf %201, %205 : vector<16x32xf32>
    %cst_77 = arith.constant 2.000000e+01 : f32
    %207 = vector.broadcast %cst_77 : f32 to vector<16x32xf32>
    %208 = arith.cmpf ogt, %206, %207 : vector<16x32xf32>
    %cst_78 = arith.constant 2.000000e+01 : f32
    %209 = vector.broadcast %cst_78 : f32 to vector<16x32xf32>
    %210 = arith.minimumf %206, %209 : vector<16x32xf32>
    %211 = math.exp %210 : vector<16x32xf32>
    %212 = math.log1p %211 : vector<16x32xf32>
    %213 = arith.select %208, %206, %212 : vector<16x32xi1>, vector<16x32xf32>
    %214 = math.tanh %213 : vector<16x32xf32>
    %215 = arith.mulf %206, %214 : vector<16x32xf32>
    %216 = arith.addf %175, %215 : vector<16x32xf32>
    %cst_79 = arith.constant dense<0.000000e+00> : vector<16xf32>
    %217 = vector.multi_reduction <add>, %216, %cst_79 [1] : vector<16x32xf32> to vector<16xf32>
    %218 = vector.shape_cast %217 : vector<16xf32> to vector<16x1xf32>
    %cst_80 = arith.constant 3.200000e+01 : f32
    %219 = vector.broadcast %cst_80 : f32 to vector<16x1xf32>
    %220 = arith.divf %218, %219 : vector<16x1xf32>
    %221 = vector.broadcast %220 : vector<16x1xf32> to vector<16x32xf32>
    %222 = arith.subf %216, %221 : vector<16x32xf32>
    %223 = arith.mulf %222, %222 : vector<16x32xf32>
    %cst_81 = arith.constant dense<0.000000e+00> : vector<16xf32>
    %224 = vector.multi_reduction <add>, %223, %cst_81 [1] : vector<16x32xf32> to vector<16xf32>
    %225 = vector.shape_cast %224 : vector<16xf32> to vector<16x1xf32>
    %cst_82 = arith.constant 3.200000e+01 : f32
    %226 = vector.broadcast %cst_82 : f32 to vector<16x1xf32>
    %227 = arith.divf %225, %226 : vector<16x1xf32>
    %228 = vector.broadcast %220 : vector<16x1xf32> to vector<16x32xf32>
    %229 = arith.subf %216, %228 : vector<16x32xf32>
    %cst_83 = arith.constant 9.99999974E-6 : f32
    %230 = vector.broadcast %cst_83 : f32 to vector<16x1xf32>
    %231 = arith.addf %227, %230 : vector<16x1xf32>
    %232 = math.rsqrt %231 : vector<16x1xf32>
    %233 = vector.broadcast %232 : vector<16x1xf32> to vector<16x32xf32>
    %234 = arith.mulf %229, %233 : vector<16x32xf32>
    %235 = vector.broadcast %36 : vector<1x32xf32> to vector<16x32xf32>
    %236 = arith.mulf %234, %235 : vector<16x32xf32>
    %237 = vector.broadcast %39 : vector<1x32xf32> to vector<16x32xf32>
    %238 = arith.addf %236, %237 : vector<16x32xf32>
    %c1_i32 = arith.constant 1 : i32
    %239 = arith.index_cast %c1_i32 : i32 to index
    %c0_84 = arith.constant 0 : index
    %c0_85 = arith.constant 0 : index
    %240 = vector.load %arg8[%239, %c0_84, %c0_85] : memref<2x1x32xf32, #tpu.memory_space<vmem>>, vector<1x1x32xf32>
    %241 = vector.shape_cast %240 : vector<1x1x32xf32> to vector<1x32xf32>
    %242 = arith.index_cast %c1_i32 : i32 to index
    %c0_86 = arith.constant 0 : index
    %c0_87 = arith.constant 0 : index
    %243 = vector.load %arg9[%242, %c0_86, %c0_87] : memref<2x1x32xf32, #tpu.memory_space<vmem>>, vector<1x1x32xf32>
    %244 = vector.shape_cast %243 : vector<1x1x32xf32> to vector<1x32xf32>
    %cst_88 = arith.constant dense<0.000000e+00> : vector<16xf32>
    %245 = vector.multi_reduction <add>, %238, %cst_88 [1] : vector<16x32xf32> to vector<16xf32>
    %246 = vector.shape_cast %245 : vector<16xf32> to vector<16x1xf32>
    %cst_89 = arith.constant 3.200000e+01 : f32
    %247 = vector.broadcast %cst_89 : f32 to vector<16x1xf32>
    %248 = arith.divf %246, %247 : vector<16x1xf32>
    %249 = vector.broadcast %248 : vector<16x1xf32> to vector<16x32xf32>
    %250 = arith.subf %238, %249 : vector<16x32xf32>
    %251 = arith.mulf %250, %250 : vector<16x32xf32>
    %cst_90 = arith.constant dense<0.000000e+00> : vector<16xf32>
    %252 = vector.multi_reduction <add>, %251, %cst_90 [1] : vector<16x32xf32> to vector<16xf32>
    %253 = vector.shape_cast %252 : vector<16xf32> to vector<16x1xf32>
    %cst_91 = arith.constant 3.200000e+01 : f32
    %254 = vector.broadcast %cst_91 : f32 to vector<16x1xf32>
    %255 = arith.divf %253, %254 : vector<16x1xf32>
    %256 = vector.broadcast %248 : vector<16x1xf32> to vector<16x32xf32>
    %257 = arith.subf %238, %256 : vector<16x32xf32>
    %cst_92 = arith.constant 9.99999974E-6 : f32
    %258 = vector.broadcast %cst_92 : f32 to vector<16x1xf32>
    %259 = arith.addf %255, %258 : vector<16x1xf32>
    %260 = math.rsqrt %259 : vector<16x1xf32>
    %261 = vector.broadcast %260 : vector<16x1xf32> to vector<16x32xf32>
    %262 = arith.mulf %257, %261 : vector<16x32xf32>
    %263 = vector.broadcast %241 : vector<1x32xf32> to vector<16x32xf32>
    %264 = arith.mulf %262, %263 : vector<16x32xf32>
    %265 = vector.broadcast %244 : vector<1x32xf32> to vector<16x32xf32>
    %266 = arith.addf %264, %265 : vector<16x32xf32>
    %267 = arith.index_cast %c1_i32 : i32 to index
    %c0_93 = arith.constant 0 : index
    %c0_94 = arith.constant 0 : index
    %268 = vector.load %arg10[%267, %c0_93, %c0_94] : memref<2x32x128xf32, #tpu.memory_space<vmem>>, vector<1x32x128xf32>
    %269 = vector.shape_cast %268 : vector<1x32x128xf32> to vector<32x128xf32>
    %cst_95 = arith.constant dense<0.000000e+00> : vector<16x128xf32>
    %270 = tpu.matmul %266, %269, %cst_95 {dimension_numbers = #tpu.dot_dimension_numbers<[1], [0], [0], [1], [0, 0, 1, 1], [], []>} : vector<16x32xf32>, vector<32x128xf32>, vector<16x128xf32> -> vector<16x128xf32>
    %271 = arith.index_cast %c1_i32 : i32 to index
    %c0_96 = arith.constant 0 : index
    %c0_97 = arith.constant 0 : index
    %272 = vector.load %arg11[%271, %c0_96, %c0_97] : memref<2x1x128xf32, #tpu.memory_space<vmem>>, vector<1x1x128xf32>
    %273 = vector.shape_cast %272 : vector<1x1x128xf32> to vector<1x128xf32>
    %274 = vector.broadcast %273 : vector<1x128xf32> to vector<16x128xf32>
    %275 = arith.addf %270, %274 : vector<16x128xf32>
    %276 = arith.index_cast %c1_i32 : i32 to index
    %c0_98 = arith.constant 0 : index
    %c0_99 = arith.constant 0 : index
    %277 = vector.load %arg12[%276, %c0_98, %c0_99] : memref<2x32x128xf32, #tpu.memory_space<vmem>>, vector<1x32x128xf32>
    %278 = vector.shape_cast %277 : vector<1x32x128xf32> to vector<32x128xf32>
    %cst_100 = arith.constant dense<0.000000e+00> : vector<16x128xf32>
    %279 = tpu.matmul %266, %278, %cst_100 {dimension_numbers = #tpu.dot_dimension_numbers<[1], [0], [0], [1], [0, 0, 1, 1], [], []>} : vector<16x32xf32>, vector<32x128xf32>, vector<16x128xf32> -> vector<16x128xf32>
    %280 = arith.index_cast %c1_i32 : i32 to index
    %c0_101 = arith.constant 0 : index
    %c0_102 = arith.constant 0 : index
    %281 = vector.load %arg13[%280, %c0_101, %c0_102] : memref<2x1x128xf32, #tpu.memory_space<vmem>>, vector<1x1x128xf32>
    %282 = vector.shape_cast %281 : vector<1x1x128xf32> to vector<1x128xf32>
    %283 = vector.broadcast %282 : vector<1x128xf32> to vector<16x128xf32>
    %284 = arith.addf %279, %283 : vector<16x128xf32>
    %285 = arith.index_cast %c1_i32 : i32 to index
    %c0_103 = arith.constant 0 : index
    %c0_104 = arith.constant 0 : index
    %286 = vector.load %arg14[%285, %c0_103, %c0_104] : memref<2x32x128xf32, #tpu.memory_space<vmem>>, vector<1x32x128xf32>
    %287 = vector.shape_cast %286 : vector<1x32x128xf32> to vector<32x128xf32>
    %cst_105 = arith.constant dense<0.000000e+00> : vector<16x128xf32>
    %288 = tpu.matmul %266, %287, %cst_105 {dimension_numbers = #tpu.dot_dimension_numbers<[1], [0], [0], [1], [0, 0, 1, 1], [], []>} : vector<16x32xf32>, vector<32x128xf32>, vector<16x128xf32> -> vector<16x128xf32>
    %289 = arith.index_cast %c1_i32 : i32 to index
    %c0_106 = arith.constant 0 : index
    %c0_107 = arith.constant 0 : index
    %290 = vector.load %arg15[%289, %c0_106, %c0_107] : memref<2x1x128xf32, #tpu.memory_space<vmem>>, vector<1x1x128xf32>
    %291 = vector.shape_cast %290 : vector<1x1x128xf32> to vector<1x128xf32>
    %292 = vector.broadcast %291 : vector<1x128xf32> to vector<16x128xf32>
    %293 = arith.addf %288, %292 : vector<16x128xf32>
    %294 = vector.shape_cast %275 : vector<16x128xf32> to vector<2x8x128xf32>
    %295 = vector.shape_cast %284 : vector<16x128xf32> to vector<2x8x128xf32>
    %296 = vector.shape_cast %293 : vector<16x128xf32> to vector<2x8x128xf32>
    %297 = vector.extract_strided_slice %294 {offsets = [0, 0, 0], sizes = [2, 8, 32], strides = [1, 1, 1]} : vector<2x8x128xf32> to vector<2x8x32xf32>
    %298 = vector.extract_strided_slice %295 {offsets = [0, 0, 0], sizes = [2, 8, 32], strides = [1, 1, 1]} : vector<2x8x128xf32> to vector<2x8x32xf32>
    %299 = vector.extract_strided_slice %296 {offsets = [0, 0, 0], sizes = [2, 8, 32], strides = [1, 1, 1]} : vector<2x8x128xf32> to vector<2x8x32xf32>
    "tpu.trace_start"() <{level = 10 : i32, message = "bqe,bke->bqk"}> : () -> ()
    %cst_108 = arith.constant dense<0.000000e+00> : vector<2x8x8xf32>
    %300 = tpu.matmul %297, %298, %cst_108 {dimension_numbers = #tpu.dot_dimension_numbers<[2], [2], [1], [1], [0, 0, 0, 1, 1, 1], [0], [0]>} : vector<2x8x32xf32>, vector<2x8x32xf32>, vector<2x8x8xf32> -> vector<2x8x8xf32>
    "tpu.trace_stop"() : () -> ()
    %301 = arith.addf %300, %33 : vector<2x8x8xf32>
    %cst_109 = arith.constant dense<0xFF800000> : vector<2x8xf32>
    %302 = vector.multi_reduction <maximumf>, %301, %cst_109 [2] : vector<2x8x8xf32> to vector<2x8xf32>
    %303 = vector.shape_cast %302 : vector<2x8xf32> to vector<2x8x1xf32>
    %304 = vector.broadcast %303 : vector<2x8x1xf32> to vector<2x8x8xf32>
    %305 = arith.subf %301, %304 : vector<2x8x8xf32>
    %306 = math.exp %305 : vector<2x8x8xf32>
    %307 = vector.broadcast %4 : vector<2x1x8xf32> to vector<2x8x8xf32>
    %308 = arith.mulf %306, %307 : vector<2x8x8xf32>
    %cst_110 = arith.constant dense<0.000000e+00> : vector<2x8xf32>
    %309 = vector.multi_reduction <add>, %308, %cst_110 [2] : vector<2x8x8xf32> to vector<2x8xf32>
    %310 = vector.shape_cast %309 : vector<2x8xf32> to vector<2x8x1xf32>
    %311 = tpu.reciprocal %310 {approx = true} : vector<2x8x1xf32> -> vector<2x8x1xf32>
    %312 = vector.broadcast %311 : vector<2x8x1xf32> to vector<2x8x8xf32>
    %313 = arith.mulf %308, %312 : vector<2x8x8xf32>
    "tpu.trace_start"() <{level = 10 : i32, message = "bqk,bke->bqe"}> : () -> ()
    %cst_111 = arith.constant dense<0.000000e+00> : vector<2x8x32xf32>
    %314 = tpu.matmul %313, %299, %cst_111 {dimension_numbers = #tpu.dot_dimension_numbers<[2], [1], [1], [2], [0, 0, 0, 1, 1, 2], [0], [0]>} : vector<2x8x8xf32>, vector<2x8x32xf32>, vector<2x8x32xf32> -> vector<2x8x32xf32>
    "tpu.trace_stop"() : () -> ()
    %315 = vector.extract_strided_slice %294 {offsets = [0, 0, 32], sizes = [2, 8, 32], strides = [1, 1, 1]} : vector<2x8x128xf32> to vector<2x8x32xf32>
    %316 = vector.extract_strided_slice %295 {offsets = [0, 0, 32], sizes = [2, 8, 32], strides = [1, 1, 1]} : vector<2x8x128xf32> to vector<2x8x32xf32>
    %317 = vector.extract_strided_slice %296 {offsets = [0, 0, 32], sizes = [2, 8, 32], strides = [1, 1, 1]} : vector<2x8x128xf32> to vector<2x8x32xf32>
    "tpu.trace_start"() <{level = 10 : i32, message = "bqe,bke->bqk"}> : () -> ()
    %cst_112 = arith.constant dense<0.000000e+00> : vector<2x8x8xf32>
    %318 = tpu.matmul %315, %316, %cst_112 {dimension_numbers = #tpu.dot_dimension_numbers<[2], [2], [1], [1], [0, 0, 0, 1, 1, 1], [0], [0]>} : vector<2x8x32xf32>, vector<2x8x32xf32>, vector<2x8x8xf32> -> vector<2x8x8xf32>
    "tpu.trace_stop"() : () -> ()
    %319 = arith.addf %318, %33 : vector<2x8x8xf32>
    %cst_113 = arith.constant dense<0xFF800000> : vector<2x8xf32>
    %320 = vector.multi_reduction <maximumf>, %319, %cst_113 [2] : vector<2x8x8xf32> to vector<2x8xf32>
    %321 = vector.shape_cast %320 : vector<2x8xf32> to vector<2x8x1xf32>
    %322 = vector.broadcast %321 : vector<2x8x1xf32> to vector<2x8x8xf32>
    %323 = arith.subf %319, %322 : vector<2x8x8xf32>
    %324 = math.exp %323 : vector<2x8x8xf32>
    %325 = vector.broadcast %4 : vector<2x1x8xf32> to vector<2x8x8xf32>
    %326 = arith.mulf %324, %325 : vector<2x8x8xf32>
    %cst_114 = arith.constant dense<0.000000e+00> : vector<2x8xf32>
    %327 = vector.multi_reduction <add>, %326, %cst_114 [2] : vector<2x8x8xf32> to vector<2x8xf32>
    %328 = vector.shape_cast %327 : vector<2x8xf32> to vector<2x8x1xf32>
    %329 = tpu.reciprocal %328 {approx = true} : vector<2x8x1xf32> -> vector<2x8x1xf32>
    %330 = vector.broadcast %329 : vector<2x8x1xf32> to vector<2x8x8xf32>
    %331 = arith.mulf %326, %330 : vector<2x8x8xf32>
    "tpu.trace_start"() <{level = 10 : i32, message = "bqk,bke->bqe"}> : () -> ()
    %cst_115 = arith.constant dense<0.000000e+00> : vector<2x8x32xf32>
    %332 = tpu.matmul %331, %317, %cst_115 {dimension_numbers = #tpu.dot_dimension_numbers<[2], [1], [1], [2], [0, 0, 0, 1, 1, 2], [0], [0]>} : vector<2x8x8xf32>, vector<2x8x32xf32>, vector<2x8x32xf32> -> vector<2x8x32xf32>
    "tpu.trace_stop"() : () -> ()
    %333 = vector.extract_strided_slice %294 {offsets = [0, 0, 64], sizes = [2, 8, 32], strides = [1, 1, 1]} : vector<2x8x128xf32> to vector<2x8x32xf32>
    %334 = vector.extract_strided_slice %295 {offsets = [0, 0, 64], sizes = [2, 8, 32], strides = [1, 1, 1]} : vector<2x8x128xf32> to vector<2x8x32xf32>
    %335 = vector.extract_strided_slice %296 {offsets = [0, 0, 64], sizes = [2, 8, 32], strides = [1, 1, 1]} : vector<2x8x128xf32> to vector<2x8x32xf32>
    "tpu.trace_start"() <{level = 10 : i32, message = "bqe,bke->bqk"}> : () -> ()
    %cst_116 = arith.constant dense<0.000000e+00> : vector<2x8x8xf32>
    %336 = tpu.matmul %333, %334, %cst_116 {dimension_numbers = #tpu.dot_dimension_numbers<[2], [2], [1], [1], [0, 0, 0, 1, 1, 1], [0], [0]>} : vector<2x8x32xf32>, vector<2x8x32xf32>, vector<2x8x8xf32> -> vector<2x8x8xf32>
    "tpu.trace_stop"() : () -> ()
    %337 = arith.addf %336, %33 : vector<2x8x8xf32>
    %cst_117 = arith.constant dense<0xFF800000> : vector<2x8xf32>
    %338 = vector.multi_reduction <maximumf>, %337, %cst_117 [2] : vector<2x8x8xf32> to vector<2x8xf32>
    %339 = vector.shape_cast %338 : vector<2x8xf32> to vector<2x8x1xf32>
    %340 = vector.broadcast %339 : vector<2x8x1xf32> to vector<2x8x8xf32>
    %341 = arith.subf %337, %340 : vector<2x8x8xf32>
    %342 = math.exp %341 : vector<2x8x8xf32>
    %343 = vector.broadcast %4 : vector<2x1x8xf32> to vector<2x8x8xf32>
    %344 = arith.mulf %342, %343 : vector<2x8x8xf32>
    %cst_118 = arith.constant dense<0.000000e+00> : vector<2x8xf32>
    %345 = vector.multi_reduction <add>, %344, %cst_118 [2] : vector<2x8x8xf32> to vector<2x8xf32>
    %346 = vector.shape_cast %345 : vector<2x8xf32> to vector<2x8x1xf32>
    %347 = tpu.reciprocal %346 {approx = true} : vector<2x8x1xf32> -> vector<2x8x1xf32>
    %348 = vector.broadcast %347 : vector<2x8x1xf32> to vector<2x8x8xf32>
    %349 = arith.mulf %344, %348 : vector<2x8x8xf32>
    "tpu.trace_start"() <{level = 10 : i32, message = "bqk,bke->bqe"}> : () -> ()
    %cst_119 = arith.constant dense<0.000000e+00> : vector<2x8x32xf32>
    %350 = tpu.matmul %349, %335, %cst_119 {dimension_numbers = #tpu.dot_dimension_numbers<[2], [1], [1], [2], [0, 0, 0, 1, 1, 2], [0], [0]>} : vector<2x8x8xf32>, vector<2x8x32xf32>, vector<2x8x32xf32> -> vector<2x8x32xf32>
    "tpu.trace_stop"() : () -> ()
    %351 = vector.extract_strided_slice %294 {offsets = [0, 0, 96], sizes = [2, 8, 32], strides = [1, 1, 1]} : vector<2x8x128xf32> to vector<2x8x32xf32>
    %352 = vector.extract_strided_slice %295 {offsets = [0, 0, 96], sizes = [2, 8, 32], strides = [1, 1, 1]} : vector<2x8x128xf32> to vector<2x8x32xf32>
    %353 = vector.extract_strided_slice %296 {offsets = [0, 0, 96], sizes = [2, 8, 32], strides = [1, 1, 1]} : vector<2x8x128xf32> to vector<2x8x32xf32>
    "tpu.trace_start"() <{level = 10 : i32, message = "bqe,bke->bqk"}> : () -> ()
    %cst_120 = arith.constant dense<0.000000e+00> : vector<2x8x8xf32>
    %354 = tpu.matmul %351, %352, %cst_120 {dimension_numbers = #tpu.dot_dimension_numbers<[2], [2], [1], [1], [0, 0, 0, 1, 1, 1], [0], [0]>} : vector<2x8x32xf32>, vector<2x8x32xf32>, vector<2x8x8xf32> -> vector<2x8x8xf32>
    "tpu.trace_stop"() : () -> ()
    %355 = arith.addf %354, %33 : vector<2x8x8xf32>
    %cst_121 = arith.constant dense<0xFF800000> : vector<2x8xf32>
    %356 = vector.multi_reduction <maximumf>, %355, %cst_121 [2] : vector<2x8x8xf32> to vector<2x8xf32>
    %357 = vector.shape_cast %356 : vector<2x8xf32> to vector<2x8x1xf32>
    %358 = vector.broadcast %357 : vector<2x8x1xf32> to vector<2x8x8xf32>
    %359 = arith.subf %355, %358 : vector<2x8x8xf32>
    %360 = math.exp %359 : vector<2x8x8xf32>
    %361 = vector.broadcast %4 : vector<2x1x8xf32> to vector<2x8x8xf32>
    %362 = arith.mulf %360, %361 : vector<2x8x8xf32>
    %cst_122 = arith.constant dense<0.000000e+00> : vector<2x8xf32>
    %363 = vector.multi_reduction <add>, %362, %cst_122 [2] : vector<2x8x8xf32> to vector<2x8xf32>
    %364 = vector.shape_cast %363 : vector<2x8xf32> to vector<2x8x1xf32>
    %365 = tpu.reciprocal %364 {approx = true} : vector<2x8x1xf32> -> vector<2x8x1xf32>
    %366 = vector.broadcast %365 : vector<2x8x1xf32> to vector<2x8x8xf32>
    %367 = arith.mulf %362, %366 : vector<2x8x8xf32>
    "tpu.trace_start"() <{level = 10 : i32, message = "bqk,bke->bqe"}> : () -> ()
    %cst_123 = arith.constant dense<0.000000e+00> : vector<2x8x32xf32>
    %368 = tpu.matmul %367, %353, %cst_123 {dimension_numbers = #tpu.dot_dimension_numbers<[2], [1], [1], [2], [0, 0, 0, 1, 1, 2], [0], [0]>} : vector<2x8x8xf32>, vector<2x8x32xf32>, vector<2x8x32xf32> -> vector<2x8x32xf32>
    "tpu.trace_stop"() : () -> ()
    %369 = tpu.concatenate %314, %332, %350, %368 in 2 : vector<2x8x32xf32>, vector<2x8x32xf32>, vector<2x8x32xf32>, vector<2x8x32xf32> -> vector<2x8x128xf32>
    %370 = vector.shape_cast %369 : vector<2x8x128xf32> to vector<16x128xf32>
    %371 = arith.index_cast %c1_i32 : i32 to index
    %c0_124 = arith.constant 0 : index
    %c0_125 = arith.constant 0 : index
    %372 = vector.load %arg16[%371, %c0_124, %c0_125] : memref<2x128x32xf32, #tpu.memory_space<vmem>>, vector<1x128x32xf32>
    %373 = vector.shape_cast %372 : vector<1x128x32xf32> to vector<128x32xf32>
    %cst_126 = arith.constant dense<0.000000e+00> : vector<16x32xf32>
    %374 = tpu.matmul %370, %373, %cst_126 {dimension_numbers = #tpu.dot_dimension_numbers<[1], [0], [0], [1], [0, 0, 1, 1], [], []>} : vector<16x128xf32>, vector<128x32xf32>, vector<16x32xf32> -> vector<16x32xf32>
    %375 = arith.index_cast %c1_i32 : i32 to index
    %c0_127 = arith.constant 0 : index
    %c0_128 = arith.constant 0 : index
    %376 = vector.load %arg17[%375, %c0_127, %c0_128] : memref<2x1x32xf32, #tpu.memory_space<vmem>>, vector<1x1x32xf32>
    %377 = vector.shape_cast %376 : vector<1x1x32xf32> to vector<1x32xf32>
    %378 = vector.broadcast %377 : vector<1x32xf32> to vector<16x32xf32>
    %379 = arith.addf %374, %378 : vector<16x32xf32>
    %380 = arith.addf %238, %379 : vector<16x32xf32>
    %cst_129 = arith.constant dense<0.000000e+00> : vector<16xf32>
    %381 = vector.multi_reduction <add>, %380, %cst_129 [1] : vector<16x32xf32> to vector<16xf32>
    %382 = vector.shape_cast %381 : vector<16xf32> to vector<16x1xf32>
    %cst_130 = arith.constant 3.200000e+01 : f32
    %383 = vector.broadcast %cst_130 : f32 to vector<16x1xf32>
    %384 = arith.divf %382, %383 : vector<16x1xf32>
    %385 = vector.broadcast %384 : vector<16x1xf32> to vector<16x32xf32>
    %386 = arith.subf %380, %385 : vector<16x32xf32>
    %387 = arith.mulf %386, %386 : vector<16x32xf32>
    %cst_131 = arith.constant dense<0.000000e+00> : vector<16xf32>
    %388 = vector.multi_reduction <add>, %387, %cst_131 [1] : vector<16x32xf32> to vector<16xf32>
    %389 = vector.shape_cast %388 : vector<16xf32> to vector<16x1xf32>
    %cst_132 = arith.constant 3.200000e+01 : f32
    %390 = vector.broadcast %cst_132 : f32 to vector<16x1xf32>
    %391 = arith.divf %389, %390 : vector<16x1xf32>
    %392 = vector.broadcast %384 : vector<16x1xf32> to vector<16x32xf32>
    %393 = arith.subf %380, %392 : vector<16x32xf32>
    %cst_133 = arith.constant 9.99999974E-6 : f32
    %394 = vector.broadcast %cst_133 : f32 to vector<16x1xf32>
    %395 = arith.addf %391, %394 : vector<16x1xf32>
    %396 = math.rsqrt %395 : vector<16x1xf32>
    %397 = vector.broadcast %396 : vector<16x1xf32> to vector<16x32xf32>
    %398 = arith.mulf %393, %397 : vector<16x32xf32>
    %399 = vector.broadcast %241 : vector<1x32xf32> to vector<16x32xf32>
    %400 = arith.mulf %398, %399 : vector<16x32xf32>
    %401 = vector.broadcast %244 : vector<1x32xf32> to vector<16x32xf32>
    %402 = arith.addf %400, %401 : vector<16x32xf32>
    %403 = arith.index_cast %c1_i32 : i32 to index
    %c0_134 = arith.constant 0 : index
    %c0_135 = arith.constant 0 : index
    %404 = vector.load %arg18[%403, %c0_134, %c0_135] : memref<2x32x32xf32, #tpu.memory_space<vmem>>, vector<1x32x32xf32>
    %405 = vector.shape_cast %404 : vector<1x32x32xf32> to vector<32x32xf32>
    %cst_136 = arith.constant dense<0.000000e+00> : vector<16x32xf32>
    %406 = tpu.matmul %402, %405, %cst_136 {dimension_numbers = #tpu.dot_dimension_numbers<[1], [0], [0], [1], [0, 0, 1, 1], [], []>} : vector<16x32xf32>, vector<32x32xf32>, vector<16x32xf32> -> vector<16x32xf32>
    %407 = arith.index_cast %c1_i32 : i32 to index
    %c0_137 = arith.constant 0 : index
    %c0_138 = arith.constant 0 : index
    %408 = vector.load %arg19[%407, %c0_137, %c0_138] : memref<2x1x32xf32, #tpu.memory_space<vmem>>, vector<1x1x32xf32>
    %409 = vector.shape_cast %408 : vector<1x1x32xf32> to vector<1x32xf32>
    %410 = vector.broadcast %409 : vector<1x32xf32> to vector<16x32xf32>
    %411 = arith.addf %406, %410 : vector<16x32xf32>
    %cst_139 = arith.constant 2.000000e+01 : f32
    %412 = vector.broadcast %cst_139 : f32 to vector<16x32xf32>
    %413 = arith.cmpf ogt, %411, %412 : vector<16x32xf32>
    %cst_140 = arith.constant 2.000000e+01 : f32
    %414 = vector.broadcast %cst_140 : f32 to vector<16x32xf32>
    %415 = arith.minimumf %411, %414 : vector<16x32xf32>
    %416 = math.exp %415 : vector<16x32xf32>
    %417 = math.log1p %416 : vector<16x32xf32>
    %418 = arith.select %413, %411, %417 : vector<16x32xi1>, vector<16x32xf32>
    %419 = math.tanh %418 : vector<16x32xf32>
    %420 = arith.mulf %411, %419 : vector<16x32xf32>
    %421 = arith.addf %380, %420 : vector<16x32xf32>
    %cst_141 = arith.constant dense<0.000000e+00> : vector<16xf32>
    %422 = vector.multi_reduction <add>, %421, %cst_141 [1] : vector<16x32xf32> to vector<16xf32>
    %423 = vector.shape_cast %422 : vector<16xf32> to vector<16x1xf32>
    %cst_142 = arith.constant 3.200000e+01 : f32
    %424 = vector.broadcast %cst_142 : f32 to vector<16x1xf32>
    %425 = arith.divf %423, %424 : vector<16x1xf32>
    %426 = vector.broadcast %425 : vector<16x1xf32> to vector<16x32xf32>
    %427 = arith.subf %421, %426 : vector<16x32xf32>
    %428 = arith.mulf %427, %427 : vector<16x32xf32>
    %cst_143 = arith.constant dense<0.000000e+00> : vector<16xf32>
    %429 = vector.multi_reduction <add>, %428, %cst_143 [1] : vector<16x32xf32> to vector<16xf32>
    %430 = vector.shape_cast %429 : vector<16xf32> to vector<16x1xf32>
    %cst_144 = arith.constant 3.200000e+01 : f32
    %431 = vector.broadcast %cst_144 : f32 to vector<16x1xf32>
    %432 = arith.divf %430, %431 : vector<16x1xf32>
    %433 = vector.broadcast %425 : vector<16x1xf32> to vector<16x32xf32>
    %434 = arith.subf %421, %433 : vector<16x32xf32>
    %cst_145 = arith.constant 9.99999974E-6 : f32
    %435 = vector.broadcast %cst_145 : f32 to vector<16x1xf32>
    %436 = arith.addf %432, %435 : vector<16x1xf32>
    %437 = math.rsqrt %436 : vector<16x1xf32>
    %438 = vector.broadcast %437 : vector<16x1xf32> to vector<16x32xf32>
    %439 = arith.mulf %434, %438 : vector<16x32xf32>
    %440 = vector.broadcast %241 : vector<1x32xf32> to vector<16x32xf32>
    %441 = arith.mulf %439, %440 : vector<16x32xf32>
    %442 = vector.broadcast %244 : vector<1x32xf32> to vector<16x32xf32>
    %443 = arith.addf %441, %442 : vector<16x32xf32>
    %c2_i32 = arith.constant 2 : i32
    %444 = arith.addf %443, %23 : vector<16x32xf32>
    %445 = vector.shape_cast %444 : vector<16x32xf32> to vector<2x8x32xf32>
    %446 = vector.broadcast %1 : vector<2x8x1xf32> to vector<2x8x32xf32>
    %447 = arith.mulf %446, %445 : vector<2x8x32xf32>
    %cst_146 = arith.constant dense<0.000000e+00> : vector<2x32xf32>
    %448 = vector.multi_reduction <add>, %447, %cst_146 [1] : vector<2x8x32xf32> to vector<2x32xf32>
    %c0_147 = arith.constant 0 : index
    %c0_148 = arith.constant 0 : index
    %449 = vector.load %arg20[%c0_147, %c0_148] : memref<1x32xf32, #tpu.memory_space<vmem>>, vector<1x32xf32>
    %c0_149 = arith.constant 0 : index
    %c0_150 = arith.constant 0 : index
    %450 = vector.load %arg21[%c0_149, %c0_150] : memref<1x32xf32, #tpu.memory_space<vmem>>, vector<1x32xf32>
    %cst_151 = arith.constant dense<0.000000e+00> : vector<2xf32>
    %451 = vector.multi_reduction <add>, %448, %cst_151 [1] : vector<2x32xf32> to vector<2xf32>
    %452 = vector.shape_cast %451 : vector<2xf32> to vector<2x1xf32>
    %cst_152 = arith.constant 3.200000e+01 : f32
    %453 = vector.broadcast %cst_152 : f32 to vector<2x1xf32>
    %454 = arith.divf %452, %453 : vector<2x1xf32>
    %455 = vector.broadcast %454 : vector<2x1xf32> to vector<2x32xf32>
    %456 = arith.subf %448, %455 : vector<2x32xf32>
    %457 = arith.mulf %456, %456 : vector<2x32xf32>
    %cst_153 = arith.constant dense<0.000000e+00> : vector<2xf32>
    %458 = vector.multi_reduction <add>, %457, %cst_153 [1] : vector<2x32xf32> to vector<2xf32>
    %459 = vector.shape_cast %458 : vector<2xf32> to vector<2x1xf32>
    %cst_154 = arith.constant 3.200000e+01 : f32
    %460 = vector.broadcast %cst_154 : f32 to vector<2x1xf32>
    %461 = arith.divf %459, %460 : vector<2x1xf32>
    %462 = vector.broadcast %454 : vector<2x1xf32> to vector<2x32xf32>
    %463 = arith.subf %448, %462 : vector<2x32xf32>
    %cst_155 = arith.constant 9.99999974E-6 : f32
    %464 = vector.broadcast %cst_155 : f32 to vector<2x1xf32>
    %465 = arith.addf %461, %464 : vector<2x1xf32>
    %466 = math.rsqrt %465 : vector<2x1xf32>
    %467 = vector.broadcast %466 : vector<2x1xf32> to vector<2x32xf32>
    %468 = arith.mulf %463, %467 : vector<2x32xf32>
    %469 = vector.broadcast %449 : vector<1x32xf32> to vector<2x32xf32>
    %470 = arith.mulf %468, %469 : vector<2x32xf32>
    %471 = vector.broadcast %450 : vector<1x32xf32> to vector<2x32xf32>
    %472 = arith.addf %470, %471 : vector<2x32xf32>
    %c0_156 = arith.constant 0 : index
    %c0_157 = arith.constant 0 : index
    %473 = vector.load %arg22[%c0_156, %c0_157] : memref<32x32xf32, #tpu.memory_space<vmem>>, vector<32x32xf32>
    %cst_158 = arith.constant dense<0.000000e+00> : vector<2x32xf32>
    %474 = tpu.matmul %472, %473, %cst_158 {dimension_numbers = #tpu.dot_dimension_numbers<[1], [0], [0], [1], [0, 0, 1, 1], [], []>} : vector<2x32xf32>, vector<32x32xf32>, vector<2x32xf32> -> vector<2x32xf32>
    %c0_159 = arith.constant 0 : index
    %c0_160 = arith.constant 0 : index
    %475 = vector.load %arg23[%c0_159, %c0_160] : memref<1x32xf32, #tpu.memory_space<vmem>>, vector<1x32xf32>
    %476 = vector.broadcast %475 : vector<1x32xf32> to vector<2x32xf32>
    %477 = arith.addf %474, %476 : vector<2x32xf32>
    %cst_161 = arith.constant 2.000000e+01 : f32
    %478 = vector.broadcast %cst_161 : f32 to vector<2x32xf32>
    %479 = arith.cmpf ogt, %477, %478 : vector<2x32xf32>
    %cst_162 = arith.constant 2.000000e+01 : f32
    %480 = vector.broadcast %cst_162 : f32 to vector<2x32xf32>
    %481 = arith.minimumf %477, %480 : vector<2x32xf32>
    %482 = math.exp %481 : vector<2x32xf32>
    %483 = math.log1p %482 : vector<2x32xf32>
    %484 = arith.select %479, %477, %483 : vector<2x32xi1>, vector<2x32xf32>
    %485 = math.tanh %484 : vector<2x32xf32>
    %486 = arith.mulf %477, %485 : vector<2x32xf32>
    %c0_163 = arith.constant 0 : index
    %c0_164 = arith.constant 0 : index
    %487 = vector.load %arg24[%c0_163, %c0_164] : memref<32x128xf32, #tpu.memory_space<vmem>>, vector<32x128xf32>
    %cst_165 = arith.constant dense<0.000000e+00> : vector<2x128xf32>
    %488 = tpu.matmul %486, %487, %cst_165 {dimension_numbers = #tpu.dot_dimension_numbers<[1], [0], [0], [1], [0, 0, 1, 1], [], []>} : vector<2x32xf32>, vector<32x128xf32>, vector<2x128xf32> -> vector<2x128xf32>
    %c0_166 = arith.constant 0 : index
    %c0_167 = arith.constant 0 : index
    %489 = vector.load %arg25[%c0_166, %c0_167] : memref<1x128xf32, #tpu.memory_space<vmem>>, vector<1x128xf32>
    %490 = vector.broadcast %489 : vector<1x128xf32> to vector<2x128xf32>
    %491 = arith.addf %488, %490 : vector<2x128xf32>
    %c0_168 = arith.constant 0 : index
    %c0_169 = arith.constant 0 : index
    %c0_170 = arith.constant 0 : index
    %492 = vector.load %arg26[%c0_168, %c0_169, %c0_170] : memref<1x2x128xf32, #tpu.memory_space<vmem>>, vector<1x2x128xf32>
    %493 = vector.shape_cast %492 : vector<1x2x128xf32> to vector<2x128xf32>
    %494 = vector.shape_cast %491 : vector<2x128xf32> to vector<1x2x128xf32>
    tpu.vector_store %arg26[%c0_168, %c0_169, %c0_170], %494 {strides = array<i32>} : memref<1x2x128xf32, #tpu.memory_space<vmem>>, vector<1x2x128xf32>,
    return
  }
  func.func @transform_0(%arg0: i32) -> (i32, i32, i32) {
    %c0_i32 = arith.constant 0 : i32
    %c0_i32_0 = arith.constant 0 : i32
    %c0_i32_1 = arith.constant 0 : i32
    return %arg0, %c0_i32, %c0_i32_0 : i32, i32, i32
  }
  func.func @transform_1(%arg0: i32) -> (i32, i32, i32) {
    %c0_i32 = arith.constant 0 : i32
    %c0_i32_0 = arith.constant 0 : i32
    %c0_i32_1 = arith.constant 0 : i32
    return %arg0, %c0_i32, %c0_i32_0 : i32, i32, i32
  }
  func.func @transform_2(%arg0: i32) -> (i32, i32) {
    %c0_i32 = arith.constant 0 : i32
    %c0_i32_0 = arith.constant 0 : i32
    %c0_i32_1 = arith.constant 0 : i32
    return %c0_i32, %c0_i32_0 : i32, i32
  }
  func.func @transform_3(%arg0: i32) -> (i32, i32) {
    %c0_i32 = arith.constant 0 : i32
    %c0_i32_0 = arith.constant 0 : i32
    %c0_i32_1 = arith.constant 0 : i32
    return %c0_i32, %c0_i32_0 : i32, i32
  }
  func.func @transform_4(%arg0: i32) -> (i32, i32) {
    %c0_i32 = arith.constant 0 : i32
    %c0_i32_0 = arith.constant 0 : i32
    %c0_i32_1 = arith.constant 0 : i32
    return %c0_i32, %c0_i32_0 : i32, i32
  }
  func.func @transform_5(%arg0: i32) -> (i32, i32) {
    %c0_i32 = arith.constant 0 : i32
    %c0_i32_0 = arith.constant 0 : i32
    %c0_i32_1 = arith.constant 0 : i32
    return %c0_i32, %c0_i32_0 : i32, i32
  }
  func.func @transform_6(%arg0: i32) -> (i32, i32) {
    %c0_i32 = arith.constant 0 : i32
    %c0_i32_0 = arith.constant 0 : i32
    %c0_i32_1 = arith.constant 0 : i32
    return %c0_i32, %c0_i32_0 : i32, i32
  }
  func.func @transform_7(%arg0: i32) -> (i32, i32, i32) {
    %c0_i32 = arith.constant 0 : i32
    %c0_i32_0 = arith.constant 0 : i32
    %c0_i32_1 = arith.constant 0 : i32
    %c0_i32_2 = arith.constant 0 : i32
    return %c0_i32, %c0_i32_0, %c0_i32_1 : i32, i32, i32
  }
  func.func @transform_8(%arg0: i32) -> (i32, i32, i32) {
    %c0_i32 = arith.constant 0 : i32
    %c0_i32_0 = arith.constant 0 : i32
    %c0_i32_1 = arith.constant 0 : i32
    %c0_i32_2 = arith.constant 0 : i32
    return %c0_i32, %c0_i32_0, %c0_i32_1 : i32, i32, i32
  }
  func.func @transform_9(%arg0: i32) -> (i32, i32, i32) {
    %c0_i32 = arith.constant 0 : i32
    %c0_i32_0 = arith.constant 0 : i32
    %c0_i32_1 = arith.constant 0 : i32
    %c0_i32_2 = arith.constant 0 : i32
    return %c0_i32, %c0_i32_0, %c0_i32_1 : i32, i32, i32
  }
  func.func @transform_10(%arg0: i32) -> (i32, i32, i32) {
    %c0_i32 = arith.constant 0 : i32
    %c0_i32_0 = arith.constant 0 : i32
    %c0_i32_1 = arith.constant 0 : i32
    %c0_i32_2 = arith.constant 0 : i32
    return %c0_i32, %c0_i32_0, %c0_i32_1 : i32, i32, i32
  }
  func.func @transform_11(%arg0: i32) -> (i32, i32, i32) {
    %c0_i32 = arith.constant 0 : i32
    %c0_i32_0 = arith.constant 0 : i32
    %c0_i32_1 = arith.constant 0 : i32
    %c0_i32_2 = arith.constant 0 : i32
    return %c0_i32, %c0_i32_0, %c0_i32_1 : i32, i32, i32
  }
  func.func @transform_12(%arg0: i32) -> (i32, i32, i32) {
    %c0_i32 = arith.constant 0 : i32
    %c0_i32_0 = arith.constant 0 : i32
    %c0_i32_1 = arith.constant 0 : i32
    %c0_i32_2 = arith.constant 0 : i32
    return %c0_i32, %c0_i32_0, %c0_i32_1 : i32, i32, i32
  }
  func.func @transform_13(%arg0: i32) -> (i32, i32, i32) {
    %c0_i32 = arith.constant 0 : i32
    %c0_i32_0 = arith.constant 0 : i32
    %c0_i32_1 = arith.constant 0 : i32
    %c0_i32_2 = arith.constant 0 : i32
    return %c0_i32, %c0_i32_0, %c0_i32_1 : i32, i32, i32
  }
  func.func @transform_14(%arg0: i32) -> (i32, i32, i32) {
    %c0_i32 = arith.constant 0 : i32
    %c0_i32_0 = arith.constant 0 : i32
    %c0_i32_1 = arith.constant 0 : i32
    %c0_i32_2 = arith.constant 0 : i32
    return %c0_i32, %c0_i32_0, %c0_i32_1 : i32, i32, i32
  }
  func.func @transform_15(%arg0: i32) -> (i32, i32, i32) {
    %c0_i32 = arith.constant 0 : i32
    %c0_i32_0 = arith.constant 0 : i32
    %c0_i32_1 = arith.constant 0 : i32
    %c0_i32_2 = arith.constant 0 : i32
    return %c0_i32, %c0_i32_0, %c0_i32_1 : i32, i32, i32
  }
  func.func @transform_16(%arg0: i32) -> (i32, i32, i32) {
    %c0_i32 = arith.constant 0 : i32
    %c0_i32_0 = arith.constant 0 : i32
    %c0_i32_1 = arith.constant 0 : i32
    %c0_i32_2 = arith.constant 0 : i32
    return %c0_i32, %c0_i32_0, %c0_i32_1 : i32, i32, i32
  }
  func.func @transform_17(%arg0: i32) -> (i32, i32, i32) {
    %c0_i32 = arith.constant 0 : i32
    %c0_i32_0 = arith.constant 0 : i32
    %c0_i32_1 = arith.constant 0 : i32
    %c0_i32_2 = arith.constant 0 : i32
    return %c0_i32, %c0_i32_0, %c0_i32_1 : i32, i32, i32
  }
  func.func @transform_18(%arg0: i32) -> (i32, i32, i32) {
    %c0_i32 = arith.constant 0 : i32
    %c0_i32_0 = arith.constant 0 : i32
    %c0_i32_1 = arith.constant 0 : i32
    %c0_i32_2 = arith.constant 0 : i32
    return %c0_i32, %c0_i32_0, %c0_i32_1 : i32, i32, i32
  }
  func.func @transform_19(%arg0: i32) -> (i32, i32) {
    %c0_i32 = arith.constant 0 : i32
    %c0_i32_0 = arith.constant 0 : i32
    %c0_i32_1 = arith.constant 0 : i32
    return %c0_i32, %c0_i32_0 : i32, i32
  }
  func.func @transform_20(%arg0: i32) -> (i32, i32) {
    %c0_i32 = arith.constant 0 : i32
    %c0_i32_0 = arith.constant 0 : i32
    %c0_i32_1 = arith.constant 0 : i32
    return %c0_i32, %c0_i32_0 : i32, i32
  }
  func.func @transform_21(%arg0: i32) -> (i32, i32) {
    %c0_i32 = arith.constant 0 : i32
    %c0_i32_0 = arith.constant 0 : i32
    %c0_i32_1 = arith.constant 0 : i32
    return %c0_i32, %c0_i32_0 : i32, i32
  }
  func.func @transform_22(%arg0: i32) -> (i32, i32) {
    %c0_i32 = arith.constant 0 : i32
    %c0_i32_0 = arith.constant 0 : i32
    %c0_i32_1 = arith.constant 0 : i32
    return %c0_i32, %c0_i32_0 : i32, i32
  }
  func.func @transform_23(%arg0: i32) -> (i32, i32) {
    %c0_i32 = arith.constant 0 : i32
    %c0_i32_0 = arith.constant 0 : i32
    %c0_i32_1 = arith.constant 0 : i32
    return %c0_i32, %c0_i32_0 : i32, i32
  }
  func.func @transform_24(%arg0: i32) -> (i32, i32) {
    %c0_i32 = arith.constant 0 : i32
    %c0_i32_0 = arith.constant 0 : i32
    %c0_i32_1 = arith.constant 0 : i32
    return %c0_i32, %c0_i32_0 : i32, i32
  }
  func.func @transform_25(%arg0: i32) -> (i32, i32, i32) {
    %c0_i32 = arith.constant 0 : i32
    %c0_i32_0 = arith.constant 0 : i32
    %c0_i32_1 = arith.constant 0 : i32
    return %arg0, %c0_i32, %c0_i32_0 : i32, i32, i32
  }
}

</mosaic_0001>

<llo_original>
// kernel: _lambda_.1
$region0: #{_lambda_.1}
  #allocation0 [shape = 'u32[]', space=smem, size = 0x4, offset = 0x4, fixed_abs, tag = 'smem constant byte address 0x4 - core index']
  #allocation1 [shape = 'u32[144,128]{1,0:T(1,128)}', space=vmem, size = 0x12000, scoped, tag = 'internal scratch']
  %s0 = inlined_call_operand.vmem [shape: f32[2,8,22], index: 0, kind: input, shape index: {}]
  %s1 = inlined_call_operand.vmem [shape: f32[2,1,8], index: 1, kind: input, shape index: {}]
  %s2 = inlined_call_operand.hbm [shape: f32[5,32], index: 2, kind: input, shape index: {}]
  %s3 = inlined_call_operand.vmem [shape: f32[5,32], index: 3, kind: input, shape index: {}]
  %s4 = inlined_call_operand.vmem [shape: f32[1,32], index: 4, kind: input, shape index: {}]
  %s5 = inlined_call_operand.hbm [shape: f32[16,32], index: 5, kind: input, shape index: {}]
  %s6 = inlined_call_operand.vmem [shape: f32[1,32], index: 6, kind: input, shape index: {}]
  %s7 = inlined_call_operand.vmem [shape: f32[2,1,32], index: 7, kind: input, shape index: {}]
  %s8 = inlined_call_operand.vmem [shape: f32[2,1,32], index: 8, kind: input, shape index: {}]
  %s9 = inlined_call_operand.hbm [shape: f32[2,32,128], index: 9, kind: input, shape index: {}]
  %s10 = inlined_call_operand.vmem [shape: f32[2,1,128], index: 10, kind: input, shape index: {}, may-alias: {10,12,14}]
  %s11 = inlined_call_operand.hbm [shape: f32[2,32,128], index: 11, kind: input, shape index: {}]
  %s12 = inlined_call_operand.vmem [shape: f32[2,1,128], index: 12, kind: input, shape index: {}, may-alias: {10,12,14}]
  %s13 = inlined_call_operand.hbm [shape: f32[2,32,128], index: 13, kind: input, shape index: {}]
  %s14 = inlined_call_operand.vmem [shape: f32[2,1,128], index: 14, kind: input, shape index: {}, may-alias: {10,12,14}]
  %s15 = inlined_call_operand.vmem [shape: f32[2,128,32], index: 15, kind: input, shape index: {}]
  %s16 = inlined_call_operand.hbm [shape: f32[2,1,32], index: 16, kind: input, shape index: {}]
  %s17 = inlined_call_operand.vmem [shape: f32[2,32,32], index: 17, kind: input, shape index: {}]
  %s18 = inlined_call_operand.hbm [shape: f32[2,1,32], index: 18, kind: input, shape index: {}]
  %s19 = inlined_call_operand.vmem [shape: f32[1,32], index: 19, kind: input, shape index: {}]
  %s20 = inlined_call_operand.vmem [shape: f32[1,32], index: 20, kind: input, shape index: {}]
  %s21 = inlined_call_operand.hbm [shape: f32[32,32], index: 21, kind: input, shape index: {}]
  %s22 = inlined_call_operand.hbm [shape: f32[1,32], index: 22, kind: input, shape index: {}]
  %s23 = inlined_call_operand.vmem [shape: f32[32,128], index: 23, kind: input, shape index: {}]
  %s24 = inlined_call_operand.vmem [shape: f32[1,128], index: 24, kind: input, shape index: {}]
  %s25 = inlined_call_operand.vmem [shape: f32[1,2,128], index: 25, kind: output, shape index: {}]
  %s26 = sld [smem:[#allocation0]]
  $region146: #{_lambda_.1} parent=0
    _
  %s28 = ssub.s32 1, %s26
  %s29 = scalar_select 0, %s28, %s26
  $region1: #{_lambda_.1} parent=0
    #allocation2 [shape = 'u8[4096]{0}', space=vmem, size = 0x1000, scoped, tag = 'input window, operand 2, single buffered']
    #allocation3 [shape = 's32[1]{0}', space=sflag, size = 0x4, scoped, tag = 'scoped memory for _lambda_.1']
    #allocation4 [shape = 'u8[8192]{0}', space=vmem, size = 0x2000, scoped, tag = 'input window, operand 5, single buffered']
    #allocation5 [shape = 's32[1]{0}', space=sflag, size = 0x4, scoped, tag = 'scoped memory for _lambda_.1']
    #allocation6 [shape = 'u8[32768]{0}', space=vmem, size = 0x8000, scoped, tag = 'input window, operand 9, single buffered']
    #allocation7 [shape = 'u8[32768]{0}', space=vmem, size = 0x8000, scoped, tag = 'input window, operand 11, single buffered']
    #allocation8 [shape = 's32[1]{0}', space=sflag, size = 0x4, scoped, tag = 'scoped memory for _lambda_.1']
    #allocation9 [shape = 'u8[32768]{0}', space=vmem, size = 0x8000, scoped, tag = 'input window, operand 13, single buffered']
    #allocation10 [shape = 'u8[1024]{0}', space=vmem, size = 0x400, scoped, tag = 'input window, operand 16, single buffered']
    #allocation11 [shape = 's32[1]{0}', space=sflag, size = 0x4, scoped, tag = 'scoped memory for _lambda_.1']
    #allocation12 [shape = 'u8[1024]{0}', space=vmem, size = 0x400, scoped, tag = 'input window, operand 18, single buffered']
    #allocation13 [shape = 'u8[16384]{0}', space=vmem, size = 0x4000, scoped, tag = 'input window, operand 21, single buffered']
    #allocation14 [shape = 's32[1]{0}', space=sflag, size = 0x4, scoped, tag = 'scoped memory for _lambda_.1']
    #allocation15 [shape = 'u8[512]{0}', space=vmem, size = 0x400, scoped, tag = 'input window, operand 22, single buffered']
    %30 = vsyncpa [#allocation3], 0
    %31 = vsyncpa [#allocation5], 0
    %32 = vsyncpa [#allocation8], 0
    %33 = vsyncpa [#allocation11], 0
    %34 = vsyncpa [#allocation14], 0
    // Predicated region
    $region2: #{_lambda_.1} parent=1 // pred_check
      _
    $region3: #{_lambda_.1} parent=1 // pred_check_branch
      %36 = sbr.rel (0) target = $region5
    $region4: #{_lambda_.1} parent=1 // pred_region
      _
    $region5: #{_lambda_.1} parent=1 // pred_fallthru
      _
    // Predicated region
    $region6: #{_lambda_.1} parent=1 // pred_check
      _
    $region7: #{_lambda_.1} parent=1 // pred_check_branch
      %38 = sbr.rel (0) target = $region9
    $region8: #{_lambda_.1} parent=1 // pred_region
      _
    $region9: #{_lambda_.1} parent=1 // pred_fallthru
      _
    // Predicated region
    $region10: #{_lambda_.1} parent=1 // pred_check
      _
    $region11: #{_lambda_.1} parent=1 // pred_check_branch
      %40 = sbr.rel (0) target = $region13
    $region12: #{_lambda_.1} parent=1 // pred_region
      %s42 = ssub.s32 128, 128
      %43 = vsyncadd [#allocation3], %s42
      %s45 = sshll.u32 [#allocation2], 4
      %s46 = int_to_ptr.vmem [resolvable:$true] %s45
      %48 = dma.hbm_to_vmem [thread:$0]  %s2, 128, %s46, [#allocation3]
    $region13: #{_lambda_.1} parent=1 // pred_fallthru
      _
    // Predicated region
    $region14: #{_lambda_.1} parent=1 // pred_check
      _
    $region15: #{_lambda_.1} parent=1 // pred_check_branch
      %50 = sbr.rel (0) target = $region17
    $region16: #{_lambda_.1} parent=1 // pred_region
      _
    $region17: #{_lambda_.1} parent=1 // pred_fallthru
      _
    // Predicated region
    $region18: #{_lambda_.1} parent=1 // pred_check
      _
    $region19: #{_lambda_.1} parent=1 // pred_check_branch
      %52 = sbr.rel (0) target = $region21
    $region20: #{_lambda_.1} parent=1 // pred_region
      _
    $region21: #{_lambda_.1} parent=1 // pred_fallthru
      _
    // Predicated region
    $region22: #{_lambda_.1} parent=1 // pred_check
      _
    $region23: #{_lambda_.1} parent=1 // pred_check_branch
      %54 = sbr.rel (0) target = $region25
    $region24: #{_lambda_.1} parent=1 // pred_region
      %s56 = ssub.s32 256, 256
      %57 = vsyncadd [#allocation5], %s56
      %s58 = sshll.u32 [#allocation4], 4
      %s59 = int_to_ptr.vmem [resolvable:$true] %s58
      %64 = dma.hbm_to_vmem [thread:$0]  %s5, 256, %s59, [#allocation5], 128, 128, 8
    $region25: #{_lambda_.1} parent=1 // pred_fallthru
      _
    // Predicated region
    $region26: #{_lambda_.1} parent=1 // pred_check
      _
    $region27: #{_lambda_.1} parent=1 // pred_check_branch
      %66 = sbr.rel (0) target = $region29
    $region28: #{_lambda_.1} parent=1 // pred_region
      _
    $region29: #{_lambda_.1} parent=1 // pred_fallthru
      _
    // Predicated region
    $region30: #{_lambda_.1} parent=1 // pred_check
      _
    $region31: #{_lambda_.1} parent=1 // pred_check_branch
      %68 = sbr.rel (0) target = $region33
    $region32: #{_lambda_.1} parent=1 // pred_region
      _
    $region33: #{_lambda_.1} parent=1 // pred_fallthru
      _
    // Predicated region
    $region34: #{_lambda_.1} parent=1 // pred_check
      _
    $region35: #{_lambda_.1} parent=1 // pred_check_branch
      %70 = sbr.rel (0) target = $region37
    $region36: #{_lambda_.1} parent=1 // pred_region
      _
    $region37: #{_lambda_.1} parent=1 // pred_fallthru
      _
    // Predicated region
    $region38: #{_lambda_.1} parent=1 // pred_check
      _
    $region39: #{_lambda_.1} parent=1 // pred_check_branch
      %72 = sbr.rel (0) target = $region41
    $region40: #{_lambda_.1} parent=1 // pred_region
      %s74 = ssub.s32 1024, 1024
      %75 = vsyncadd [#allocation5], %s74
      %s76 = sshll.u32 [#allocation6], 4
      %s77 = int_to_ptr.vmem [resolvable:$true] %s76
      %82 = dma.hbm_to_vmem [thread:$0]  %s9, 1024, %s77, [#allocation5], 128, 128, 8
    $region41: #{_lambda_.1} parent=1 // pred_fallthru
      _
    // Predicated region
    $region42: #{_lambda_.1} parent=1 // pred_check
      _
    $region43: #{_lambda_.1} parent=1 // pred_check_branch
      %84 = sbr.rel (0) target = $region45
    $region44: #{_lambda_.1} parent=1 // pred_region
      _
    $region45: #{_lambda_.1} parent=1 // pred_fallthru
      _
    // Predicated region
    $region46: #{_lambda_.1} parent=1 // pred_check
      _
    $region47: #{_lambda_.1} parent=1 // pred_check_branch
      %86 = sbr.rel (0) target = $region49
    $region48: #{_lambda_.1} parent=1 // pred_region
      %s88 = ssub.s32 1024, 1024
      %89 = vsyncadd [#allocation8], %s88
      %s90 = sshll.u32 [#allocation7], 4
      %s91 = int_to_ptr.vmem [resolvable:$true] %s90
      %96 = dma.hbm_to_vmem [thread:$0]  %s11, 1024, %s91, [#allocation8], 128, 128, 8
    $region49: #{_lambda_.1} parent=1 // pred_fallthru
      _
    // Predicated region
    $region50: #{_lambda_.1} parent=1 // pred_check
      _
    $region51: #{_lambda_.1} parent=1 // pred_check_branch
      %98 = sbr.rel (0) target = $region53
    $region52: #{_lambda_.1} parent=1 // pred_region
      _
    $region53: #{_lambda_.1} parent=1 // pred_fallthru
      _
    // Predicated region
    $region54: #{_lambda_.1} parent=1 // pred_check
      _
    $region55: #{_lambda_.1} parent=1 // pred_check_branch
      %100 = sbr.rel (0) target = $region57
    $region56: #{_lambda_.1} parent=1 // pred_region
      %s102 = ssub.s32 1024, 1024
      %103 = vsyncadd [#allocation8], %s102
      %s104 = sshll.u32 [#allocation9], 4
      %s105 = int_to_ptr.vmem [resolvable:$true] %s104
      %110 = dma.hbm_to_vmem [thread:$0]  %s13, 1024, %s105, [#allocation8], 128, 128, 8
    $region57: #{_lambda_.1} parent=1 // pred_fallthru
      _
    // Predicated region
    $region58: #{_lambda_.1} parent=1 // pred_check
      _
    $region59: #{_lambda_.1} parent=1 // pred_check_branch
      %112 = sbr.rel (0) target = $region61
    $region60: #{_lambda_.1} parent=1 // pred_region
      _
    $region61: #{_lambda_.1} parent=1 // pred_fallthru
      _
    // Predicated region
    $region62: #{_lambda_.1} parent=1 // pred_check
      _
    $region63: #{_lambda_.1} parent=1 // pred_check_branch
      %114 = sbr.rel (0) target = $region65
    $region64: #{_lambda_.1} parent=1 // pred_region
      _
    $region65: #{_lambda_.1} parent=1 // pred_fallthru
      _
    // Predicated region
    $region66: #{_lambda_.1} parent=1 // pred_check
      _
    $region67: #{_lambda_.1} parent=1 // pred_check_branch
      %116 = sbr.rel (0) target = $region69
    $region68: #{_lambda_.1} parent=1 // pred_region
      %s118 = ssub.s32 32, 32
      %119 = vsyncadd [#allocation11], %s118
      %s120 = sshll.u32 [#allocation10], 4
      %s121 = int_to_ptr.vmem [resolvable:$true] %s120
      %126 = dma.hbm_to_vmem [thread:$0]  %s16, 32, %s121, [#allocation11], 16, 16, 1
    $region69: #{_lambda_.1} parent=1 // pred_fallthru
      _
    // Predicated region
    $region70: #{_lambda_.1} parent=1 // pred_check
      _
    $region71: #{_lambda_.1} parent=1 // pred_check_branch
      %128 = sbr.rel (0) target = $region73
    $region72: #{_lambda_.1} parent=1 // pred_region
      _
    $region73: #{_lambda_.1} parent=1 // pred_fallthru
      _
    // Predicated region
    $region74: #{_lambda_.1} parent=1 // pred_check
      _
    $region75: #{_lambda_.1} parent=1 // pred_check_branch
      %130 = sbr.rel (0) target = $region77
    $region76: #{_lambda_.1} parent=1 // pred_region
      %s132 = ssub.s32 32, 32
      %133 = vsyncadd [#allocation11], %s132
      %s134 = sshll.u32 [#allocation12], 4
      %s135 = int_to_ptr.vmem [resolvable:$true] %s134
      %140 = dma.hbm_to_vmem [thread:$0]  %s18, 32, %s135, [#allocation11], 16, 16, 1
    $region77: #{_lambda_.1} parent=1 // pred_fallthru
      _
    // Predicated region
    $region78: #{_lambda_.1} parent=1 // pred_check
      _
    $region79: #{_lambda_.1} parent=1 // pred_check_branch
      %142 = sbr.rel (0) target = $region81
    $region80: #{_lambda_.1} parent=1 // pred_region
      _
    $region81: #{_lambda_.1} parent=1 // pred_fallthru
      _
    // Predicated region
    $region82: #{_lambda_.1} parent=1 // pred_check
      _
    $region83: #{_lambda_.1} parent=1 // pred_check_branch
      %144 = sbr.rel (0) target = $region85
    $region84: #{_lambda_.1} parent=1 // pred_region
      _
    $region85: #{_lambda_.1} parent=1 // pred_fallthru
      _
    // Predicated region
    $region86: #{_lambda_.1} parent=1 // pred_check
      _
    $region87: #{_lambda_.1} parent=1 // pred_check_branch
      %146 = sbr.rel (0) target = $region89
    $region88: #{_lambda_.1} parent=1 // pred_region
      %s148 = ssub.s32 512, 512
      %149 = vsyncadd [#allocation14], %s148
      %s150 = sshll.u32 [#allocation13], 4
      %s151 = int_to_ptr.vmem [resolvable:$true] %s150
      %156 = dma.hbm_to_vmem [thread:$0]  %s21, 512, %s151, [#allocation14], 128, 128, 8
    $region89: #{_lambda_.1} parent=1 // pred_fallthru
      _
    // Predicated region
    $region90: #{_lambda_.1} parent=1 // pred_check
      _
    $region91: #{_lambda_.1} parent=1 // pred_check_branch
      %158 = sbr.rel (0) target = $region93
    $region92: #{_lambda_.1} parent=1 // pred_region
      %s160 = ssub.s32 16, 16
      %161 = vsyncadd [#allocation14], %s160
      %s163 = sshll.u32 [#allocation15], 4
      %s164 = int_to_ptr.vmem [resolvable:$true] %s163
      %166 = dma.hbm_to_vmem [thread:$0]  %s22, 16, %s164, [#allocation14]
    $region93: #{_lambda_.1} parent=1 // pred_fallthru
      _
    // Predicated region
    $region94: #{_lambda_.1} parent=1 // pred_check
      _
    $region95: #{_lambda_.1} parent=1 // pred_check_branch
      %168 = sbr.rel (0) target = $region97
    $region96: #{_lambda_.1} parent=1 // pred_region
      _
    $region97: #{_lambda_.1} parent=1 // pred_fallthru
      _
    // Predicated region
    $region98: #{_lambda_.1} parent=1 // pred_check
      _
    $region99: #{_lambda_.1} parent=1 // pred_check_branch
      %170 = sbr.rel (0) target = $region101
    $region100: #{_lambda_.1} parent=1 // pred_region
      _
    $region101: #{_lambda_.1} parent=1 // pred_fallthru
      _
    // Predicated region
    $region102: #{_lambda_.1} parent=1 // pred_check
      _
    $region103: #{_lambda_.1} parent=1 // pred_check_branch
      %172 = sbr.rel (0) target = $region105
    $region104: #{_lambda_.1} parent=1 // pred_region
      %173 = dma.done [#allocation3], 128
    $region105: #{_lambda_.1} parent=1 // pred_fallthru
      _
    // Predicated region
    $region106: #{_lambda_.1} parent=1 // pred_check
      _
    $region107: #{_lambda_.1} parent=1 // pred_check_branch
      %175 = sbr.rel (0) target = $region109
    $region108: #{_lambda_.1} parent=1 // pred_region
      %176 = dma.done [#allocation5], 256
    $region109: #{_lambda_.1} parent=1 // pred_fallthru
      _
    // Predicated region
    $region110: #{_lambda_.1} parent=1 // pred_check
      _
    $region111: #{_lambda_.1} parent=1 // pred_check_branch
      %178 = sbr.rel (0) target = $region113
    $region112: #{_lambda_.1} parent=1 // pred_region
      %179 = dma.done [#allocation5], 1024
    $region113: #{_lambda_.1} parent=1 // pred_fallthru
      _
    // Predicated region
    $region114: #{_lambda_.1} parent=1 // pred_check
      _
    $region115: #{_lambda_.1} parent=1 // pred_check_branch
      %181 = sbr.rel (0) target = $region117
    $region116: #{_lambda_.1} parent=1 // pred_region
      %182 = dma.done [#allocation8], 1024
    $region117: #{_lambda_.1} parent=1 // pred_fallthru
      _
    // Predicated region
    $region118: #{_lambda_.1} parent=1 // pred_check
      _
    $region119: #{_lambda_.1} parent=1 // pred_check_branch
      %184 = sbr.rel (0) target = $region121
    $region120: #{_lambda_.1} parent=1 // pred_region
      %185 = dma.done [#allocation8], 1024
    $region121: #{_lambda_.1} parent=1 // pred_fallthru
      _
    // Predicated region
    $region122: #{_lambda_.1} parent=1 // pred_check
      _
    $region123: #{_lambda_.1} parent=1 // pred_check_branch
      %187 = sbr.rel (0) target = $region125
    $region124: #{_lambda_.1} parent=1 // pred_region
      %188 = dma.done [#allocation11], 32
    $region125: #{_lambda_.1} parent=1 // pred_fallthru
      _
    // Predicated region
    $region126: #{_lambda_.1} parent=1 // pred_check
      _
    $region127: #{_lambda_.1} parent=1 // pred_check_branch
      %190 = sbr.rel (0) target = $region129
    $region128: #{_lambda_.1} parent=1 // pred_region
      %191 = dma.done [#allocation11], 32
    $region129: #{_lambda_.1} parent=1 // pred_fallthru
      _
    // Predicated region
    $region130: #{_lambda_.1} parent=1 // pred_check
      _
    $region131: #{_lambda_.1} parent=1 // pred_check_branch
      %193 = sbr.rel (0) target = $region133
    $region132: #{_lambda_.1} parent=1 // pred_region
      %194 = dma.done [#allocation14], 512
    $region133: #{_lambda_.1} parent=1 // pred_fallthru
      _
    // Predicated region
    $region134: #{_lambda_.1} parent=1 // pred_check
      _
    $region135: #{_lambda_.1} parent=1 // pred_check_branch
      %196 = sbr.rel (0) target = $region137
    $region136: #{_lambda_.1} parent=1 // pred_region
      %197 = dma.done [#allocation14], 16
    $region137: #{_lambda_.1} parent=1 // pred_fallthru
      _
    %v198 = vld [vmem:[%s0] sm:$0xff]
    %v199 = vld [vmem:[%s0 + $0x8] sm:$0xff]
    %v200 = vld [vmem:[%s1] sm:$0x1]
    %v201 = vld [vmem:[%s1 + $0x1] sm:$0x1]
    %v202 = vsub.f32 1.0, %v198
    %v203 = vsub.f32 1.0, %v199
    %v204 = vmul.f32 %v202, %v202
    %v205 = vmul.f32 %v203, %v203
    %v206 = vld [vmem:[#allocation2] sm:$0x1f]
    %v207 = vld [vmem:[%s3] sm:$0x1f]
    %210 = vrot.lane.b32.xlu0 %v202, 127
    %v211 = vpop.permute.xlu0 %210
    %212 = vrot.lane.b32.xlu0 %v203, 127
    %v213 = vpop.permute.xlu0 %212
    %vm214 = vcmask 39936
    %v215 = vsel %vm214, %v211, 0
    %v217 = vsel %vm214, %v213, 0
    %vm219 = vcmask 1044480
    %v221 = vsel %vm219, %v207, 0
    %223 = vmatprep.subr.mxu0 0.0
    %224 = vmatpush1.msra.mxu0 %v221
    %225 = vmatprep.subr.mxu0 0.0
    %226 = vmatpush1.msra.mxu0 0.0
    %227 = vmatprep.subr.mxu0 0.0
    %228 = vmatpush1.msra.mxu0 0.0
    %229 = vmatprep.subr.mxu0 0.0
    %230 = vmatpush1.msra.mxu0 0.0
    %231 = vmatprep.subr.mxu0 0.0
    %232 = vmatpush1.msra.mxu0 0.0
    %233 = vmatprep.subr.mxu0 0.0
    %234 = vmatpush1.msra.mxu0 0.0
    %235 = vmatprep.subr.mxu0 0.0
    %236 = vmatpush1.msra.mxu0 0.0
    %237 = vmatprep.subr.mxu0 0.0
    %238 = vmatpush1.msra.mxu0 0.0
    %239 = vmatprep.subr.mxu0 0.0
    %240 = vmatpush1.msra.mxu0 0.0
    %241 = vmatprep.subr.mxu0 0.0
    %242 = vmatpush1.msra.mxu0 0.0
    %243 = vmatprep.subr.mxu0 0.0
    %244 = vmatpush1.msra.mxu0 0.0
    %245 = vmatprep.subr.mxu0 0.0
    %246 = vmatpush1.msra.mxu0 0.0
    %247 = vmatprep.subr.mxu0 0.0
    %248 = vmatpush1.msra.mxu0 0.0
    %249 = vmatprep.subr.mxu0 0.0
    %250 = vmatpush1.msra.mxu0 0.0
    %251 = vmatprep.subr.mxu0 0.0
    %252 = vmatpush1.msra.mxu0 0.0
    %253 = vmatprep.subr.mxu0 0.0
    %254 = vmatpush1.msra.mxu0 0.0
    %255 = vmatprep.subr.mxu0 0.0
    %256 = vmatpush1.msra.mxu0 0.0
    %257 = vmatprep.subr.mxu0 0.0
    %258 = vmatpush1.msra.mxu0 0.0
    %259 = vmatprep.subr.mxu0 0.0
    %260 = vmatpush1.msra.mxu0 0.0
    %261 = vmatprep.subr.mxu0 0.0
    %262 = vmatpush1.msra.mxu0 0.0
    %263 = vmatprep.subr.mxu0 0.0
    %264 = vmatpush1.msra.mxu0 0.0
    %265 = vmatprep.subr.mxu0 0.0
    %266 = vmatpush1.msra.mxu0 0.0
    %267 = vmatprep.subr.mxu0 0.0
    %268 = vmatpush1.msra.mxu0 0.0
    %269 = vmatprep.subr.mxu0 0.0
    %270 = vmatpush1.msra.mxu0 0.0
    %271 = vmatprep.subr.mxu0 0.0
    %272 = vmatpush1.msra.mxu0 0.0
    %273 = vmatprep.subr.mxu0 0.0
    %274 = vmatpush1.msra.mxu0 0.0
    %275 = vmatprep.subr.mxu0 0.0
    %276 = vmatpush1.msra.mxu0 0.0
    %277 = vmatprep.subr.mxu0 0.0
    %278 = vmatpush1.msra.mxu0 0.0
    %279 = vmatprep.subr.mxu0 0.0
    %280 = vmatpush1.msra.mxu0 0.0
    %281 = vmatprep.subr.mxu0 0.0
    %282 = vmatpush1.msra.mxu0 0.0
    %283 = vmatprep.subr.mxu0 0.0
    %284 = vmatpush1.msra.mxu0 0.0
    %285 = vmatprep.subr.mxu0 0.0
    %286 = vmatpush1.msra.mxu0 0.0
    %287 = vmatprep.mubr.f32.mxu0 0.0
    %288 = vmatmul.mubr.f32.gmra.mrb[0].mxu0 %v215
    %v289 = vpop.f32.mrb[0].mxu0
    %v290 = vadd.f32 0.0, %v289
    %v291 = vpop.f32.mrb[0].mxu0
    %292 = vmatprep.mubr.f32.mxu0 0.0
    %293 = vmatmul.mubr.f32.gmra.mrb[0].mxu0 %v217
    %v294 = vpop.f32.mrb[0].mxu0
    %v295 = vadd.f32 0.0, %v294
    %v296 = vpop.f32.mrb[0].mxu0
    %297 = vdwg.mxu0
    %300 = vrot.lane.b32.xlu0 %v204, 127
    %v301 = vpop.permute.xlu0 %300
    %302 = vrot.lane.b32.xlu0 %v205, 127
    %v303 = vpop.permute.xlu0 %302
    %v304 = vsel %vm214, %v301, 0
    %v306 = vsel %vm214, %v303, 0
    %v309 = vsel %vm219, %v206, 0
    %311 = vmatprep.subr.mxu0 0.0
    %312 = vmatpush1.msra.mxu0 %v309
    %313 = vmatprep.subr.mxu0 0.0
    %314 = vmatpush1.msra.mxu0 0.0
    %315 = vmatprep.subr.mxu0 0.0
    %316 = vmatpush1.msra.mxu0 0.0
    %317 = vmatprep.subr.mxu0 0.0
    %318 = vmatpush1.msra.mxu0 0.0
    %319 = vmatprep.subr.mxu0 0.0
    %320 = vmatpush1.msra.mxu0 0.0
    %321 = vmatprep.subr.mxu0 0.0
    %322 = vmatpush1.msra.mxu0 0.0
    %323 = vmatprep.subr.mxu0 0.0
    %324 = vmatpush1.msra.mxu0 0.0
    %325 = vmatprep.subr.mxu0 0.0
    %326 = vmatpush1.msra.mxu0 0.0
    %327 = vmatprep.subr.mxu0 0.0
    %328 = vmatpush1.msra.mxu0 0.0
    %329 = vmatprep.subr.mxu0 0.0
    %330 = vmatpush1.msra.mxu0 0.0
    %331 = vmatprep.subr.mxu0 0.0
    %332 = vmatpush1.msra.mxu0 0.0
    %333 = vmatprep.subr.mxu0 0.0
    %334 = vmatpush1.msra.mxu0 0.0
    %335 = vmatprep.subr.mxu0 0.0
    %336 = vmatpush1.msra.mxu0 0.0
    %337 = vmatprep.subr.mxu0 0.0
    %338 = vmatpush1.msra.mxu0 0.0
    %339 = vmatprep.subr.mxu0 0.0
    %340 = vmatpush1.msra.mxu0 0.0
    %341 = vmatprep.subr.mxu0 0.0
    %342 = vmatpush1.msra.mxu0 0.0
    %343 = vmatprep.subr.mxu0 0.0
    %344 = vmatpush1.msra.mxu0 0.0
    %345 = vmatprep.subr.mxu0 0.0
    %346 = vmatpush1.msra.mxu0 0.0
    %347 = vmatprep.subr.mxu0 0.0
    %348 = vmatpush1.msra.mxu0 0.0
    %349 = vmatprep.subr.mxu0 0.0
    %350 = vmatpush1.msra.mxu0 0.0
    %351 = vmatprep.subr.mxu0 0.0
    %352 = vmatpush1.msra.mxu0 0.0
    %353 = vmatprep.subr.mxu0 0.0
    %354 = vmatpush1.msra.mxu0 0.0
    %355 = vmatprep.subr.mxu0 0.0
    %356 = vmatpush1.msra.mxu0 0.0
    %357 = vmatprep.subr.mxu0 0.0
    %358 = vmatpush1.msra.mxu0 0.0
    %359 = vmatprep.subr.mxu0 0.0
    %360 = vmatpush1.msra.mxu0 0.0
    %361 = vmatprep.subr.mxu0 0.0
    %362 = vmatpush1.msra.mxu0 0.0
    %363 = vmatprep.subr.mxu0 0.0
    %364 = vmatpush1.msra.mxu0 0.0
    %365 = vmatprep.subr.mxu0 0.0
    %366 = vmatpush1.msra.mxu0 0.0
    %367 = vmatprep.subr.mxu0 0.0
    %368 = vmatpush1.msra.mxu0 0.0
    %369 = vmatprep.subr.mxu0 0.0
    %370 = vmatpush1.msra.mxu0 0.0
    %371 = vmatprep.subr.mxu0 0.0
    %372 = vmatpush1.msra.mxu0 0.0
    %373 = vmatprep.subr.mxu0 0.0
    %374 = vmatpush1.msra.mxu0 0.0
    %375 = vmatprep.mubr.f32.mxu0 0.0
    %376 = vmatmul.mubr.f32.gmra.mrb[0].mxu0 %v304
    %v377 = vpop.f32.mrb[0].mxu0
    %v378 = vadd.f32 %v290, %v377
    %v379 = vpop.f32.mrb[0].mxu0
    %380 = vmatprep.mubr.f32.mxu0 0.0
    %381 = vmatmul.mubr.f32.gmra.mrb[0].mxu0 %v306
    %v382 = vpop.f32.mrb[0].mxu0
    %v383 = vadd.f32 %v295, %v382
    %v384 = vpop.f32.mrb[0].mxu0
    %385 = vdwg.mxu0
    %v386 = vld [vmem:[%s4] sm:$0x1]
    %v388 = vlaneseq
    %v389 = vshrl.u32 %v388, 7
    %v390 = vsub.s32 0, %v389
    %v391 = vrot.slane %v386, %v390
    %v393 = vadd.f32 %v378, %v391
    %v394 = vadd.f32 %v383, %v391
    %v395 = vld [vmem:[#allocation4] sm:$0xff]
    %v396 = vld [vmem:[#allocation4 + $0x8] sm:$0xff]
    %v397 = vld [vmem:[%s6] sm:$0x1]
    %v399 = vlaneseq
    %v400 = vshrl.u32 %v399, 7
    %v401 = vsub.s32 0, %v400
    %v402 = vrot.slane %v397, %v401
    %406 = vrot.lane.b32.xlu0 %v198, 122
    %v407 = vpop.permute.xlu0 %406
    %408 = vrot.lane.b32.xlu0 %v199, 122
    %v409 = vpop.permute.xlu0 %408
    %vm410 = vcmask 130048
    %v411 = vsel %vm410, %v407, 0
    %v413 = vsel %vm410, %v409, 0
    %415 = vmatprep.subr.mxu0 0.0
    %416 = vmatpush1.msra.mxu0 %v395
    %417 = vmatprep.subr.mxu0 0.0
    %418 = vmatpush1.msra.mxu0 %v396
    %419 = vmatprep.subr.mxu0 0.0
    %420 = vmatpush1.msra.mxu0 0.0
    %421 = vmatprep.subr.mxu0 0.0
    %422 = vmatpush1.msra.mxu0 0.0
    %423 = vmatprep.subr.mxu0 0.0
    %424 = vmatpush1.msra.mxu0 0.0
    %425 = vmatprep.subr.mxu0 0.0
    %426 = vmatpush1.msra.mxu0 0.0
    %427 = vmatprep.subr.mxu0 0.0
    %428 = vmatpush1.msra.mxu0 0.0
    %429 = vmatprep.subr.mxu0 0.0
    %430 = vmatpush1.msra.mxu0 0.0
    %431 = vmatprep.subr.mxu0 0.0
    %432 = vmatpush1.msra.mxu0 0.0
    %433 = vmatprep.subr.mxu0 0.0
    %434 = vmatpush1.msra.mxu0 0.0
    %435 = vmatprep.subr.mxu0 0.0
    %436 = vmatpush1.msra.mxu0 0.0
    %437 = vmatprep.subr.mxu0 0.0
    %438 = vmatpush1.msra.mxu0 0.0
    %439 = vmatprep.subr.mxu0 0.0
    %440 = vmatpush1.msra.mxu0 0.0
    %441 = vmatprep.subr.mxu0 0.0
    %442 = vmatpush1.msra.mxu0 0.0
    %443 = vmatprep.subr.mxu0 0.0
    %444 = vmatpush1.msra.mxu0 0.0
    %445 = vmatprep.subr.mxu0 0.0
    %446 = vmatpush1.msra.mxu0 0.0
    %447 = vmatprep.subr.mxu0 0.0
    %448 = vmatpush1.msra.mxu0 0.0
    %449 = vmatprep.subr.mxu0 0.0
    %450 = vmatpush1.msra.mxu0 0.0
    %451 = vmatprep.subr.mxu0 0.0
    %452 = vmatpush1.msra.mxu0 0.0
    %453 = vmatprep.subr.mxu0 0.0
    %454 = vmatpush1.msra.mxu0 0.0
    %455 = vmatprep.subr.mxu0 0.0
    %456 = vmatpush1.msra.mxu0 0.0
    %457 = vmatprep.subr.mxu0 0.0
    %458 = vmatpush1.msra.mxu0 0.0
    %459 = vmatprep.subr.mxu0 0.0
    %460 = vmatpush1.msra.mxu0 0.0
    %461 = vmatprep.subr.mxu0 0.0
    %462 = vmatpush1.msra.mxu0 0.0
    %463 = vmatprep.subr.mxu0 0.0
    %464 = vmatpush1.msra.mxu0 0.0
    %465 = vmatprep.subr.mxu0 0.0
    %466 = vmatpush1.msra.mxu0 0.0
    %467 = vmatprep.subr.mxu0 0.0
    %468 = vmatpush1.msra.mxu0 0.0
    %469 = vmatprep.subr.mxu0 0.0
    %470 = vmatpush1.msra.mxu0 0.0
    %471 = vmatprep.subr.mxu0 0.0
    %472 = vmatpush1.msra.mxu0 0.0
    %473 = vmatprep.subr.mxu0 0.0
    %474 = vmatpush1.msra.mxu0 0.0
    %475 = vmatprep.subr.mxu0 0.0
    %476 = vmatpush1.msra.mxu0 0.0
    %477 = vmatprep.subr.mxu0 0.0
    %478 = vmatpush1.msra.mxu0 0.0
    %479 = vmatprep.mubr.f32.mxu0 0.0
    %480 = vmatmul.mubr.f32.gmra.mrb[0].mxu0 %v411
    %v481 = vpop.f32.mrb[0].mxu0
    %v482 = vadd.f32 %v402, %v481
    %v483 = vpop.f32.mrb[0].mxu0
    %484 = vmatprep.mubr.f32.mxu0 0.0
    %485 = vmatmul.mubr.f32.gmra.mrb[0].mxu0 %v413
    %v486 = vpop.f32.mrb[0].mxu0
    %v487 = vadd.f32 %v402, %v486
    %v488 = vpop.f32.mrb[0].mxu0
    %489 = vdwg.mxu0
    %v490 = vadd.f32 %v482, %v393
    %v491 = vadd.f32 %v487, %v394
    %vm492 = vcmp.gt.f32.partialorder %v198, 0.0
    %vm493 = vcmp.gt.f32.partialorder %v199, 0.0
    %vm494 = vcmp.gt.f32.partialorder %v200, 0.0
    %vm495 = vcmp.gt.f32.partialorder %v201, 0.0
    %v496 = vsel %vm492, 1, 0
    %v497 = vsel %vm493, 1, 0
    %498 = vset.pattern.permute.xlu0 0
    %499 = vperm.xlu0 %498, %v496
    %v500 = vpop.permute.xlu0 %499
    %501 = vset.pattern.permute.xlu0 0
    %502 = vperm.xlu0 %501, %v497
    %v503 = vpop.permute.xlu0 %502
    %vm504 = vcmp.eq.s32.totalorder %v500, 1
    %vm505 = vcmp.eq.s32.totalorder %v503, 1
    %v506 = vsel %vm494, 1, 0
    %v507 = vsel %vm495, 1, 0
    %v508 = vlaneseq
    %v509 = vshrl.u32 %v508, 7
    %v510 = vsub.s32 0, %v509
    %v511 = vrot.slane %v506, %v510
    %v512 = vlaneseq
    %v513 = vshrl.u32 %v512, 7
    %v514 = vsub.s32 0, %v513
    %v515 = vrot.slane %v507, %v514
    %vm516 = vcmp.eq.s32.totalorder %v511, 1
    %vm517 = vcmp.eq.s32.totalorder %v515, 1
    %vm518 = vmand %vm504, %vm516
    %vm519 = vmand %vm505, %vm517
    %v520 = vsel %vm518, 0.0, -9e+15
    %v521 = vsel %vm519, 0.0, -9e+15
    %v522 = vld [vmem:[%s7] sm:$0x1]
    %v523 = vld [vmem:[%s8] sm:$0x1]
    %vm524 = vcmask 261120
    %v525 = vsel %vm524, %v490, 0.0
    %526 = vadd.xlane.f32.xlu0 %v525
    %v527 = vpop.xlane.xlu0 %526
    %v528 = vsel %vm524, %v491, 0.0
    %529 = vadd.xlane.f32.xlu0 %v528
    %v530 = vpop.xlane.xlu0 %529
    %v531 = vrcp.pop 32.0
    %v532 = vmul.f32 %v527, %v531
    %v533 = vmul.f32 %v530, %v531
    %v534 = vsub.f32 %v490, %v532
    %v535 = vsub.f32 %v491, %v533
    %v536 = vmul.f32 %v534, %v534
    %v537 = vmul.f32 %v535, %v535
    %v538 = vsel %vm524, %v536, 0.0
    %539 = vadd.xlane.f32.xlu0 %v538
    %v540 = vpop.xlane.xlu0 %539
    %v541 = vsel %vm524, %v537, 0.0
    %542 = vadd.xlane.f32.xlu0 %v541
    %v543 = vpop.xlane.xlu0 %542
    %v544 = vmul.f32 %v540, %v531
    %v545 = vmul.f32 %v543, %v531
    %v546 = vadd.f32 %v544, 1e-05
    %v547 = vadd.f32 %v545, 1e-05
    %v548 = vrsqrt.pop %v546
    %v549 = vrsqrt.pop %v547
    %v550 = vmul.f32 %v534, %v548
    %v551 = vmul.f32 %v535, %v549
    %v553 = vlaneseq
    %v554 = vshrl.u32 %v553, 7
    %v555 = vsub.s32 0, %v554
    %v556 = vrot.slane %v522, %v555
    %v558 = vmul.f32 %v550, %v556
    %v559 = vmul.f32 %v551, %v556
    %v561 = vlaneseq
    %v562 = vshrl.u32 %v561, 7
    %v563 = vsub.s32 0, %v562
    %v564 = vrot.slane %v523, %v563
    %v566 = vadd.f32 %v558, %v564
    %v567 = vadd.f32 %v559, %v564
    %v568 = vld [vmem:[#allocation6] sm:$0xff]
    %v569 = vld [vmem:[#allocation6 + $0x8] sm:$0xff]
    %v570 = vld [vmem:[#allocation6 + $0x10] sm:$0xff]
    %v571 = vld [vmem:[#allocation6 + $0x18] sm:$0xff]
    %v572 = vld [vmem:[%s10] sm:$0x1]
    %v574 = vlaneseq
    %v575 = vshrl.u32 %v574, 7
    %v576 = vsub.s32 0, %v575
    %v577 = vrot.slane %v572, %v576
    %v580 = vsel %vm524, %v566, 0
    %v583 = vsel %vm524, %v567, 0
    %585 = vmatprep.subr.mxu0 0.0
    %586 = vmatpush1.msra.mxu0 %v568
    %587 = vmatprep.subr.mxu0 0.0
    %588 = vmatpush1.msra.mxu0 %v569
    %589 = vmatprep.subr.mxu0 0.0
    %590 = vmatpush1.msra.mxu0 %v570
    %591 = vmatprep.subr.mxu0 0.0
    %592 = vmatpush1.msra.mxu0 %v571
    %593 = vmatprep.subr.mxu0 0.0
    %594 = vmatpush1.msra.mxu0 0.0
    %595 = vmatprep.subr.mxu0 0.0
    %596 = vmatpush1.msra.mxu0 0.0
    %597 = vmatprep.subr.mxu0 0.0
    %598 = vmatpush1.msra.mxu0 0.0
    %599 = vmatprep.subr.mxu0 0.0
    %600 = vmatpush1.msra.mxu0 0.0
    %601 = vmatprep.subr.mxu0 0.0
    %602 = vmatpush1.msra.mxu0 0.0
    %603 = vmatprep.subr.mxu0 0.0
    %604 = vmatpush1.msra.mxu0 0.0
    %605 = vmatprep.subr.mxu0 0.0
    %606 = vmatpush1.msra.mxu0 0.0
    %607 = vmatprep.subr.mxu0 0.0
    %608 = vmatpush1.msra.mxu0 0.0
    %609 = vmatprep.subr.mxu0 0.0
    %610 = vmatpush1.msra.mxu0 0.0
    %611 = vmatprep.subr.mxu0 0.0
    %612 = vmatpush1.msra.mxu0 0.0
    %613 = vmatprep.subr.mxu0 0.0
    %614 = vmatpush1.msra.mxu0 0.0
    %615 = vmatprep.subr.mxu0 0.0
    %616 = vmatpush1.msra.mxu0 0.0
    %617 = vmatprep.subr.mxu0 0.0
    %618 = vmatpush1.msra.mxu0 0.0
    %619 = vmatprep.subr.mxu0 0.0
    %620 = vmatpush1.msra.mxu0 0.0
    %621 = vmatprep.subr.mxu0 0.0
    %622 = vmatpush1.msra.mxu0 0.0
    %623 = vmatprep.subr.mxu0 0.0
    %624 = vmatpush1.msra.mxu0 0.0
    %625 = vmatprep.subr.mxu0 0.0
    %626 = vmatpush1.msra.mxu0 0.0
    %627 = vmatprep.subr.mxu0 0.0
    %628 = vmatpush1.msra.mxu0 0.0
    %629 = vmatprep.subr.mxu0 0.0
    %630 = vmatpush1.msra.mxu0 0.0
    %631 = vmatprep.subr.mxu0 0.0
    %632 = vmatpush1.msra.mxu0 0.0
    %633 = vmatprep.subr.mxu0 0.0
    %634 = vmatpush1.msra.mxu0 0.0
    %635 = vmatprep.subr.mxu0 0.0
    %636 = vmatpush1.msra.mxu0 0.0
    %637 = vmatprep.subr.mxu0 0.0
    %638 = vmatpush1.msra.mxu0 0.0
    %639 = vmatprep.subr.mxu0 0.0
    %640 = vmatpush1.msra.mxu0 0.0
    %641 = vmatprep.subr.mxu0 0.0
    %642 = vmatpush1.msra.mxu0 0.0
    %643 = vmatprep.subr.mxu0 0.0
    %644 = vmatpush1.msra.mxu0 0.0
    %645 = vmatprep.subr.mxu0 0.0
    %646 = vmatpush1.msra.mxu0 0.0
    %647 = vmatprep.subr.mxu0 0.0
    %648 = vmatpush1.msra.mxu0 0.0
    %649 = vmatprep.mubr.f32.mxu0 0.0
    %650 = vmatmul.mubr.f32.gmra.mrb[0].mxu0 %v580
    %v651 = vpop.f32.mrb[0].mxu0
    %v652 = vadd.f32 %v577, %v651
    %v653 = vpop.f32.mrb[0].mxu0
    %654 = vmatprep.mubr.f32.mxu0 0.0
    %655 = vmatmul.mubr.f32.gmra.mrb[0].mxu0 %v583
    %v656 = vpop.f32.mrb[0].mxu0
    %v657 = vadd.f32 %v577, %v656
    %v658 = vpop.f32.mrb[0].mxu0
    %659 = vdwg.mxu0
    %v660 = vld [vmem:[#allocation7] sm:$0xff]
    %v661 = vld [vmem:[#allocation7 + $0x8] sm:$0xff]
    %v662 = vld [vmem:[#allocation7 + $0x10] sm:$0xff]
    %v663 = vld [vmem:[#allocation7 + $0x18] sm:$0xff]
    %v664 = vld [vmem:[%s12] sm:$0x1]
    %v666 = vlaneseq
    %v667 = vshrl.u32 %v666, 7
    %v668 = vsub.s32 0, %v667
    %v669 = vrot.slane %v664, %v668
    %671 = vmatprep.subr.mxu0 0.0
    %672 = vmatpush1.msra.mxu0 %v660
    %673 = vmatprep.subr.mxu0 0.0
    %674 = vmatpush1.msra.mxu0 %v661
    %675 = vmatprep.subr.mxu0 0.0
    %676 = vmatpush1.msra.mxu0 %v662
    %677 = vmatprep.subr.mxu0 0.0
    %678 = vmatpush1.msra.mxu0 %v663
    %679 = vmatprep.subr.mxu0 0.0
    %680 = vmatpush1.msra.mxu0 0.0
    %681 = vmatprep.subr.mxu0 0.0
    %682 = vmatpush1.msra.mxu0 0.0
    %683 = vmatprep.subr.mxu0 0.0
    %684 = vmatpush1.msra.mxu0 0.0
    %685 = vmatprep.subr.mxu0 0.0
    %686 = vmatpush1.msra.mxu0 0.0
    %687 = vmatprep.subr.mxu0 0.0
    %688 = vmatpush1.msra.mxu0 0.0
    %689 = vmatprep.subr.mxu0 0.0
    %690 = vmatpush1.msra.mxu0 0.0
    %691 = vmatprep.subr.mxu0 0.0
    %692 = vmatpush1.msra.mxu0 0.0
    %693 = vmatprep.subr.mxu0 0.0
    %694 = vmatpush1.msra.mxu0 0.0
    %695 = vmatprep.subr.mxu0 0.0
    %696 = vmatpush1.msra.mxu0 0.0
    %697 = vmatprep.subr.mxu0 0.0
    %698 = vmatpush1.msra.mxu0 0.0
    %699 = vmatprep.subr.mxu0 0.0
    %700 = vmatpush1.msra.mxu0 0.0
    %701 = vmatprep.subr.mxu0 0.0
    %702 = vmatpush1.msra.mxu0 0.0
    %703 = vmatprep.subr.mxu0 0.0
    %704 = vmatpush1.msra.mxu0 0.0
    %705 = vmatprep.subr.mxu0 0.0
    %706 = vmatpush1.msra.mxu0 0.0
    %707 = vmatprep.subr.mxu0 0.0
    %708 = vmatpush1.msra.mxu0 0.0
    %709 = vmatprep.subr.mxu0 0.0
    %710 = vmatpush1.msra.mxu0 0.0
    %711 = vmatprep.subr.mxu0 0.0
    %712 = vmatpush1.msra.mxu0 0.0
    %713 = vmatprep.subr.mxu0 0.0
    %714 = vmatpush1.msra.mxu0 0.0
    %715 = vmatprep.subr.mxu0 0.0
    %716 = vmatpush1.msra.mxu0 0.0
    %717 = vmatprep.subr.mxu0 0.0
    %718 = vmatpush1.msra.mxu0 0.0
    %719 = vmatprep.subr.mxu0 0.0
    %720 = vmatpush1.msra.mxu0 0.0
    %721 = vmatprep.subr.mxu0 0.0
    %722 = vmatpush1.msra.mxu0 0.0
    %723 = vmatprep.subr.mxu0 0.0
    %724 = vmatpush1.msra.mxu0 0.0
    %725 = vmatprep.subr.mxu0 0.0
    %726 = vmatpush1.msra.mxu0 0.0
    %727 = vmatprep.subr.mxu0 0.0
    %728 = vmatpush1.msra.mxu0 0.0
    %729 = vmatprep.subr.mxu0 0.0
    %730 = vmatpush1.msra.mxu0 0.0
    %731 = vmatprep.subr.mxu0 0.0
    %732 = vmatpush1.msra.mxu0 0.0
    %733 = vmatprep.subr.mxu0 0.0
    %734 = vmatpush1.msra.mxu0 0.0
    %735 = vmatprep.mubr.f32.mxu0 0.0
    %736 = vmatmul.mubr.f32.gmra.mrb[0].mxu0 %v580
    %v737 = vpop.f32.mrb[0].mxu0
    %v738 = vadd.f32 %v669, %v737
    %v739 = vpop.f32.mrb[0].mxu0
    %740 = vmatprep.mubr.f32.mxu0 0.0
    %741 = vmatmul.mubr.f32.gmra.mrb[0].mxu0 %v583
    %v742 = vpop.f32.mrb[0].mxu0
    %v743 = vadd.f32 %v669, %v742
    %v744 = vpop.f32.mrb[0].mxu0
    %745 = vdwg.mxu0
    %v746 = vld [vmem:[#allocation9] sm:$0xff]
    %v747 = vld [vmem:[#allocation9 + $0x8] sm:$0xff]
    %v748 = vld [vmem:[#allocation9 + $0x10] sm:$0xff]
    %v749 = vld [vmem:[#allocation9 + $0x18] sm:$0xff]
    %v750 = vld [vmem:[%s14] sm:$0x1]
    %v752 = vlaneseq
    %v753 = vshrl.u32 %v752, 7
    %v754 = vsub.s32 0, %v753
    %v755 = vrot.slane %v750, %v754
    %757 = vmatprep.subr.mxu0 0.0
    %758 = vmatpush1.msra.mxu0 %v746
    %759 = vmatprep.subr.mxu0 0.0
    %760 = vmatpush1.msra.mxu0 %v747
    %761 = vmatprep.subr.mxu0 0.0
    %762 = vmatpush1.msra.mxu0 %v748
    %763 = vmatprep.subr.mxu0 0.0
    %764 = vmatpush1.msra.mxu0 %v749
    %765 = vmatprep.subr.mxu0 0.0
    %766 = vmatpush1.msra.mxu0 0.0
    %767 = vmatprep.subr.mxu0 0.0
    %768 = vmatpush1.msra.mxu0 0.0
    %769 = vmatprep.subr.mxu0 0.0
    %770 = vmatpush1.msra.mxu0 0.0
    %771 = vmatprep.subr.mxu0 0.0
    %772 = vmatpush1.msra.mxu0 0.0
    %773 = vmatprep.subr.mxu0 0.0
    %774 = vmatpush1.msra.mxu0 0.0
    %775 = vmatprep.subr.mxu0 0.0
    %776 = vmatpush1.msra.mxu0 0.0
    %777 = vmatprep.subr.mxu0 0.0
    %778 = vmatpush1.msra.mxu0 0.0
    %779 = vmatprep.subr.mxu0 0.0
    %780 = vmatpush1.msra.mxu0 0.0
    %781 = vmatprep.subr.mxu0 0.0
    %782 = vmatpush1.msra.mxu0 0.0
    %783 = vmatprep.subr.mxu0 0.0
    %784 = vmatpush1.msra.mxu0 0.0
    %785 = vmatprep.subr.mxu0 0.0
    %786 = vmatpush1.msra.mxu0 0.0
    %787 = vmatprep.subr.mxu0 0.0
    %788 = vmatpush1.msra.mxu0 0.0
    %789 = vmatprep.subr.mxu0 0.0
    %790 = vmatpush1.msra.mxu0 0.0
    %791 = vmatprep.subr.mxu0 0.0
    %792 = vmatpush1.msra.mxu0 0.0
    %793 = vmatprep.subr.mxu0 0.0
    %794 = vmatpush1.msra.mxu0 0.0
    %795 = vmatprep.subr.mxu0 0.0
    %796 = vmatpush1.msra.mxu0 0.0
    %797 = vmatprep.subr.mxu0 0.0
    %798 = vmatpush1.msra.mxu0 0.0
    %799 = vmatprep.subr.mxu0 0.0
    %800 = vmatpush1.msra.mxu0 0.0
    %801 = vmatprep.subr.mxu0 0.0
    %802 = vmatpush1.msra.mxu0 0.0
    %803 = vmatprep.subr.mxu0 0.0
    %804 = vmatpush1.msra.mxu0 0.0
    %805 = vmatprep.subr.mxu0 0.0
    %806 = vmatpush1.msra.mxu0 0.0
    %807 = vmatprep.subr.mxu0 0.0
    %808 = vmatpush1.msra.mxu0 0.0
    %809 = vmatprep.subr.mxu0 0.0
    %810 = vmatpush1.msra.mxu0 0.0
    %811 = vmatprep.subr.mxu0 0.0
    %812 = vmatpush1.msra.mxu0 0.0
    %813 = vmatprep.subr.mxu0 0.0
    %814 = vmatpush1.msra.mxu0 0.0
    %815 = vmatprep.subr.mxu0 0.0
    %816 = vmatpush1.msra.mxu0 0.0
    %817 = vmatprep.subr.mxu0 0.0
    %818 = vmatpush1.msra.mxu0 0.0
    %819 = vmatprep.subr.mxu0 0.0
    %820 = vmatpush1.msra.mxu0 0.0
    %821 = vmatprep.mubr.f32.mxu0 0.0
    %822 = vmatmul.mubr.f32.gmra.mrb[0].mxu0 %v580
    %v823 = vpop.f32.mrb[0].mxu0
    %v824 = vadd.f32 %v755, %v823
    %v825 = vpop.f32.mrb[0].mxu0
    %826 = vmatprep.mubr.f32.mxu0 0.0
    %827 = vmatmul.mubr.f32.gmra.mrb[0].mxu0 %v583
    %v828 = vpop.f32.mrb[0].mxu0
    %v829 = vadd.f32 %v755, %v828
    %v830 = vpop.f32.mrb[0].mxu0
    %831 = vdwg.mxu0
    %v833 = vsel %vm524, %v652, 0
    %v836 = vsel %vm524, %v738, 0
    %838 = vmatprep.subr.mxu0 0.0
    %839 = vmatpush1.xpose.msra.mxu0 %v836
    %840 = vmatprep.subr.mxu0 0.0
    %841 = vmatpush1.xpose.msra.mxu0 0.0
    %842 = vmatprep.subr.mxu0 0.0
    %843 = vmatpush1.xpose.msra.mxu0 0.0
    %844 = vmatprep.subr.mxu0 0.0
    %845 = vmatpush1.xpose.msra.mxu0 0.0
    %846 = vmatprep.subr.mxu0 0.0
    %847 = vmatpush1.xpose.msra.mxu0 0.0
    %848 = vmatprep.subr.mxu0 0.0
    %849 = vmatpush1.xpose.msra.mxu0 0.0
    %850 = vmatprep.subr.mxu0 0.0
    %851 = vmatpush1.xpose.msra.mxu0 0.0
    %852 = vmatprep.subr.mxu0 0.0
    %853 = vmatpush1.xpose.msra.mxu0 0.0
    %854 = vmatprep.subr.mxu0 0.0
    %855 = vmatpush1.xpose.msra.mxu0 0.0
    %856 = vmatprep.subr.mxu0 0.0
    %857 = vmatpush1.xpose.msra.mxu0 0.0
    %858 = vmatprep.subr.mxu0 0.0
    %859 = vmatpush1.xpose.msra.mxu0 0.0
    %860 = vmatprep.subr.mxu0 0.0
    %861 = vmatpush1.xpose.msra.mxu0 0.0
    %862 = vmatprep.subr.mxu0 0.0
    %863 = vmatpush1.xpose.msra.mxu0 0.0
    %864 = vmatprep.subr.mxu0 0.0
    %865 = vmatpush1.xpose.msra.mxu0 0.0
    %866 = vmatprep.subr.mxu0 0.0
    %867 = vmatpush1.xpose.msra.mxu0 0.0
    %868 = vmatprep.subr.mxu0 0.0
    %869 = vmatpush1.xpose.msra.mxu0 0.0
    %870 = vmatprep.subr.mxu0 0.0
    %871 = vmatpush1.xpose.msra.mxu0 0.0
    %872 = vmatprep.subr.mxu0 0.0
    %873 = vmatpush1.xpose.msra.mxu0 0.0
    %874 = vmatprep.subr.mxu0 0.0
    %875 = vmatpush1.xpose.msra.mxu0 0.0
    %876 = vmatprep.subr.mxu0 0.0
    %877 = vmatpush1.xpose.msra.mxu0 0.0
    %878 = vmatprep.subr.mxu0 0.0
    %879 = vmatpush1.xpose.msra.mxu0 0.0
    %880 = vmatprep.subr.mxu0 0.0
    %881 = vmatpush1.xpose.msra.mxu0 0.0
    %882 = vmatprep.subr.mxu0 0.0
    %883 = vmatpush1.xpose.msra.mxu0 0.0
    %884 = vmatprep.subr.mxu0 0.0
    %885 = vmatpush1.xpose.msra.mxu0 0.0
    %886 = vmatprep.subr.mxu0 0.0
    %887 = vmatpush1.xpose.msra.mxu0 0.0
    %888 = vmatprep.subr.mxu0 0.0
    %889 = vmatpush1.xpose.msra.mxu0 0.0
    %890 = vmatprep.subr.mxu0 0.0
    %891 = vmatpush1.xpose.msra.mxu0 0.0
    %892 = vmatprep.subr.mxu0 0.0
    %893 = vmatpush1.xpose.msra.mxu0 0.0
    %894 = vmatprep.subr.mxu0 0.0
    %895 = vmatpush1.xpose.msra.mxu0 0.0
    %896 = vmatprep.subr.mxu0 0.0
    %897 = vmatpush1.xpose.msra.mxu0 0.0
    %898 = vmatprep.subr.mxu0 0.0
    %899 = vmatpush1.xpose.msra.mxu0 0.0
    %900 = vmatprep.subr.mxu0 0.0
    %901 = vmatpush1.xpose.msra.mxu0 0.0
    %902 = vmatprep.mubr.f32.mxu0 0.0
    %903 = vmatmul.mubr.f32.gmra.mrb[0].mxu0 %v833
    %v904 = vpop.f32.mrb[0].mxu0
    %v905 = vadd.f32 %v520, %v904
    %v906 = vpop.f32.mrb[0].mxu0
    %907 = vdwg.mxu0
    %v909 = vsel %vm524, %v657, 0
    %v912 = vsel %vm524, %v743, 0
    %914 = vmatprep.subr.mxu0 0.0
    %915 = vmatpush1.xpose.msra.mxu0 %v912
    %916 = vmatprep.subr.mxu0 0.0
    %917 = vmatpush1.xpose.msra.mxu0 0.0
    %918 = vmatprep.subr.mxu0 0.0
    %919 = vmatpush1.xpose.msra.mxu0 0.0
    %920 = vmatprep.subr.mxu0 0.0
    %921 = vmatpush1.xpose.msra.mxu0 0.0
    %922 = vmatprep.subr.mxu0 0.0
    %923 = vmatpush1.xpose.msra.mxu0 0.0
    %924 = vmatprep.subr.mxu0 0.0
    %925 = vmatpush1.xpose.msra.mxu0 0.0
    %926 = vmatprep.subr.mxu0 0.0
    %927 = vmatpush1.xpose.msra.mxu0 0.0
    %928 = vmatprep.subr.mxu0 0.0
    %929 = vmatpush1.xpose.msra.mxu0 0.0
    %930 = vmatprep.subr.mxu0 0.0
    %931 = vmatpush1.xpose.msra.mxu0 0.0
    %932 = vmatprep.subr.mxu0 0.0
    %933 = vmatpush1.xpose.msra.mxu0 0.0
    %934 = vmatprep.subr.mxu0 0.0
    %935 = vmatpush1.xpose.msra.mxu0 0.0
    %936 = vmatprep.subr.mxu0 0.0
    %937 = vmatpush1.xpose.msra.mxu0 0.0
    %938 = vmatprep.subr.mxu0 0.0
    %939 = vmatpush1.xpose.msra.mxu0 0.0
    %940 = vmatprep.subr.mxu0 0.0
    %941 = vmatpush1.xpose.msra.mxu0 0.0
    %942 = vmatprep.subr.mxu0 0.0
    %943 = vmatpush1.xpose.msra.mxu0 0.0
    %944 = vmatprep.subr.mxu0 0.0
    %945 = vmatpush1.xpose.msra.mxu0 0.0
    %946 = vmatprep.subr.mxu0 0.0
    %947 = vmatpush1.xpose.msra.mxu0 0.0
    %948 = vmatprep.subr.mxu0 0.0
    %949 = vmatpush1.xpose.msra.mxu0 0.0
    %950 = vmatprep.subr.mxu0 0.0
    %951 = vmatpush1.xpose.msra.mxu0 0.0
    %952 = vmatprep.subr.mxu0 0.0
    %953 = vmatpush1.xpose.msra.mxu0 0.0
    %954 = vmatprep.subr.mxu0 0.0
    %955 = vmatpush1.xpose.msra.mxu0 0.0
    %956 = vmatprep.subr.mxu0 0.0
    %957 = vmatpush1.xpose.msra.mxu0 0.0
    %958 = vmatprep.subr.mxu0 0.0
    %959 = vmatpush1.xpose.msra.mxu0 0.0
    %960 = vmatprep.subr.mxu0 0.0
    %961 = vmatpush1.xpose.msra.mxu0 0.0
    %962 = vmatprep.subr.mxu0 0.0
    %963 = vmatpush1.xpose.msra.mxu0 0.0
    %964 = vmatprep.subr.mxu0 0.0
    %965 = vmatpush1.xpose.msra.mxu0 0.0
    %966 = vmatprep.subr.mxu0 0.0
    %967 = vmatpush1.xpose.msra.mxu0 0.0
    %968 = vmatprep.subr.mxu0 0.0
    %969 = vmatpush1.xpose.msra.mxu0 0.0
    %970 = vmatprep.subr.mxu0 0.0
    %971 = vmatpush1.xpose.msra.mxu0 0.0
    %972 = vmatprep.subr.mxu0 0.0
    %973 = vmatpush1.xpose.msra.mxu0 0.0
    %974 = vmatprep.subr.mxu0 0.0
    %975 = vmatpush1.xpose.msra.mxu0 0.0
    %976 = vmatprep.subr.mxu0 0.0
    %977 = vmatpush1.xpose.msra.mxu0 0.0
    %978 = vmatprep.mubr.f32.mxu0 0.0
    %979 = vmatmul.mubr.f32.gmra.mrb[0].mxu0 %v909
    %v980 = vpop.f32.mrb[0].mxu0
    %v981 = vadd.f32 %v521, %v980
    %v982 = vpop.f32.mrb[0].mxu0
    %983 = vdwg.mxu0
    %vm984 = vcmask 64512
    %v985 = vsel %vm984, %v905, -inf
    %986 = vmax.xlane.f32.xlu0 %v985
    %v987 = vpop.xlane.xlu0 %986
    %v988 = vsel %vm984, %v981, -inf
    %989 = vmax.xlane.f32.xlu0 %v988
    %v990 = vpop.xlane.xlu0 %989
    %v991 = vsub.f32 %v905, %v987
    %v992 = vsub.f32 %v981, %v990
    %v993 = vmul.f32 %v991, 1.442695
    %v994 = vpow.pop %v993
    %v995 = vmul.f32 %v992, 1.442695
    %v996 = vpow.pop %v995
    %v999 = vlaneseq
    %v1000 = vshrl.u32 %v999, 7
    %v1001 = vsub.s32 0, %v1000
    %v1002 = vrot.slane %v200, %v1001
    %v1003 = vlaneseq
    %v1004 = vshrl.u32 %v1003, 7
    %v1005 = vsub.s32 0, %v1004
    %v1006 = vrot.slane %v201, %v1005
    %v1009 = vmul.f32 %v994, %v1002
    %v1010 = vmul.f32 %v996, %v1006
    %v1011 = vsel %vm984, %v1009, 0.0
    %1012 = vadd.xlane.f32.xlu0 %v1011
    %v1013 = vpop.xlane.xlu0 %1012
    %v1014 = vsel %vm984, %v1010, 0.0
    %1015 = vadd.xlane.f32.xlu0 %v1014
    %v1016 = vpop.xlane.xlu0 %1015
    %v1017 = vrcp.pop %v1013
    %v1018 = vrcp.pop %v1016
    %v1019 = vmul.f32 %v1009, %v1017
    %v1020 = vmul.f32 %v1010, %v1018
    %v1022 = vsel %vm984, %v1019, 0
    %1024 = vmatprep.subr.mxu0 0.0
    %1025 = vmatpush1.msra.mxu0 %v824
    %1026 = vmatprep.subr.mxu0 0.0
    %1027 = vmatpush1.msra.mxu0 0.0
    %1028 = vmatprep.subr.mxu0 0.0
    %1029 = vmatpush1.msra.mxu0 0.0
    %1030 = vmatprep.subr.mxu0 0.0
    %1031 = vmatpush1.msra.mxu0 0.0
    %1032 = vmatprep.subr.mxu0 0.0
    %1033 = vmatpush1.msra.mxu0 0.0
    %1034 = vmatprep.subr.mxu0 0.0
    %1035 = vmatpush1.msra.mxu0 0.0
    %1036 = vmatprep.subr.mxu0 0.0
    %1037 = vmatpush1.msra.mxu0 0.0
    %1038 = vmatprep.subr.mxu0 0.0
    %1039 = vmatpush1.msra.mxu0 0.0
    %1040 = vmatprep.subr.mxu0 0.0
    %1041 = vmatpush1.msra.mxu0 0.0
    %1042 = vmatprep.subr.mxu0 0.0
    %1043 = vmatpush1.msra.mxu0 0.0
    %1044 = vmatprep.subr.mxu0 0.0
    %1045 = vmatpush1.msra.mxu0 0.0
    %1046 = vmatprep.subr.mxu0 0.0
    %1047 = vmatpush1.msra.mxu0 0.0
    %1048 = vmatprep.subr.mxu0 0.0
    %1049 = vmatpush1.msra.mxu0 0.0
    %1050 = vmatprep.subr.mxu0 0.0
    %1051 = vmatpush1.msra.mxu0 0.0
    %1052 = vmatprep.subr.mxu0 0.0
    %1053 = vmatpush1.msra.mxu0 0.0
    %1054 = vmatprep.subr.mxu0 0.0
    %1055 = vmatpush1.msra.mxu0 0.0
    %1056 = vmatprep.subr.mxu0 0.0
    %1057 = vmatpush1.msra.mxu0 0.0
    %1058 = vmatprep.subr.mxu0 0.0
    %1059 = vmatpush1.msra.mxu0 0.0
    %1060 = vmatprep.subr.mxu0 0.0
    %1061 = vmatpush1.msra.mxu0 0.0
    %1062 = vmatprep.subr.mxu0 0.0
    %1063 = vmatpush1.msra.mxu0 0.0
    %1064 = vmatprep.subr.mxu0 0.0
    %1065 = vmatpush1.msra.mxu0 0.0
    %1066 = vmatprep.subr.mxu0 0.0
    %1067 = vmatpush1.msra.mxu0 0.0
    %1068 = vmatprep.subr.mxu0 0.0
    %1069 = vmatpush1.msra.mxu0 0.0
    %1070 = vmatprep.subr.mxu0 0.0
    %1071 = vmatpush1.msra.mxu0 0.0
    %1072 = vmatprep.subr.mxu0 0.0
    %1073 = vmatpush1.msra.mxu0 0.0
    %1074 = vmatprep.subr.mxu0 0.0
    %1075 = vmatpush1.msra.mxu0 0.0
    %1076 = vmatprep.subr.mxu0 0.0
    %1077 = vmatpush1.msra.mxu0 0.0
    %1078 = vmatprep.subr.mxu0 0.0
    %1079 = vmatpush1.msra.mxu0 0.0
    %1080 = vmatprep.subr.mxu0 0.0
    %1081 = vmatpush1.msra.mxu0 0.0
    %1082 = vmatprep.subr.mxu0 0.0
    %1083 = vmatpush1.msra.mxu0 0.0
    %1084 = vmatprep.subr.mxu0 0.0
    %1085 = vmatpush1.msra.mxu0 0.0
    %1086 = vmatprep.subr.mxu0 0.0
    %1087 = vmatpush1.msra.mxu0 0.0
    %1088 = vmatprep.mubr.f32.mxu0 0.0
    %1089 = vmatmul.mubr.f32.gmra.mrb[0].mxu0 %v1022
    %v1090 = vpop.f32.mrb[0].mxu0
    %v1091 = vadd.f32 0.0, %v1090
    %v1092 = vpop.f32.mrb[0].mxu0
    %1093 = vdwg.mxu0
    %v1095 = vsel %vm984, %v1020, 0
    %1097 = vmatprep.subr.mxu0 0.0
    %1098 = vmatpush1.msra.mxu0 %v829
    %1099 = vmatprep.subr.mxu0 0.0
    %1100 = vmatpush1.msra.mxu0 0.0
    %1101 = vmatprep.subr.mxu0 0.0
    %1102 = vmatpush1.msra.mxu0 0.0
    %1103 = vmatprep.subr.mxu0 0.0
    %1104 = vmatpush1.msra.mxu0 0.0
    %1105 = vmatprep.subr.mxu0 0.0
    %1106 = vmatpush1.msra.mxu0 0.0
    %1107 = vmatprep.subr.mxu0 0.0
    %1108 = vmatpush1.msra.mxu0 0.0
    %1109 = vmatprep.subr.mxu0 0.0
    %1110 = vmatpush1.msra.mxu0 0.0
    %1111 = vmatprep.subr.mxu0 0.0
    %1112 = vmatpush1.msra.mxu0 0.0
    %1113 = vmatprep.subr.mxu0 0.0
    %1114 = vmatpush1.msra.mxu0 0.0
    %1115 = vmatprep.subr.mxu0 0.0
    %1116 = vmatpush1.msra.mxu0 0.0
    %1117 = vmatprep.subr.mxu0 0.0
    %1118 = vmatpush1.msra.mxu0 0.0
    %1119 = vmatprep.subr.mxu0 0.0
    %1120 = vmatpush1.msra.mxu0 0.0
    %1121 = vmatprep.subr.mxu0 0.0
    %1122 = vmatpush1.msra.mxu0 0.0
    %1123 = vmatprep.subr.mxu0 0.0
    %1124 = vmatpush1.msra.mxu0 0.0
    %1125 = vmatprep.subr.mxu0 0.0
    %1126 = vmatpush1.msra.mxu0 0.0
    %1127 = vmatprep.subr.mxu0 0.0
    %1128 = vmatpush1.msra.mxu0 0.0
    %1129 = vmatprep.subr.mxu0 0.0
    %1130 = vmatpush1.msra.mxu0 0.0
    %1131 = vmatprep.subr.mxu0 0.0
    %1132 = vmatpush1.msra.mxu0 0.0
    %1133 = vmatprep.subr.mxu0 0.0
    %1134 = vmatpush1.msra.mxu0 0.0
    %1135 = vmatprep.subr.mxu0 0.0
    %1136 = vmatpush1.msra.mxu0 0.0
    %1137 = vmatprep.subr.mxu0 0.0
    %1138 = vmatpush1.msra.mxu0 0.0
    %1139 = vmatprep.subr.mxu0 0.0
    %1140 = vmatpush1.msra.mxu0 0.0
    %1141 = vmatprep.subr.mxu0 0.0
    %1142 = vmatpush1.msra.mxu0 0.0
    %1143 = vmatprep.subr.mxu0 0.0
    %1144 = vmatpush1.msra.mxu0 0.0
    %1145 = vmatprep.subr.mxu0 0.0
    %1146 = vmatpush1.msra.mxu0 0.0
    %1147 = vmatprep.subr.mxu0 0.0
    %1148 = vmatpush1.msra.mxu0 0.0
    %1149 = vmatprep.subr.mxu0 0.0
    %1150 = vmatpush1.msra.mxu0 0.0
    %1151 = vmatprep.subr.mxu0 0.0
    %1152 = vmatpush1.msra.mxu0 0.0
    %1153 = vmatprep.subr.mxu0 0.0
    %1154 = vmatpush1.msra.mxu0 0.0
    %1155 = vmatprep.subr.mxu0 0.0
    %1156 = vmatpush1.msra.mxu0 0.0
    %1157 = vmatprep.subr.mxu0 0.0
    %1158 = vmatpush1.msra.mxu0 0.0
    %1159 = vmatprep.subr.mxu0 0.0
    %1160 = vmatpush1.msra.mxu0 0.0
    %1161 = vmatprep.mubr.f32.mxu0 0.0
    %1162 = vmatmul.mubr.f32.gmra.mrb[0].mxu0 %v1095
    %v1163 = vpop.f32.mrb[0].mxu0
    %v1164 = vadd.f32 0.0, %v1163
    %v1165 = vpop.f32.mrb[0].mxu0
    %1166 = vdwg.mxu0
    %1167 = vrot.lane.b32.xlu0 %v652, 96
    %v1168 = vpop.permute.xlu0 %1167
    %1169 = vrot.lane.b32.xlu0 %v738, 96
    %v1170 = vpop.permute.xlu0 %1169
    %v1171 = vsel %vm524, %v1168, 0
    %v1173 = vsel %vm524, %v1170, 0
    %1175 = vmatprep.subr.mxu0 0.0
    %1176 = vmatpush1.xpose.msra.mxu0 %v1173
    %1177 = vmatprep.subr.mxu0 0.0
    %1178 = vmatpush1.xpose.msra.mxu0 0.0
    %1179 = vmatprep.subr.mxu0 0.0
    %1180 = vmatpush1.xpose.msra.mxu0 0.0
    %1181 = vmatprep.subr.mxu0 0.0
    %1182 = vmatpush1.xpose.msra.mxu0 0.0
    %1183 = vmatprep.subr.mxu0 0.0
    %1184 = vmatpush1.xpose.msra.mxu0 0.0
    %1185 = vmatprep.subr.mxu0 0.0
    %1186 = vmatpush1.xpose.msra.mxu0 0.0
    %1187 = vmatprep.subr.mxu0 0.0
    %1188 = vmatpush1.xpose.msra.mxu0 0.0
    %1189 = vmatprep.subr.mxu0 0.0
    %1190 = vmatpush1.xpose.msra.mxu0 0.0
    %1191 = vmatprep.subr.mxu0 0.0
    %1192 = vmatpush1.xpose.msra.mxu0 0.0
    %1193 = vmatprep.subr.mxu0 0.0
    %1194 = vmatpush1.xpose.msra.mxu0 0.0
    %1195 = vmatprep.subr.mxu0 0.0
    %1196 = vmatpush1.xpose.msra.mxu0 0.0
    %1197 = vmatprep.subr.mxu0 0.0
    %1198 = vmatpush1.xpose.msra.mxu0 0.0
    %1199 = vmatprep.subr.mxu0 0.0
    %1200 = vmatpush1.xpose.msra.mxu0 0.0
    %1201 = vmatprep.subr.mxu0 0.0
    %1202 = vmatpush1.xpose.msra.mxu0 0.0
    %1203 = vmatprep.subr.mxu0 0.0
    %1204 = vmatpush1.xpose.msra.mxu0 0.0
    %1205 = vmatprep.subr.mxu0 0.0
    %1206 = vmatpush1.xpose.msra.mxu0 0.0
    %1207 = vmatprep.subr.mxu0 0.0
    %1208 = vmatpush1.xpose.msra.mxu0 0.0
    %1209 = vmatprep.subr.mxu0 0.0
    %1210 = vmatpush1.xpose.msra.mxu0 0.0
    %1211 = vmatprep.subr.mxu0 0.0
    %1212 = vmatpush1.xpose.msra.mxu0 0.0
    %1213 = vmatprep.subr.mxu0 0.0
    %1214 = vmatpush1.xpose.msra.mxu0 0.0
    %1215 = vmatprep.subr.mxu0 0.0
    %1216 = vmatpush1.xpose.msra.mxu0 0.0
    %1217 = vmatprep.subr.mxu0 0.0
    %1218 = vmatpush1.xpose.msra.mxu0 0.0
    %1219 = vmatprep.subr.mxu0 0.0
    %1220 = vmatpush1.xpose.msra.mxu0 0.0
    %1221 = vmatprep.subr.mxu0 0.0
    %1222 = vmatpush1.xpose.msra.mxu0 0.0
    %1223 = vmatprep.subr.mxu0 0.0
    %1224 = vmatpush1.xpose.msra.mxu0 0.0
    %1225 = vmatprep.subr.mxu0 0.0
    %1226 = vmatpush1.xpose.msra.mxu0 0.0
    %1227 = vmatprep.subr.mxu0 0.0
    %1228 = vmatpush1.xpose.msra.mxu0 0.0
    %1229 = vmatprep.subr.mxu0 0.0
    %1230 = vmatpush1.xpose.msra.mxu0 0.0
    %1231 = vmatprep.subr.mxu0 0.0
    %1232 = vmatpush1.xpose.msra.mxu0 0.0
    %1233 = vmatprep.subr.mxu0 0.0
    %1234 = vmatpush1.xpose.msra.mxu0 0.0
    %1235 = vmatprep.subr.mxu0 0.0
    %1236 = vmatpush1.xpose.msra.mxu0 0.0
    %1237 = vmatprep.subr.mxu0 0.0
    %1238 = vmatpush1.xpose.msra.mxu0 0.0
    %1239 = vmatprep.mubr.f32.mxu0 0.0
    %1240 = vmatmul.mubr.f32.gmra.mrb[0].mxu0 %v1171
    %v1241 = vpop.f32.mrb[0].mxu0
    %v1242 = vadd.f32 %v520, %v1241
    %v1243 = vpop.f32.mrb[0].mxu0
    %1244 = vdwg.mxu0
    %1245 = vrot.lane.b32.xlu0 %v657, 96
    %v1246 = vpop.permute.xlu0 %1245
    %1247 = vrot.lane.b32.xlu0 %v743, 96
    %v1248 = vpop.permute.xlu0 %1247
    %v1249 = vsel %vm524, %v1246, 0
    %v1251 = vsel %vm524, %v1248, 0
    %1253 = vmatprep.subr.mxu0 0.0
    %1254 = vmatpush1.xpose.msra.mxu0 %v1251
    %1255 = vmatprep.subr.mxu0 0.0
    %1256 = vmatpush1.xpose.msra.mxu0 0.0
    %1257 = vmatprep.subr.mxu0 0.0
    %1258 = vmatpush1.xpose.msra.mxu0 0.0
    %1259 = vmatprep.subr.mxu0 0.0
    %1260 = vmatpush1.xpose.msra.mxu0 0.0
    %1261 = vmatprep.subr.mxu0 0.0
    %1262 = vmatpush1.xpose.msra.mxu0 0.0
    %1263 = vmatprep.subr.mxu0 0.0
    %1264 = vmatpush1.xpose.msra.mxu0 0.0
    %1265 = vmatprep.subr.mxu0 0.0
    %1266 = vmatpush1.xpose.msra.mxu0 0.0
    %1267 = vmatprep.subr.mxu0 0.0
    %1268 = vmatpush1.xpose.msra.mxu0 0.0
    %1269 = vmatprep.subr.mxu0 0.0
    %1270 = vmatpush1.xpose.msra.mxu0 0.0
    %1271 = vmatprep.subr.mxu0 0.0
    %1272 = vmatpush1.xpose.msra.mxu0 0.0
    %1273 = vmatprep.subr.mxu0 0.0
    %1274 = vmatpush1.xpose.msra.mxu0 0.0
    %1275 = vmatprep.subr.mxu0 0.0
    %1276 = vmatpush1.xpose.msra.mxu0 0.0
    %1277 = vmatprep.subr.mxu0 0.0
    %1278 = vmatpush1.xpose.msra.mxu0 0.0
    %1279 = vmatprep.subr.mxu0 0.0
    %1280 = vmatpush1.xpose.msra.mxu0 0.0
    %1281 = vmatprep.subr.mxu0 0.0
    %1282 = vmatpush1.xpose.msra.mxu0 0.0
    %1283 = vmatprep.subr.mxu0 0.0
    %1284 = vmatpush1.xpose.msra.mxu0 0.0
    %1285 = vmatprep.subr.mxu0 0.0
    %1286 = vmatpush1.xpose.msra.mxu0 0.0
    %1287 = vmatprep.subr.mxu0 0.0
    %1288 = vmatpush1.xpose.msra.mxu0 0.0
    %1289 = vmatprep.subr.mxu0 0.0
    %1290 = vmatpush1.xpose.msra.mxu0 0.0
    %1291 = vmatprep.subr.mxu0 0.0
    %1292 = vmatpush1.xpose.msra.mxu0 0.0
    %1293 = vmatprep.subr.mxu0 0.0
    %1294 = vmatpush1.xpose.msra.mxu0 0.0
    %1295 = vmatprep.subr.mxu0 0.0
    %1296 = vmatpush1.xpose.msra.mxu0 0.0
    %1297 = vmatprep.subr.mxu0 0.0
    %1298 = vmatpush1.xpose.msra.mxu0 0.0
    %1299 = vmatprep.subr.mxu0 0.0
    %1300 = vmatpush1.xpose.msra.mxu0 0.0
    %1301 = vmatprep.subr.mxu0 0.0
    %1302 = vmatpush1.xpose.msra.mxu0 0.0
    %1303 = vmatprep.subr.mxu0 0.0
    %1304 = vmatpush1.xpose.msra.mxu0 0.0
    %1305 = vmatprep.subr.mxu0 0.0
    %1306 = vmatpush1.xpose.msra.mxu0 0.0
    %1307 = vmatprep.subr.mxu0 0.0
    %1308 = vmatpush1.xpose.msra.mxu0 0.0
    %1309 = vmatprep.subr.mxu0 0.0
    %1310 = vmatpush1.xpose.msra.mxu0 0.0
    %1311 = vmatprep.subr.mxu0 0.0
    %1312 = vmatpush1.xpose.msra.mxu0 0.0
    %1313 = vmatprep.subr.mxu0 0.0
    %1314 = vmatpush1.xpose.msra.mxu0 0.0
    %1315 = vmatprep.subr.mxu0 0.0
    %1316 = vmatpush1.xpose.msra.mxu0 0.0
    %1317 = vmatprep.mubr.f32.mxu0 0.0
    %1318 = vmatmul.mubr.f32.gmra.mrb[0].mxu0 %v1249
    %v1319 = vpop.f32.mrb[0].mxu0
    %v1320 = vadd.f32 %v521, %v1319
    %v1321 = vpop.f32.mrb[0].mxu0
    %1322 = vdwg.mxu0
    %v1323 = vsel %vm984, %v1242, -inf
    %1324 = vmax.xlane.f32.xlu0 %v1323
    %v1325 = vpop.xlane.xlu0 %1324
    %v1326 = vsel %vm984, %v1320, -inf
    %1327 = vmax.xlane.f32.xlu0 %v1326
    %v1328 = vpop.xlane.xlu0 %1327
    %v1329 = vsub.f32 %v1242, %v1325
    %v1330 = vsub.f32 %v1320, %v1328
    %v1331 = vmul.f32 %v1329, 1.442695
    %v1332 = vpow.pop %v1331
    %v1333 = vmul.f32 %v1330, 1.442695
    %v1334 = vpow.pop %v1333
    %v1335 = vmul.f32 %v1332, %v1002
    %v1336 = vmul.f32 %v1334, %v1006
    %v1337 = vsel %vm984, %v1335, 0.0
    %1338 = vadd.xlane.f32.xlu0 %v1337
    %v1339 = vpop.xlane.xlu0 %1338
    %v1340 = vsel %vm984, %v1336, 0.0
    %1341 = vadd.xlane.f32.xlu0 %v1340
    %v1342 = vpop.xlane.xlu0 %1341
    %v1343 = vrcp.pop %v1339
    %v1344 = vrcp.pop %v1342
    %v1345 = vmul.f32 %v1335, %v1343
    %v1346 = vmul.f32 %v1336, %v1344
    %1348 = vrot.lane.b32.xlu0 %v824, 96
    %v1349 = vpop.permute.xlu0 %1348
    %v1352 = vsel %vm984, %v1345, 0
    %1354 = vmatprep.subr.mxu0 0.0
    %1355 = vmatpush1.msra.mxu0 %v1349
    %1356 = vmatprep.subr.mxu0 0.0
    %1357 = vmatpush1.msra.mxu0 0.0
    %1358 = vmatprep.subr.mxu0 0.0
    %1359 = vmatpush1.msra.mxu0 0.0
    %1360 = vmatprep.subr.mxu0 0.0
    %1361 = vmatpush1.msra.mxu0 0.0
    %1362 = vmatprep.subr.mxu0 0.0
    %1363 = vmatpush1.msra.mxu0 0.0
    %1364 = vmatprep.subr.mxu0 0.0
    %1365 = vmatpush1.msra.mxu0 0.0
    %1366 = vmatprep.subr.mxu0 0.0
    %1367 = vmatpush1.msra.mxu0 0.0
    %1368 = vmatprep.subr.mxu0 0.0
    %1369 = vmatpush1.msra.mxu0 0.0
    %1370 = vmatprep.subr.mxu0 0.0
    %1371 = vmatpush1.msra.mxu0 0.0
    %1372 = vmatprep.subr.mxu0 0.0
    %1373 = vmatpush1.msra.mxu0 0.0
    %1374 = vmatprep.subr.mxu0 0.0
    %1375 = vmatpush1.msra.mxu0 0.0
    %1376 = vmatprep.subr.mxu0 0.0
    %1377 = vmatpush1.msra.mxu0 0.0
    %1378 = vmatprep.subr.mxu0 0.0
    %1379 = vmatpush1.msra.mxu0 0.0
    %1380 = vmatprep.subr.mxu0 0.0
    %1381 = vmatpush1.msra.mxu0 0.0
    %1382 = vmatprep.subr.mxu0 0.0
    %1383 = vmatpush1.msra.mxu0 0.0
    %1384 = vmatprep.subr.mxu0 0.0
    %1385 = vmatpush1.msra.mxu0 0.0
    %1386 = vmatprep.subr.mxu0 0.0
    %1387 = vmatpush1.msra.mxu0 0.0
    %1388 = vmatprep.subr.mxu0 0.0
    %1389 = vmatpush1.msra.mxu0 0.0
    %1390 = vmatprep.subr.mxu0 0.0
    %1391 = vmatpush1.msra.mxu0 0.0
    %1392 = vmatprep.subr.mxu0 0.0
    %1393 = vmatpush1.msra.mxu0 0.0
    %1394 = vmatprep.subr.mxu0 0.0
    %1395 = vmatpush1.msra.mxu0 0.0
    %1396 = vmatprep.subr.mxu0 0.0
    %1397 = vmatpush1.msra.mxu0 0.0
    %1398 = vmatprep.subr.mxu0 0.0
    %1399 = vmatpush1.msra.mxu0 0.0
    %1400 = vmatprep.subr.mxu0 0.0
    %1401 = vmatpush1.msra.mxu0 0.0
    %1402 = vmatprep.subr.mxu0 0.0
    %1403 = vmatpush1.msra.mxu0 0.0
    %1404 = vmatprep.subr.mxu0 0.0
    %1405 = vmatpush1.msra.mxu0 0.0
    %1406 = vmatprep.subr.mxu0 0.0
    %1407 = vmatpush1.msra.mxu0 0.0
    %1408 = vmatprep.subr.mxu0 0.0
    %1409 = vmatpush1.msra.mxu0 0.0
    %1410 = vmatprep.subr.mxu0 0.0
    %1411 = vmatpush1.msra.mxu0 0.0
    %1412 = vmatprep.subr.mxu0 0.0
    %1413 = vmatpush1.msra.mxu0 0.0
    %1414 = vmatprep.subr.mxu0 0.0
    %1415 = vmatpush1.msra.mxu0 0.0
    %1416 = vmatprep.subr.mxu0 0.0
    %1417 = vmatpush1.msra.mxu0 0.0
    %1418 = vmatprep.mubr.f32.mxu0 0.0
    %1419 = vmatmul.mubr.f32.gmra.mrb[0].mxu0 %v1352
    %v1420 = vpop.f32.mrb[0].mxu0
    %v1421 = vadd.f32 0.0, %v1420
    %v1422 = vpop.f32.mrb[0].mxu0
    %1423 = vdwg.mxu0
    %1425 = vrot.lane.b32.xlu0 %v829, 96
    %v1426 = vpop.permute.xlu0 %1425
    %v1429 = vsel %vm984, %v1346, 0
    %1431 = vmatprep.subr.mxu0 0.0
    %1432 = vmatpush1.msra.mxu0 %v1426
    %1433 = vmatprep.subr.mxu0 0.0
    %1434 = vmatpush1.msra.mxu0 0.0
    %1435 = vmatprep.subr.mxu0 0.0
    %1436 = vmatpush1.msra.mxu0 0.0
    %1437 = vmatprep.subr.mxu0 0.0
    %1438 = vmatpush1.msra.mxu0 0.0
    %1439 = vmatprep.subr.mxu0 0.0
    %1440 = vmatpush1.msra.mxu0 0.0
    %1441 = vmatprep.subr.mxu0 0.0
    %1442 = vmatpush1.msra.mxu0 0.0
    %1443 = vmatprep.subr.mxu0 0.0
    %1444 = vmatpush1.msra.mxu0 0.0
    %1445 = vmatprep.subr.mxu0 0.0
    %1446 = vmatpush1.msra.mxu0 0.0
    %1447 = vmatprep.subr.mxu0 0.0
    %1448 = vmatpush1.msra.mxu0 0.0
    %1449 = vmatprep.subr.mxu0 0.0
    %1450 = vmatpush1.msra.mxu0 0.0
    %1451 = vmatprep.subr.mxu0 0.0
    %1452 = vmatpush1.msra.mxu0 0.0
    %1453 = vmatprep.subr.mxu0 0.0
    %1454 = vmatpush1.msra.mxu0 0.0
    %1455 = vmatprep.subr.mxu0 0.0
    %1456 = vmatpush1.msra.mxu0 0.0
    %1457 = vmatprep.subr.mxu0 0.0
    %1458 = vmatpush1.msra.mxu0 0.0
    %1459 = vmatprep.subr.mxu0 0.0
    %1460 = vmatpush1.msra.mxu0 0.0
    %1461 = vmatprep.subr.mxu0 0.0
    %1462 = vmatpush1.msra.mxu0 0.0
    %1463 = vmatprep.subr.mxu0 0.0
    %1464 = vmatpush1.msra.mxu0 0.0
    %1465 = vmatprep.subr.mxu0 0.0
    %1466 = vmatpush1.msra.mxu0 0.0
    %1467 = vmatprep.subr.mxu0 0.0
    %1468 = vmatpush1.msra.mxu0 0.0
    %1469 = vmatprep.subr.mxu0 0.0
    %1470 = vmatpush1.msra.mxu0 0.0
    %1471 = vmatprep.subr.mxu0 0.0
    %1472 = vmatpush1.msra.mxu0 0.0
    %1473 = vmatprep.subr.mxu0 0.0
    %1474 = vmatpush1.msra.mxu0 0.0
    %1475 = vmatprep.subr.mxu0 0.0
    %1476 = vmatpush1.msra.mxu0 0.0
    %1477 = vmatprep.subr.mxu0 0.0
    %1478 = vmatpush1.msra.mxu0 0.0
    %1479 = vmatprep.subr.mxu0 0.0
    %1480 = vmatpush1.msra.mxu0 0.0
    %1481 = vmatprep.subr.mxu0 0.0
    %1482 = vmatpush1.msra.mxu0 0.0
    %1483 = vmatprep.subr.mxu0 0.0
    %1484 = vmatpush1.msra.mxu0 0.0
    %1485 = vmatprep.subr.mxu0 0.0
    %1486 = vmatpush1.msra.mxu0 0.0
    %1487 = vmatprep.subr.mxu0 0.0
    %1488 = vmatpush1.msra.mxu0 0.0
    %1489 = vmatprep.subr.mxu0 0.0
    %1490 = vmatpush1.msra.mxu0 0.0
    %1491 = vmatprep.subr.mxu0 0.0
    %1492 = vmatpush1.msra.mxu0 0.0
    %1493 = vmatprep.subr.mxu0 0.0
    %1494 = vmatpush1.msra.mxu0 0.0
    %1495 = vmatprep.mubr.f32.mxu0 0.0
    %1496 = vmatmul.mubr.f32.gmra.mrb[0].mxu0 %v1429
    %v1497 = vpop.f32.mrb[0].mxu0
    %v1498 = vadd.f32 0.0, %v1497
    %v1499 = vpop.f32.mrb[0].mxu0
    %1500 = vdwg.mxu0
    %1501 = vrot.lane.b32.xlu0 %v652, 64
    %v1502 = vpop.permute.xlu0 %1501
    %1503 = vrot.lane.b32.xlu0 %v738, 64
    %v1504 = vpop.permute.xlu0 %1503
    %v1505 = vsel %vm524, %v1502, 0
    %v1507 = vsel %vm524, %v1504, 0
    %1509 = vmatprep.subr.mxu0 0.0
    %1510 = vmatpush1.xpose.msra.mxu0 %v1507
    %1511 = vmatprep.subr.mxu0 0.0
    %1512 = vmatpush1.xpose.msra.mxu0 0.0
    %1513 = vmatprep.subr.mxu0 0.0
    %1514 = vmatpush1.xpose.msra.mxu0 0.0
    %1515 = vmatprep.subr.mxu0 0.0
    %1516 = vmatpush1.xpose.msra.mxu0 0.0
    %1517 = vmatprep.subr.mxu0 0.0
    %1518 = vmatpush1.xpose.msra.mxu0 0.0
    %1519 = vmatprep.subr.mxu0 0.0
    %1520 = vmatpush1.xpose.msra.mxu0 0.0
    %1521 = vmatprep.subr.mxu0 0.0
    %1522 = vmatpush1.xpose.msra.mxu0 0.0
    %1523 = vmatprep.subr.mxu0 0.0
    %1524 = vmatpush1.xpose.msra.mxu0 0.0
    %1525 = vmatprep.subr.mxu0 0.0
    %1526 = vmatpush1.xpose.msra.mxu0 0.0
    %1527 = vmatprep.subr.mxu0 0.0
    %1528 = vmatpush1.xpose.msra.mxu0 0.0
    %1529 = vmatprep.subr.mxu0 0.0
    %1530 = vmatpush1.xpose.msra.mxu0 0.0
    %1531 = vmatprep.subr.mxu0 0.0
    %1532 = vmatpush1.xpose.msra.mxu0 0.0
    %1533 = vmatprep.subr.mxu0 0.0
    %1534 = vmatpush1.xpose.msra.mxu0 0.0
    %1535 = vmatprep.subr.mxu0 0.0
    %1536 = vmatpush1.xpose.msra.mxu0 0.0
    %1537 = vmatprep.subr.mxu0 0.0
    %1538 = vmatpush1.xpose.msra.mxu0 0.0
    %1539 = vmatprep.subr.mxu0 0.0
    %1540 = vmatpush1.xpose.msra.mxu0 0.0
    %1541 = vmatprep.subr.mxu0 0.0
    %1542 = vmatpush1.xpose.msra.mxu0 0.0
    %1543 = vmatprep.subr.mxu0 0.0
    %1544 = vmatpush1.xpose.msra.mxu0 0.0
    %1545 = vmatprep.subr.mxu0 0.0
    %1546 = vmatpush1.xpose.msra.mxu0 0.0
    %1547 = vmatprep.subr.mxu0 0.0
    %1548 = vmatpush1.xpose.msra.mxu0 0.0
    %1549 = vmatprep.subr.mxu0 0.0
    %1550 = vmatpush1.xpose.msra.mxu0 0.0
    %1551 = vmatprep.subr.mxu0 0.0
    %1552 = vmatpush1.xpose.msra.mxu0 0.0
    %1553 = vmatprep.subr.mxu0 0.0
    %1554 = vmatpush1.xpose.msra.mxu0 0.0
    %1555 = vmatprep.subr.mxu0 0.0
    %1556 = vmatpush1.xpose.msra.mxu0 0.0
    %1557 = vmatprep.subr.mxu0 0.0
    %1558 = vmatpush1.xpose.msra.mxu0 0.0
    %1559 = vmatprep.subr.mxu0 0.0
    %1560 = vmatpush1.xpose.msra.mxu0 0.0
    %1561 = vmatprep.subr.mxu0 0.0
    %1562 = vmatpush1.xpose.msra.mxu0 0.0
    %1563 = vmatprep.subr.mxu0 0.0
    %1564 = vmatpush1.xpose.msra.mxu0 0.0
    %1565 = vmatprep.subr.mxu0 0.0
    %1566 = vmatpush1.xpose.msra.mxu0 0.0
    %1567 = vmatprep.subr.mxu0 0.0
    %1568 = vmatpush1.xpose.msra.mxu0 0.0
    %1569 = vmatprep.subr.mxu0 0.0
    %1570 = vmatpush1.xpose.msra.mxu0 0.0
    %1571 = vmatprep.subr.mxu0 0.0
    %1572 = vmatpush1.xpose.msra.mxu0 0.0
    %1573 = vmatprep.mubr.f32.mxu0 0.0
    %1574 = vmatmul.mubr.f32.gmra.mrb[0].mxu0 %v1505
    %v1575 = vpop.f32.mrb[0].mxu0
    %v1576 = vadd.f32 %v520, %v1575
    %v1577 = vpop.f32.mrb[0].mxu0
    %1578 = vdwg.mxu0
    %1579 = vrot.lane.b32.xlu0 %v657, 64
    %v1580 = vpop.permute.xlu0 %1579
    %1581 = vrot.lane.b32.xlu0 %v743, 64
    %v1582 = vpop.permute.xlu0 %1581
    %v1583 = vsel %vm524, %v1580, 0
    %v1585 = vsel %vm524, %v1582, 0
    %1587 = vmatprep.subr.mxu0 0.0
    %1588 = vmatpush1.xpose.msra.mxu0 %v1585
    %1589 = vmatprep.subr.mxu0 0.0
    %1590 = vmatpush1.xpose.msra.mxu0 0.0
    %1591 = vmatprep.subr.mxu0 0.0
    %1592 = vmatpush1.xpose.msra.mxu0 0.0
    %1593 = vmatprep.subr.mxu0 0.0
    %1594 = vmatpush1.xpose.msra.mxu0 0.0
    %1595 = vmatprep.subr.mxu0 0.0
    %1596 = vmatpush1.xpose.msra.mxu0 0.0
    %1597 = vmatprep.subr.mxu0 0.0
    %1598 = vmatpush1.xpose.msra.mxu0 0.0
    %1599 = vmatprep.subr.mxu0 0.0
    %1600 = vmatpush1.xpose.msra.mxu0 0.0
    %1601 = vmatprep.subr.mxu0 0.0
    %1602 = vmatpush1.xpose.msra.mxu0 0.0
    %1603 = vmatprep.subr.mxu0 0.0
    %1604 = vmatpush1.xpose.msra.mxu0 0.0
    %1605 = vmatprep.subr.mxu0 0.0
    %1606 = vmatpush1.xpose.msra.mxu0 0.0
    %1607 = vmatprep.subr.mxu0 0.0
    %1608 = vmatpush1.xpose.msra.mxu0 0.0
    %1609 = vmatprep.subr.mxu0 0.0
    %1610 = vmatpush1.xpose.msra.mxu0 0.0
    %1611 = vmatprep.subr.mxu0 0.0
    %1612 = vmatpush1.xpose.msra.mxu0 0.0
    %1613 = vmatprep.subr.mxu0 0.0
    %1614 = vmatpush1.xpose.msra.mxu0 0.0
    %1615 = vmatprep.subr.mxu0 0.0
    %1616 = vmatpush1.xpose.msra.mxu0 0.0
    %1617 = vmatprep.subr.mxu0 0.0
    %1618 = vmatpush1.xpose.msra.mxu0 0.0
    %1619 = vmatprep.subr.mxu0 0.0
    %1620 = vmatpush1.xpose.msra.mxu0 0.0
    %1621 = vmatprep.subr.mxu0 0.0
    %1622 = vmatpush1.xpose.msra.mxu0 0.0
    %1623 = vmatprep.subr.mxu0 0.0
    %1624 = vmatpush1.xpose.msra.mxu0 0.0
    %1625 = vmatprep.subr.mxu0 0.0
    %1626 = vmatpush1.xpose.msra.mxu0 0.0
    %1627 = vmatprep.subr.mxu0 0.0
    %1628 = vmatpush1.xpose.msra.mxu0 0.0
    %1629 = vmatprep.subr.mxu0 0.0
    %1630 = vmatpush1.xpose.msra.mxu0 0.0
    %1631 = vmatprep.subr.mxu0 0.0
    %1632 = vmatpush1.xpose.msra.mxu0 0.0
    %1633 = vmatprep.subr.mxu0 0.0
    %1634 = vmatpush1.xpose.msra.mxu0 0.0
    %1635 = vmatprep.subr.mxu0 0.0
    %1636 = vmatpush1.xpose.msra.mxu0 0.0
    %1637 = vmatprep.subr.mxu0 0.0
    %1638 = vmatpush1.xpose.msra.mxu0 0.0
    %1639 = vmatprep.subr.mxu0 0.0
    %1640 = vmatpush1.xpose.msra.mxu0 0.0
    %1641 = vmatprep.subr.mxu0 0.0
    %1642 = vmatpush1.xpose.msra.mxu0 0.0
    %1643 = vmatprep.subr.mxu0 0.0
    %1644 = vmatpush1.xpose.msra.mxu0 0.0
    %1645 = vmatprep.subr.mxu0 0.0
    %1646 = vmatpush1.xpose.msra.mxu0 0.0
    %1647 = vmatprep.subr.mxu0 0.0
    %1648 = vmatpush1.xpose.msra.mxu0 0.0
    %1649 = vmatprep.subr.mxu0 0.0
    %1650 = vmatpush1.xpose.msra.mxu0 0.0
    %1651 = vmatprep.mubr.f32.mxu0 0.0
    %1652 = vmatmul.mubr.f32.gmra.mrb[0].mxu0 %v1583
    %v1653 = vpop.f32.mrb[0].mxu0
    %v1654 = vadd.f32 %v521, %v1653
    %v1655 = vpop.f32.mrb[0].mxu0
    %1656 = vdwg.mxu0
    %v1657 = vsel %vm984, %v1576, -inf
    %1658 = vmax.xlane.f32.xlu0 %v1657
    %v1659 = vpop.xlane.xlu0 %1658
    %v1660 = vsel %vm984, %v1654, -inf
    %1661 = vmax.xlane.f32.xlu0 %v1660
    %v1662 = vpop.xlane.xlu0 %1661
    %v1663 = vsub.f32 %v1576, %v1659
    %v1664 = vsub.f32 %v1654, %v1662
    %v1665 = vmul.f32 %v1663, 1.442695
    %v1666 = vpow.pop %v1665
    %v1667 = vmul.f32 %v1664, 1.442695
    %v1668 = vpow.pop %v1667
    %v1669 = vmul.f32 %v1666, %v1002
    %v1670 = vmul.f32 %v1668, %v1006
    %v1671 = vsel %vm984, %v1669, 0.0
    %1672 = vadd.xlane.f32.xlu0 %v1671
    %v1673 = vpop.xlane.xlu0 %1672
    %v1674 = vsel %vm984, %v1670, 0.0
    %1675 = vadd.xlane.f32.xlu0 %v1674
    %v1676 = vpop.xlane.xlu0 %1675
    %v1677 = vrcp.pop %v1673
    %v1678 = vrcp.pop %v1676
    %v1679 = vmul.f32 %v1669, %v1677
    %v1680 = vmul.f32 %v1670, %v1678
    %1681 = vrot.lane.b32.xlu0 %v824, 64
    %v1682 = vpop.permute.xlu0 %1681
    %v1685 = vsel %vm984, %v1679, 0
    %1687 = vmatprep.subr.mxu0 0.0
    %1688 = vmatpush1.msra.mxu0 %v1682
    %1689 = vmatprep.subr.mxu0 0.0
    %1690 = vmatpush1.msra.mxu0 0.0
    %1691 = vmatprep.subr.mxu0 0.0
    %1692 = vmatpush1.msra.mxu0 0.0
    %1693 = vmatprep.subr.mxu0 0.0
    %1694 = vmatpush1.msra.mxu0 0.0
    %1695 = vmatprep.subr.mxu0 0.0
    %1696 = vmatpush1.msra.mxu0 0.0
    %1697 = vmatprep.subr.mxu0 0.0
    %1698 = vmatpush1.msra.mxu0 0.0
    %1699 = vmatprep.subr.mxu0 0.0
    %1700 = vmatpush1.msra.mxu0 0.0
    %1701 = vmatprep.subr.mxu0 0.0
    %1702 = vmatpush1.msra.mxu0 0.0
    %1703 = vmatprep.subr.mxu0 0.0
    %1704 = vmatpush1.msra.mxu0 0.0
    %1705 = vmatprep.subr.mxu0 0.0
    %1706 = vmatpush1.msra.mxu0 0.0
    %1707 = vmatprep.subr.mxu0 0.0
    %1708 = vmatpush1.msra.mxu0 0.0
    %1709 = vmatprep.subr.mxu0 0.0
    %1710 = vmatpush1.msra.mxu0 0.0
    %1711 = vmatprep.subr.mxu0 0.0
    %1712 = vmatpush1.msra.mxu0 0.0
    %1713 = vmatprep.subr.mxu0 0.0
    %1714 = vmatpush1.msra.mxu0 0.0
    %1715 = vmatprep.subr.mxu0 0.0
    %1716 = vmatpush1.msra.mxu0 0.0
    %1717 = vmatprep.subr.mxu0 0.0
    %1718 = vmatpush1.msra.mxu0 0.0
    %1719 = vmatprep.subr.mxu0 0.0
    %1720 = vmatpush1.msra.mxu0 0.0
    %1721 = vmatprep.subr.mxu0 0.0
    %1722 = vmatpush1.msra.mxu0 0.0
    %1723 = vmatprep.subr.mxu0 0.0
    %1724 = vmatpush1.msra.mxu0 0.0
    %1725 = vmatprep.subr.mxu0 0.0
    %1726 = vmatpush1.msra.mxu0 0.0
    %1727 = vmatprep.subr.mxu0 0.0
    %1728 = vmatpush1.msra.mxu0 0.0
    %1729 = vmatprep.subr.mxu0 0.0
    %1730 = vmatpush1.msra.mxu0 0.0
    %1731 = vmatprep.subr.mxu0 0.0
    %1732 = vmatpush1.msra.mxu0 0.0
    %1733 = vmatprep.subr.mxu0 0.0
    %1734 = vmatpush1.msra.mxu0 0.0
    %1735 = vmatprep.subr.mxu0 0.0
    %1736 = vmatpush1.msra.mxu0 0.0
    %1737 = vmatprep.subr.mxu0 0.0
    %1738 = vmatpush1.msra.mxu0 0.0
    %1739 = vmatprep.subr.mxu0 0.0
    %1740 = vmatpush1.msra.mxu0 0.0
    %1741 = vmatprep.subr.mxu0 0.0
    %1742 = vmatpush1.msra.mxu0 0.0
    %1743 = vmatprep.subr.mxu0 0.0
    %1744 = vmatpush1.msra.mxu0 0.0
    %1745 = vmatprep.subr.mxu0 0.0
    %1746 = vmatpush1.msra.mxu0 0.0
    %1747 = vmatprep.subr.mxu0 0.0
    %1748 = vmatpush1.msra.mxu0 0.0
    %1749 = vmatprep.subr.mxu0 0.0
    %1750 = vmatpush1.msra.mxu0 0.0
    %1751 = vmatprep.mubr.f32.mxu0 0.0
    %1752 = vmatmul.mubr.f32.gmra.mrb[0].mxu0 %v1685
    %v1753 = vpop.f32.mrb[0].mxu0
    %v1754 = vadd.f32 0.0, %v1753
    %v1755 = vpop.f32.mrb[0].mxu0
    %1756 = vdwg.mxu0
    %1757 = vrot.lane.b32.xlu0 %v829, 64
    %v1758 = vpop.permute.xlu0 %1757
    %v1761 = vsel %vm984, %v1680, 0
    %1763 = vmatprep.subr.mxu0 0.0
    %1764 = vmatpush1.msra.mxu0 %v1758
    %1765 = vmatprep.subr.mxu0 0.0
    %1766 = vmatpush1.msra.mxu0 0.0
    %1767 = vmatprep.subr.mxu0 0.0
    %1768 = vmatpush1.msra.mxu0 0.0
    %1769 = vmatprep.subr.mxu0 0.0
    %1770 = vmatpush1.msra.mxu0 0.0
    %1771 = vmatprep.subr.mxu0 0.0
    %1772 = vmatpush1.msra.mxu0 0.0
    %1773 = vmatprep.subr.mxu0 0.0
    %1774 = vmatpush1.msra.mxu0 0.0
    %1775 = vmatprep.subr.mxu0 0.0
    %1776 = vmatpush1.msra.mxu0 0.0
    %1777 = vmatprep.subr.mxu0 0.0
    %1778 = vmatpush1.msra.mxu0 0.0
    %1779 = vmatprep.subr.mxu0 0.0
    %1780 = vmatpush1.msra.mxu0 0.0
    %1781 = vmatprep.subr.mxu0 0.0
    %1782 = vmatpush1.msra.mxu0 0.0
    %1783 = vmatprep.subr.mxu0 0.0
    %1784 = vmatpush1.msra.mxu0 0.0
    %1785 = vmatprep.subr.mxu0 0.0
    %1786 = vmatpush1.msra.mxu0 0.0
    %1787 = vmatprep.subr.mxu0 0.0
    %1788 = vmatpush1.msra.mxu0 0.0
    %1789 = vmatprep.subr.mxu0 0.0
    %1790 = vmatpush1.msra.mxu0 0.0
    %1791 = vmatprep.subr.mxu0 0.0
    %1792 = vmatpush1.msra.mxu0 0.0
    %1793 = vmatprep.subr.mxu0 0.0
    %1794 = vmatpush1.msra.mxu0 0.0
    %1795 = vmatprep.subr.mxu0 0.0
    %1796 = vmatpush1.msra.mxu0 0.0
    %1797 = vmatprep.subr.mxu0 0.0
    %1798 = vmatpush1.msra.mxu0 0.0
    %1799 = vmatprep.subr.mxu0 0.0
    %1800 = vmatpush1.msra.mxu0 0.0
    %1801 = vmatprep.subr.mxu0 0.0
    %1802 = vmatpush1.msra.mxu0 0.0
    %1803 = vmatprep.subr.mxu0 0.0
    %1804 = vmatpush1.msra.mxu0 0.0
    %1805 = vmatprep.subr.mxu0 0.0
    %1806 = vmatpush1.msra.mxu0 0.0
    %1807 = vmatprep.subr.mxu0 0.0
    %1808 = vmatpush1.msra.mxu0 0.0
    %1809 = vmatprep.subr.mxu0 0.0
    %1810 = vmatpush1.msra.mxu0 0.0
    %1811 = vmatprep.subr.mxu0 0.0
    %1812 = vmatpush1.msra.mxu0 0.0
    %1813 = vmatprep.subr.mxu0 0.0
    %1814 = vmatpush1.msra.mxu0 0.0
    %1815 = vmatprep.subr.mxu0 0.0
    %1816 = vmatpush1.msra.mxu0 0.0
    %1817 = vmatprep.subr.mxu0 0.0
    %1818 = vmatpush1.msra.mxu0 0.0
    %1819 = vmatprep.subr.mxu0 0.0
    %1820 = vmatpush1.msra.mxu0 0.0
    %1821 = vmatprep.subr.mxu0 0.0
    %1822 = vmatpush1.msra.mxu0 0.0
    %1823 = vmatprep.subr.mxu0 0.0
    %1824 = vmatpush1.msra.mxu0 0.0
    %1825 = vmatprep.subr.mxu0 0.0
    %1826 = vmatpush1.msra.mxu0 0.0
    %1827 = vmatprep.mubr.f32.mxu0 0.0
    %1828 = vmatmul.mubr.f32.gmra.mrb[0].mxu0 %v1761
    %v1829 = vpop.f32.mrb[0].mxu0
    %v1830 = vadd.f32 0.0, %v1829
    %v1831 = vpop.f32.mrb[0].mxu0
    %1832 = vdwg.mxu0
    %1833 = vrot.lane.b32.xlu0 %v652, 32
    %v1834 = vpop.permute.xlu0 %1833
    %1835 = vrot.lane.b32.xlu0 %v738, 32
    %v1836 = vpop.permute.xlu0 %1835
    %v1837 = vsel %vm524, %v1834, 0
    %v1839 = vsel %vm524, %v1836, 0
    %1841 = vmatprep.subr.mxu0 0.0
    %1842 = vmatpush1.xpose.msra.mxu0 %v1839
    %1843 = vmatprep.subr.mxu0 0.0
    %1844 = vmatpush1.xpose.msra.mxu0 0.0
    %1845 = vmatprep.subr.mxu0 0.0
    %1846 = vmatpush1.xpose.msra.mxu0 0.0
    %1847 = vmatprep.subr.mxu0 0.0
    %1848 = vmatpush1.xpose.msra.mxu0 0.0
    %1849 = vmatprep.subr.mxu0 0.0
    %1850 = vmatpush1.xpose.msra.mxu0 0.0
    %1851 = vmatprep.subr.mxu0 0.0
    %1852 = vmatpush1.xpose.msra.mxu0 0.0
    %1853 = vmatprep.subr.mxu0 0.0
    %1854 = vmatpush1.xpose.msra.mxu0 0.0
    %1855 = vmatprep.subr.mxu0 0.0
    %1856 = vmatpush1.xpose.msra.mxu0 0.0
    %1857 = vmatprep.subr.mxu0 0.0
    %1858 = vmatpush1.xpose.msra.mxu0 0.0
    %1859 = vmatprep.subr.mxu0 0.0
    %1860 = vmatpush1.xpose.msra.mxu0 0.0
    %1861 = vmatprep.subr.mxu0 0.0
    %1862 = vmatpush1.xpose.msra.mxu0 0.0
    %1863 = vmatprep.subr.mxu0 0.0
    %1864 = vmatpush1.xpose.msra.mxu0 0.0
    %1865 = vmatprep.subr.mxu0 0.0
    %1866 = vmatpush1.xpose.msra.mxu0 0.0
    %1867 = vmatprep.subr.mxu0 0.0
    %1868 = vmatpush1.xpose.msra.mxu0 0.0
    %1869 = vmatprep.subr.mxu0 0.0
    %1870 = vmatpush1.xpose.msra.mxu0 0.0
    %1871 = vmatprep.subr.mxu0 0.0
    %1872 = vmatpush1.xpose.msra.mxu0 0.0
    %1873 = vmatprep.subr.mxu0 0.0
    %1874 = vmatpush1.xpose.msra.mxu0 0.0
    %1875 = vmatprep.subr.mxu0 0.0
    %1876 = vmatpush1.xpose.msra.mxu0 0.0
    %1877 = vmatprep.subr.mxu0 0.0
    %1878 = vmatpush1.xpose.msra.mxu0 0.0
    %1879 = vmatprep.subr.mxu0 0.0
    %1880 = vmatpush1.xpose.msra.mxu0 0.0
    %1881 = vmatprep.subr.mxu0 0.0
    %1882 = vmatpush1.xpose.msra.mxu0 0.0
    %1883 = vmatprep.subr.mxu0 0.0
    %1884 = vmatpush1.xpose.msra.mxu0 0.0
    %1885 = vmatprep.subr.mxu0 0.0
    %1886 = vmatpush1.xpose.msra.mxu0 0.0
    %1887 = vmatprep.subr.mxu0 0.0
    %1888 = vmatpush1.xpose.msra.mxu0 0.0
    %1889 = vmatprep.subr.mxu0 0.0
    %1890 = vmatpush1.xpose.msra.mxu0 0.0
    %1891 = vmatprep.subr.mxu0 0.0
    %1892 = vmatpush1.xpose.msra.mxu0 0.0
    %1893 = vmatprep.subr.mxu0 0.0
    %1894 = vmatpush1.xpose.msra.mxu0 0.0
    %1895 = vmatprep.subr.mxu0 0.0
    %1896 = vmatpush1.xpose.msra.mxu0 0.0
    %1897 = vmatprep.subr.mxu0 0.0
    %1898 = vmatpush1.xpose.msra.mxu0 0.0
    %1899 = vmatprep.subr.mxu0 0.0
    %1900 = vmatpush1.xpose.msra.mxu0 0.0
    %1901 = vmatprep.subr.mxu0 0.0
    %1902 = vmatpush1.xpose.msra.mxu0 0.0
    %1903 = vmatprep.subr.mxu0 0.0
    %1904 = vmatpush1.xpose.msra.mxu0 0.0
    %1905 = vmatprep.mubr.f32.mxu0 0.0
    %1906 = vmatmul.mubr.f32.gmra.mrb[0].mxu0 %v1837
    %v1907 = vpop.f32.mrb[0].mxu0
    %v1908 = vadd.f32 %v520, %v1907
    %v1909 = vpop.f32.mrb[0].mxu0
    %1910 = vdwg.mxu0
    %1911 = vrot.lane.b32.xlu0 %v657, 32
    %v1912 = vpop.permute.xlu0 %1911
    %1913 = vrot.lane.b32.xlu0 %v743, 32
    %v1914 = vpop.permute.xlu0 %1913
    %v1915 = vsel %vm524, %v1912, 0
    %v1917 = vsel %vm524, %v1914, 0
    %1919 = vmatprep.subr.mxu0 0.0
    %1920 = vmatpush1.xpose.msra.mxu0 %v1917
    %1921 = vmatprep.subr.mxu0 0.0
    %1922 = vmatpush1.xpose.msra.mxu0 0.0
    %1923 = vmatprep.subr.mxu0 0.0
    %1924 = vmatpush1.xpose.msra.mxu0 0.0
    %1925 = vmatprep.subr.mxu0 0.0
    %1926 = vmatpush1.xpose.msra.mxu0 0.0
    %1927 = vmatprep.subr.mxu0 0.0
    %1928 = vmatpush1.xpose.msra.mxu0 0.0
    %1929 = vmatprep.subr.mxu0 0.0
    %1930 = vmatpush1.xpose.msra.mxu0 0.0
    %1931 = vmatprep.subr.mxu0 0.0
    %1932 = vmatpush1.xpose.msra.mxu0 0.0
    %1933 = vmatprep.subr.mxu0 0.0
    %1934 = vmatpush1.xpose.msra.mxu0 0.0
    %1935 = vmatprep.subr.mxu0 0.0
    %1936 = vmatpush1.xpose.msra.mxu0 0.0
    %1937 = vmatprep.subr.mxu0 0.0
    %1938 = vmatpush1.xpose.msra.mxu0 0.0
    %1939 = vmatprep.subr.mxu0 0.0
    %1940 = vmatpush1.xpose.msra.mxu0 0.0
    %1941 = vmatprep.subr.mxu0 0.0
    %1942 = vmatpush1.xpose.msra.mxu0 0.0
    %1943 = vmatprep.subr.mxu0 0.0
    %1944 = vmatpush1.xpose.msra.mxu0 0.0
    %1945 = vmatprep.subr.mxu0 0.0
    %1946 = vmatpush1.xpose.msra.mxu0 0.0
    %1947 = vmatprep.subr.mxu0 0.0
    %1948 = vmatpush1.xpose.msra.mxu0 0.0
    %1949 = vmatprep.subr.mxu0 0.0
    %1950 = vmatpush1.xpose.msra.mxu0 0.0
    %1951 = vmatprep.subr.mxu0 0.0
    %1952 = vmatpush1.xpose.msra.mxu0 0.0
    %1953 = vmatprep.subr.mxu0 0.0
    %1954 = vmatpush1.xpose.msra.mxu0 0.0
    %1955 = vmatprep.subr.mxu0 0.0
    %1956 = vmatpush1.xpose.msra.mxu0 0.0
    %1957 = vmatprep.subr.mxu0 0.0
    %1958 = vmatpush1.xpose.msra.mxu0 0.0
    %1959 = vmatprep.subr.mxu0 0.0
    %1960 = vmatpush1.xpose.msra.mxu0 0.0
    %1961 = vmatprep.subr.mxu0 0.0
    %1962 = vmatpush1.xpose.msra.mxu0 0.0
    %1963 = vmatprep.subr.mxu0 0.0
    %1964 = vmatpush1.xpose.msra.mxu0 0.0
    %1965 = vmatprep.subr.mxu0 0.0
    %1966 = vmatpush1.xpose.msra.mxu0 0.0
    %1967 = vmatprep.subr.mxu0 0.0
    %1968 = vmatpush1.xpose.msra.mxu0 0.0
    %1969 = vmatprep.subr.mxu0 0.0
    %1970 = vmatpush1.xpose.msra.mxu0 0.0
    %1971 = vmatprep.subr.mxu0 0.0
    %1972 = vmatpush1.xpose.msra.mxu0 0.0
    %1973 = vmatprep.subr.mxu0 0.0
    %1974 = vmatpush1.xpose.msra.mxu0 0.0
    %1975 = vmatprep.subr.mxu0 0.0
    %1976 = vmatpush1.xpose.msra.mxu0 0.0
    %1977 = vmatprep.subr.mxu0 0.0
    %1978 = vmatpush1.xpose.msra.mxu0 0.0
    %1979 = vmatprep.subr.mxu0 0.0
    %1980 = vmatpush1.xpose.msra.mxu0 0.0
    %1981 = vmatprep.subr.mxu0 0.0
    %1982 = vmatpush1.xpose.msra.mxu0 0.0
    %1983 = vmatprep.mubr.f32.mxu0 0.0
    %1984 = vmatmul.mubr.f32.gmra.mrb[0].mxu0 %v1915
    %v1985 = vpop.f32.mrb[0].mxu0
    %v1986 = vadd.f32 %v521, %v1985
    %v1987 = vpop.f32.mrb[0].mxu0
    %1988 = vdwg.mxu0
    %v1989 = vsel %vm984, %v1908, -inf
    %1990 = vmax.xlane.f32.xlu0 %v1989
    %v1991 = vpop.xlane.xlu0 %1990
    %v1992 = vsel %vm984, %v1986, -inf
    %1993 = vmax.xlane.f32.xlu0 %v1992
    %v1994 = vpop.xlane.xlu0 %1993
    %v1995 = vsub.f32 %v1908, %v1991
    %v1996 = vsub.f32 %v1986, %v1994
    %v1997 = vmul.f32 %v1995, 1.442695
    %v1998 = vpow.pop %v1997
    %v1999 = vmul.f32 %v1996, 1.442695
    %v2000 = vpow.pop %v1999
    %v2001 = vmul.f32 %v1998, %v1002
    %v2002 = vmul.f32 %v2000, %v1006
    %v2003 = vsel %vm984, %v2001, 0.0
    %2004 = vadd.xlane.f32.xlu0 %v2003
    %v2005 = vpop.xlane.xlu0 %2004
    %v2006 = vsel %vm984, %v2002, 0.0
    %2007 = vadd.xlane.f32.xlu0 %v2006
    %v2008 = vpop.xlane.xlu0 %2007
    %v2009 = vrcp.pop %v2005
    %v2010 = vrcp.pop %v2008
    %v2011 = vmul.f32 %v2001, %v2009
    %v2012 = vmul.f32 %v2002, %v2010
    %2013 = vrot.lane.b32.xlu0 %v824, 32
    %v2014 = vpop.permute.xlu0 %2013
    %v2017 = vsel %vm984, %v2011, 0
    %2019 = vmatprep.subr.mxu0 0.0
    %2020 = vmatpush1.msra.mxu0 %v2014
    %2021 = vmatprep.subr.mxu0 0.0
    %2022 = vmatpush1.msra.mxu0 0.0
    %2023 = vmatprep.subr.mxu0 0.0
    %2024 = vmatpush1.msra.mxu0 0.0
    %2025 = vmatprep.subr.mxu0 0.0
    %2026 = vmatpush1.msra.mxu0 0.0
    %2027 = vmatprep.subr.mxu0 0.0
    %2028 = vmatpush1.msra.mxu0 0.0
    %2029 = vmatprep.subr.mxu0 0.0
    %2030 = vmatpush1.msra.mxu0 0.0
    %2031 = vmatprep.subr.mxu0 0.0
    %2032 = vmatpush1.msra.mxu0 0.0
    %2033 = vmatprep.subr.mxu0 0.0
    %2034 = vmatpush1.msra.mxu0 0.0
    %2035 = vmatprep.subr.mxu0 0.0
    %2036 = vmatpush1.msra.mxu0 0.0
    %2037 = vmatprep.subr.mxu0 0.0
    %2038 = vmatpush1.msra.mxu0 0.0
    %2039 = vmatprep.subr.mxu0 0.0
    %2040 = vmatpush1.msra.mxu0 0.0
    %2041 = vmatprep.subr.mxu0 0.0
    %2042 = vmatpush1.msra.mxu0 0.0
    %2043 = vmatprep.subr.mxu0 0.0
    %2044 = vmatpush1.msra.mxu0 0.0
    %2045 = vmatprep.subr.mxu0 0.0
    %2046 = vmatpush1.msra.mxu0 0.0
    %2047 = vmatprep.subr.mxu0 0.0
    %2048 = vmatpush1.msra.mxu0 0.0
    %2049 = vmatprep.subr.mxu0 0.0
    %2050 = vmatpush1.msra.mxu0 0.0
    %2051 = vmatprep.subr.mxu0 0.0
    %2052 = vmatpush1.msra.mxu0 0.0
    %2053 = vmatprep.subr.mxu0 0.0
    %2054 = vmatpush1.msra.mxu0 0.0
    %2055 = vmatprep.subr.mxu0 0.0
    %2056 = vmatpush1.msra.mxu0 0.0
    %2057 = vmatprep.subr.mxu0 0.0
    %2058 = vmatpush1.msra.mxu0 0.0
    %2059 = vmatprep.subr.mxu0 0.0
    %2060 = vmatpush1.msra.mxu0 0.0
    %2061 = vmatprep.subr.mxu0 0.0
    %2062 = vmatpush1.msra.mxu0 0.0
    %2063 = vmatprep.subr.mxu0 0.0
    %2064 = vmatpush1.msra.mxu0 0.0
    %2065 = vmatprep.subr.mxu0 0.0
    %2066 = vmatpush1.msra.mxu0 0.0
    %2067 = vmatprep.subr.mxu0 0.0
    %2068 = vmatpush1.msra.mxu0 0.0
    %2069 = vmatprep.subr.mxu0 0.0
    %2070 = vmatpush1.msra.mxu0 0.0
    %2071 = vmatprep.subr.mxu0 0.0
    %2072 = vmatpush1.msra.mxu0 0.0
    %2073 = vmatprep.subr.mxu0 0.0
    %2074 = vmatpush1.msra.mxu0 0.0
    %2075 = vmatprep.subr.mxu0 0.0
    %2076 = vmatpush1.msra.mxu0 0.0
    %2077 = vmatprep.subr.mxu0 0.0
    %2078 = vmatpush1.msra.mxu0 0.0
    %2079 = vmatprep.subr.mxu0 0.0
    %2080 = vmatpush1.msra.mxu0 0.0
    %2081 = vmatprep.subr.mxu0 0.0
    %2082 = vmatpush1.msra.mxu0 0.0
    %2083 = vmatprep.mubr.f32.mxu0 0.0
    %2084 = vmatmul.mubr.f32.gmra.mrb[0].mxu0 %v2017
    %v2085 = vpop.f32.mrb[0].mxu0
    %v2086 = vadd.f32 0.0, %v2085
    %v2087 = vpop.f32.mrb[0].mxu0
    %2088 = vdwg.mxu0
    %2089 = vrot.lane.b32.xlu0 %v829, 32
    %v2090 = vpop.permute.xlu0 %2089
    %v2093 = vsel %vm984, %v2012, 0
    %2095 = vmatprep.subr.mxu0 0.0
    %2096 = vmatpush1.msra.mxu0 %v2090
    %2097 = vmatprep.subr.mxu0 0.0
    %2098 = vmatpush1.msra.mxu0 0.0
    %2099 = vmatprep.subr.mxu0 0.0
    %2100 = vmatpush1.msra.mxu0 0.0
    %2101 = vmatprep.subr.mxu0 0.0
    %2102 = vmatpush1.msra.mxu0 0.0
    %2103 = vmatprep.subr.mxu0 0.0
    %2104 = vmatpush1.msra.mxu0 0.0
    %2105 = vmatprep.subr.mxu0 0.0
    %2106 = vmatpush1.msra.mxu0 0.0
    %2107 = vmatprep.subr.mxu0 0.0
    %2108 = vmatpush1.msra.mxu0 0.0
    %2109 = vmatprep.subr.mxu0 0.0
    %2110 = vmatpush1.msra.mxu0 0.0
    %2111 = vmatprep.subr.mxu0 0.0
    %2112 = vmatpush1.msra.mxu0 0.0
    %2113 = vmatprep.subr.mxu0 0.0
    %2114 = vmatpush1.msra.mxu0 0.0
    %2115 = vmatprep.subr.mxu0 0.0
    %2116 = vmatpush1.msra.mxu0 0.0
    %2117 = vmatprep.subr.mxu0 0.0
    %2118 = vmatpush1.msra.mxu0 0.0
    %2119 = vmatprep.subr.mxu0 0.0
    %2120 = vmatpush1.msra.mxu0 0.0
    %2121 = vmatprep.subr.mxu0 0.0
    %2122 = vmatpush1.msra.mxu0 0.0
    %2123 = vmatprep.subr.mxu0 0.0
    %2124 = vmatpush1.msra.mxu0 0.0
    %2125 = vmatprep.subr.mxu0 0.0
    %2126 = vmatpush1.msra.mxu0 0.0
    %2127 = vmatprep.subr.mxu0 0.0
    %2128 = vmatpush1.msra.mxu0 0.0
    %2129 = vmatprep.subr.mxu0 0.0
    %2130 = vmatpush1.msra.mxu0 0.0
    %2131 = vmatprep.subr.mxu0 0.0
    %2132 = vmatpush1.msra.mxu0 0.0
    %2133 = vmatprep.subr.mxu0 0.0
    %2134 = vmatpush1.msra.mxu0 0.0
    %2135 = vmatprep.subr.mxu0 0.0
    %2136 = vmatpush1.msra.mxu0 0.0
    %2137 = vmatprep.subr.mxu0 0.0
    %2138 = vmatpush1.msra.mxu0 0.0
    %2139 = vmatprep.subr.mxu0 0.0
    %2140 = vmatpush1.msra.mxu0 0.0
    %2141 = vmatprep.subr.mxu0 0.0
    %2142 = vmatpush1.msra.mxu0 0.0
    %2143 = vmatprep.subr.mxu0 0.0
    %2144 = vmatpush1.msra.mxu0 0.0
    %2145 = vmatprep.subr.mxu0 0.0
    %2146 = vmatpush1.msra.mxu0 0.0
    %2147 = vmatprep.subr.mxu0 0.0
    %2148 = vmatpush1.msra.mxu0 0.0
    %2149 = vmatprep.subr.mxu0 0.0
    %2150 = vmatpush1.msra.mxu0 0.0
    %2151 = vmatprep.subr.mxu0 0.0
    %2152 = vmatpush1.msra.mxu0 0.0
    %2153 = vmatprep.subr.mxu0 0.0
    %2154 = vmatpush1.msra.mxu0 0.0
    %2155 = vmatprep.subr.mxu0 0.0
    %2156 = vmatpush1.msra.mxu0 0.0
    %2157 = vmatprep.subr.mxu0 0.0
    %2158 = vmatpush1.msra.mxu0 0.0
    %2159 = vmatprep.mubr.f32.mxu0 0.0
    %2160 = vmatmul.mubr.f32.gmra.mrb[0].mxu0 %v2093
    %v2161 = vpop.f32.mrb[0].mxu0
    %v2162 = vadd.f32 0.0, %v2161
    %v2163 = vpop.f32.mrb[0].mxu0
    %2164 = vdwg.mxu0
    %2167 = vrot.lane.b32.xlu0 %v1421, 32
    %v2168 = vpop.permute.xlu0 %2167
    %2169 = vrot.lane.b32.xlu0 %v1498, 32
    %v2170 = vpop.permute.xlu0 %2169
    %2175 = vrot.lane.b32.xlu0 %v1754, 64
    %v2176 = vpop.permute.xlu0 %2175
    %2177 = vrot.lane.b32.xlu0 %v1830, 64
    %v2178 = vpop.permute.xlu0 %2177
    %2183 = vrot.lane.b32.xlu0 %v2086, 96
    %v2184 = vpop.permute.xlu0 %2183
    %2185 = vrot.lane.b32.xlu0 %v2162, 96
    %v2186 = vpop.permute.xlu0 %2185
    %v2189 = vsel %vm524, %v1091, %v2168
    %v2190 = vsel %vm524, %v1164, %v2170
    %vm2191 = vcmask 523264
    %v2192 = vsel %vm2191, %v2189, %v2176
    %v2193 = vsel %vm2191, %v2190, %v2178
    %vm2194 = vcmask 785408
    %v2195 = vsel %vm2194, %v2192, %v2184
    %v2196 = vsel %vm2194, %v2193, %v2186
    %v2197 = vld [vmem:[%s15] sm:$0xff]
    %v2198 = vld [vmem:[%s15 + $0x8] sm:$0xff]
    %v2199 = vld [vmem:[%s15 + $0x10] sm:$0xff]
    %v2200 = vld [vmem:[%s15 + $0x18] sm:$0xff]
    %v2201 = vld [vmem:[%s15 + $0x20] sm:$0xff]
    %v2202 = vld [vmem:[%s15 + $0x28] sm:$0xff]
    %v2203 = vld [vmem:[%s15 + $0x30] sm:$0xff]
    %v2204 = vld [vmem:[%s15 + $0x38] sm:$0xff]
    %v2205 = vld [vmem:[%s15 + $0x40] sm:$0xff]
    %v2206 = vld [vmem:[%s15 + $0x48] sm:$0xff]
    %v2207 = vld [vmem:[%s15 + $0x50] sm:$0xff]
    %v2208 = vld [vmem:[%s15 + $0x58] sm:$0xff]
    %v2209 = vld [vmem:[%s15 + $0x60] sm:$0xff]
    %v2210 = vld [vmem:[%s15 + $0x68] sm:$0xff]
    %v2211 = vld [vmem:[%s15 + $0x70] sm:$0xff]
    %v2212 = vld [vmem:[%s15 + $0x78] sm:$0xff]
    %v2213 = vld [vmem:[#allocation10] sm:$0x1]
    %v2215 = vlaneseq
    %v2216 = vshrl.u32 %v2215, 7
    %v2217 = vsub.s32 0, %v2216
    %v2218 = vrot.slane %v2213, %v2217
    %2220 = vmatprep.subr.mxu0 0.0
    %2221 = vmatpush1.msra.mxu0 %v2197
    %2222 = vmatprep.subr.mxu0 0.0
    %2223 = vmatpush1.msra.mxu0 %v2198
    %2224 = vmatprep.subr.mxu0 0.0
    %2225 = vmatpush1.msra.mxu0 %v2199
    %2226 = vmatprep.subr.mxu0 0.0
    %2227 = vmatpush1.msra.mxu0 %v2200
    %2228 = vmatprep.subr.mxu0 0.0
    %2229 = vmatpush1.msra.mxu0 %v2201
    %2230 = vmatprep.subr.mxu0 0.0
    %2231 = vmatpush1.msra.mxu0 %v2202
    %2232 = vmatprep.subr.mxu0 0.0
    %2233 = vmatpush1.msra.mxu0 %v2203
    %2234 = vmatprep.subr.mxu0 0.0
    %2235 = vmatpush1.msra.mxu0 %v2204
    %2236 = vmatprep.subr.mxu0 0.0
    %2237 = vmatpush1.msra.mxu0 %v2205
    %2238 = vmatprep.subr.mxu0 0.0
    %2239 = vmatpush1.msra.mxu0 %v2206
    %2240 = vmatprep.subr.mxu0 0.0
    %2241 = vmatpush1.msra.mxu0 %v2207
    %2242 = vmatprep.subr.mxu0 0.0
    %2243 = vmatpush1.msra.mxu0 %v2208
    %2244 = vmatprep.subr.mxu0 0.0
    %2245 = vmatpush1.msra.mxu0 %v2209
    %2246 = vmatprep.subr.mxu0 0.0
    %2247 = vmatpush1.msra.mxu0 %v2210
    %2248 = vmatprep.subr.mxu0 0.0
    %2249 = vmatpush1.msra.mxu0 %v2211
    %2250 = vmatprep.subr.mxu0 0.0
    %2251 = vmatpush1.msra.mxu0 %v2212
    %2252 = vmatprep.subr.mxu0 0.0
    %2253 = vmatpush1.msra.mxu0 0.0
    %2254 = vmatprep.subr.mxu0 0.0
    %2255 = vmatpush1.msra.mxu0 0.0
    %2256 = vmatprep.subr.mxu0 0.0
    %2257 = vmatpush1.msra.mxu0 0.0
    %2258 = vmatprep.subr.mxu0 0.0
    %2259 = vmatpush1.msra.mxu0 0.0
    %2260 = vmatprep.subr.mxu0 0.0
    %2261 = vmatpush1.msra.mxu0 0.0
    %2262 = vmatprep.subr.mxu0 0.0
    %2263 = vmatpush1.msra.mxu0 0.0
    %2264 = vmatprep.subr.mxu0 0.0
    %2265 = vmatpush1.msra.mxu0 0.0
    %2266 = vmatprep.subr.mxu0 0.0
    %2267 = vmatpush1.msra.mxu0 0.0
    %2268 = vmatprep.subr.mxu0 0.0
    %2269 = vmatpush1.msra.mxu0 0.0
    %2270 = vmatprep.subr.mxu0 0.0
    %2271 = vmatpush1.msra.mxu0 0.0
    %2272 = vmatprep.subr.mxu0 0.0
    %2273 = vmatpush1.msra.mxu0 0.0
    %2274 = vmatprep.subr.mxu0 0.0
    %2275 = vmatpush1.msra.mxu0 0.0
    %2276 = vmatprep.subr.mxu0 0.0
    %2277 = vmatpush1.msra.mxu0 0.0
    %2278 = vmatprep.subr.mxu0 0.0
    %2279 = vmatpush1.msra.mxu0 0.0
    %2280 = vmatprep.subr.mxu0 0.0
    %2281 = vmatpush1.msra.mxu0 0.0
    %2282 = vmatprep.subr.mxu0 0.0
    %2283 = vmatpush1.msra.mxu0 0.0
    %2284 = vmatprep.mubr.f32.mxu0 0.0
    %2285 = vmatmul.mubr.f32.gmra.mrb[0].mxu0 %v2195
    %v2286 = vpop.f32.mrb[0].mxu0
    %v2287 = vadd.f32 %v2218, %v2286
    %v2288 = vpop.f32.mrb[0].mxu0
    %2289 = vmatprep.mubr.f32.mxu0 0.0
    %2290 = vmatmul.mubr.f32.gmra.mrb[0].mxu0 %v2196
    %v2291 = vpop.f32.mrb[0].mxu0
    %v2292 = vadd.f32 %v2218, %v2291
    %v2293 = vpop.f32.mrb[0].mxu0
    %2294 = vdwg.mxu0
    %v2295 = vadd.f32 %v490, %v2287
    %v2296 = vadd.f32 %v491, %v2292
    %v2297 = vsel %vm524, %v2295, 0.0
    %2298 = vadd.xlane.f32.xlu0 %v2297
    %v2299 = vpop.xlane.xlu0 %2298
    %v2300 = vsel %vm524, %v2296, 0.0
    %2301 = vadd.xlane.f32.xlu0 %v2300
    %v2302 = vpop.xlane.xlu0 %2301
    %v2303 = vmul.f32 %v2299, %v531
    %v2304 = vmul.f32 %v2302, %v531
    %v2305 = vsub.f32 %v2295, %v2303
    %v2306 = vsub.f32 %v2296, %v2304
    %v2307 = vmul.f32 %v2305, %v2305
    %v2308 = vmul.f32 %v2306, %v2306
    %v2309 = vsel %vm524, %v2307, 0.0
    %2310 = vadd.xlane.f32.xlu0 %v2309
    %v2311 = vpop.xlane.xlu0 %2310
    %v2312 = vsel %vm524, %v2308, 0.0
    %2313 = vadd.xlane.f32.xlu0 %v2312
    %v2314 = vpop.xlane.xlu0 %2313
    %v2315 = vmul.f32 %v2311, %v531
    %v2316 = vmul.f32 %v2314, %v531
    %v2317 = vadd.f32 %v2315, 1e-05
    %v2318 = vadd.f32 %v2316, 1e-05
    %v2319 = vrsqrt.pop %v2317
    %v2320 = vrsqrt.pop %v2318
    %v2321 = vmul.f32 %v2305, %v2319
    %v2322 = vmul.f32 %v2306, %v2320
    %v2323 = vmul.f32 %v2321, %v556
    %v2324 = vmul.f32 %v2322, %v556
    %v2325 = vadd.f32 %v2323, %v564
    %v2326 = vadd.f32 %v2324, %v564
    %v2327 = vld [vmem:[%s17] sm:$0xff]
    %v2328 = vld [vmem:[%s17 + $0x8] sm:$0xff]
    %v2329 = vld [vmem:[%s17 + $0x10] sm:$0xff]
    %v2330 = vld [vmem:[%s17 + $0x18] sm:$0xff]
    %v2331 = vld [vmem:[#allocation12] sm:$0x1]
    %v2333 = vlaneseq
    %v2334 = vshrl.u32 %v2333, 7
    %v2335 = vsub.s32 0, %v2334
    %v2336 = vrot.slane %v2331, %v2335
    %v2339 = vsel %vm524, %v2325, 0
    %v2342 = vsel %vm524, %v2326, 0
    %2344 = vmatprep.subr.mxu0 0.0
    %2345 = vmatpush1.msra.mxu0 %v2327
    %2346 = vmatprep.subr.mxu0 0.0
    %2347 = vmatpush1.msra.mxu0 %v2328
    %2348 = vmatprep.subr.mxu0 0.0
    %2349 = vmatpush1.msra.mxu0 %v2329
    %2350 = vmatprep.subr.mxu0 0.0
    %2351 = vmatpush1.msra.mxu0 %v2330
    %2352 = vmatprep.subr.mxu0 0.0
    %2353 = vmatpush1.msra.mxu0 0.0
    %2354 = vmatprep.subr.mxu0 0.0
    %2355 = vmatpush1.msra.mxu0 0.0
    %2356 = vmatprep.subr.mxu0 0.0
    %2357 = vmatpush1.msra.mxu0 0.0
    %2358 = vmatprep.subr.mxu0 0.0
    %2359 = vmatpush1.msra.mxu0 0.0
    %2360 = vmatprep.subr.mxu0 0.0
    %2361 = vmatpush1.msra.mxu0 0.0
    %2362 = vmatprep.subr.mxu0 0.0
    %2363 = vmatpush1.msra.mxu0 0.0
    %2364 = vmatprep.subr.mxu0 0.0
    %2365 = vmatpush1.msra.mxu0 0.0
    %2366 = vmatprep.subr.mxu0 0.0
    %2367 = vmatpush1.msra.mxu0 0.0
    %2368 = vmatprep.subr.mxu0 0.0
    %2369 = vmatpush1.msra.mxu0 0.0
    %2370 = vmatprep.subr.mxu0 0.0
    %2371 = vmatpush1.msra.mxu0 0.0
    %2372 = vmatprep.subr.mxu0 0.0
    %2373 = vmatpush1.msra.mxu0 0.0
    %2374 = vmatprep.subr.mxu0 0.0
    %2375 = vmatpush1.msra.mxu0 0.0
    %2376 = vmatprep.subr.mxu0 0.0
    %2377 = vmatpush1.msra.mxu0 0.0
    %2378 = vmatprep.subr.mxu0 0.0
    %2379 = vmatpush1.msra.mxu0 0.0
    %2380 = vmatprep.subr.mxu0 0.0
    %2381 = vmatpush1.msra.mxu0 0.0
    %2382 = vmatprep.subr.mxu0 0.0
    %2383 = vmatpush1.msra.mxu0 0.0
    %2384 = vmatprep.subr.mxu0 0.0
    %2385 = vmatpush1.msra.mxu0 0.0
    %2386 = vmatprep.subr.mxu0 0.0
    %2387 = vmatpush1.msra.mxu0 0.0
    %2388 = vmatprep.subr.mxu0 0.0
    %2389 = vmatpush1.msra.mxu0 0.0
    %2390 = vmatprep.subr.mxu0 0.0
    %2391 = vmatpush1.msra.mxu0 0.0
    %2392 = vmatprep.subr.mxu0 0.0
    %2393 = vmatpush1.msra.mxu0 0.0
    %2394 = vmatprep.subr.mxu0 0.0
    %2395 = vmatpush1.msra.mxu0 0.0
    %2396 = vmatprep.subr.mxu0 0.0
    %2397 = vmatpush1.msra.mxu0 0.0
    %2398 = vmatprep.subr.mxu0 0.0
    %2399 = vmatpush1.msra.mxu0 0.0
    %2400 = vmatprep.subr.mxu0 0.0
    %2401 = vmatpush1.msra.mxu0 0.0
    %2402 = vmatprep.subr.mxu0 0.0
    %2403 = vmatpush1.msra.mxu0 0.0
    %2404 = vmatprep.subr.mxu0 0.0
    %2405 = vmatpush1.msra.mxu0 0.0
    %2406 = vmatprep.subr.mxu0 0.0
    %2407 = vmatpush1.msra.mxu0 0.0
    %2408 = vmatprep.mubr.f32.mxu0 0.0
    %2409 = vmatmul.mubr.f32.gmra.mrb[0].mxu0 %v2339
    %v2410 = vpop.f32.mrb[0].mxu0
    %v2411 = vadd.f32 %v2336, %v2410
    %v2412 = vpop.f32.mrb[0].mxu0
    %2413 = vmatprep.mubr.f32.mxu0 0.0
    %2414 = vmatmul.mubr.f32.gmra.mrb[0].mxu0 %v2342
    %v2415 = vpop.f32.mrb[0].mxu0
    %v2416 = vadd.f32 %v2336, %v2415
    %v2417 = vpop.f32.mrb[0].mxu0
    %2418 = vdwg.mxu0
    %vm2419 = vcmp.gt.f32.partialorder %v2411, 20.0
    %vm2420 = vcmp.gt.f32.partialorder %v2416, 20.0
    %v2421 = vmin.f32 %v2411, 20.0
    %v2422 = vmin.f32 %v2416, 20.0
    %v2423 = vmul.f32 %v2421, 1.442695
    %v2424 = vpow.pop %v2423
    %v2425 = vmul.f32 %v2422, 1.442695
    %v2426 = vpow.pop %v2425
    %v2427 = vadd.f32 %v2424, 1.0
    %v2428 = vlog2.pop %v2427
    %v2429 = vmul.f32 %v2428, 0.6931472
    %v2430 = vmul.f32 -0.5, %v2424
    %v2431 = vadd.f32 %v2430, 1.0
    %v2432 = vmul.f32 %v2431, %v2424
    %v2433 = vand.u32 2147483647, %v2424
    %vm2434 = vcmp.lt.f32.partialorder %v2433, 0.0004427343
    %v2435 = vsel %vm2434, %v2432, %v2429
    %v2436 = vadd.f32 %v2426, 1.0
    %v2437 = vlog2.pop %v2436
    %v2438 = vmul.f32 %v2437, 0.6931472
    %v2439 = vmul.f32 -0.5, %v2426
    %v2440 = vadd.f32 %v2439, 1.0
    %v2441 = vmul.f32 %v2440, %v2426
    %v2442 = vand.u32 2147483647, %v2426
    %vm2443 = vcmp.lt.f32.partialorder %v2442, 0.0004427343
    %v2444 = vsel %vm2443, %v2441, %v2438
    %v2445 = vsel %vm2419, %v2411, %v2435
    %v2446 = vsel %vm2420, %v2416, %v2444
    %v2447 = vtanh.pop %v2445
    %v2448 = vtanh.pop %v2446
    %v2449 = vmul.f32 %v2411, %v2447
    %v2450 = vmul.f32 %v2416, %v2448
    %v2451 = vadd.f32 %v2295, %v2449
    %v2452 = vadd.f32 %v2296, %v2450
    %v2453 = vsel %vm524, %v2451, 0.0
    %2454 = vadd.xlane.f32.xlu0 %v2453
    %v2455 = vpop.xlane.xlu0 %2454
    %v2456 = vsel %vm524, %v2452, 0.0
    %2457 = vadd.xlane.f32.xlu0 %v2456
    %v2458 = vpop.xlane.xlu0 %2457
    %v2459 = vmul.f32 %v2455, %v531
    %v2460 = vmul.f32 %v2458, %v531
    %v2461 = vsub.f32 %v2451, %v2459
    %v2462 = vsub.f32 %v2452, %v2460
    %v2463 = vmul.f32 %v2461, %v2461
    %v2464 = vmul.f32 %v2462, %v2462
    %v2465 = vsel %vm524, %v2463, 0.0
    %2466 = vadd.xlane.f32.xlu0 %v2465
    %v2467 = vpop.xlane.xlu0 %2466
    %v2468 = vsel %vm524, %v2464, 0.0
    %2469 = vadd.xlane.f32.xlu0 %v2468
    %v2470 = vpop.xlane.xlu0 %2469
    %v2471 = vmul.f32 %v2467, %v531
    %v2472 = vmul.f32 %v2470, %v531
    %v2473 = vadd.f32 %v2471, 1e-05
    %v2474 = vadd.f32 %v2472, 1e-05
    %v2475 = vrsqrt.pop %v2473
    %v2476 = vrsqrt.pop %v2474
    %v2477 = vmul.f32 %v2461, %v2475
    %v2478 = vmul.f32 %v2462, %v2476
    %v2479 = vmul.f32 %v2477, %v556
    %v2480 = vmul.f32 %v2478, %v556
    %v2481 = vadd.f32 %v2479, %v564
    %v2482 = vadd.f32 %v2480, %v564
    %s2483 = scalar_lea.vmem %s7, 1
    %v2484 = vld [vmem:[%s2483] sm:$0x1]
    %s2485 = scalar_lea.vmem %s8, 1
    %v2486 = vld [vmem:[%s2485] sm:$0x1]
    %v2487 = vsel %vm524, %v2481, 0.0
    %2488 = vadd.xlane.f32.xlu0 %v2487
    %v2489 = vpop.xlane.xlu0 %2488
    %v2490 = vsel %vm524, %v2482, 0.0
    %2491 = vadd.xlane.f32.xlu0 %v2490
    %v2492 = vpop.xlane.xlu0 %2491
    %v2493 = vmul.f32 %v2489, %v531
    %v2494 = vmul.f32 %v2492, %v531
    %v2495 = vsub.f32 %v2481, %v2493
    %v2496 = vsub.f32 %v2482, %v2494
    %v2497 = vmul.f32 %v2495, %v2495
    %v2498 = vmul.f32 %v2496, %v2496
    %v2499 = vsel %vm524, %v2497, 0.0
    %2500 = vadd.xlane.f32.xlu0 %v2499
    %v2501 = vpop.xlane.xlu0 %2500
    %v2502 = vsel %vm524, %v2498, 0.0
    %2503 = vadd.xlane.f32.xlu0 %v2502
    %v2504 = vpop.xlane.xlu0 %2503
    %v2505 = vmul.f32 %v2501, %v531
    %v2506 = vmul.f32 %v2504, %v531
    %v2507 = vadd.f32 %v2505, 1e-05
    %v2508 = vadd.f32 %v2506, 1e-05
    %v2509 = vrsqrt.pop %v2507
    %v2510 = vrsqrt.pop %v2508
    %v2511 = vmul.f32 %v2495, %v2509
    %v2512 = vmul.f32 %v2496, %v2510
    %v2514 = vlaneseq
    %v2515 = vshrl.u32 %v2514, 7
    %v2516 = vsub.s32 0, %v2515
    %v2517 = vrot.slane %v2484, %v2516
    %v2519 = vmul.f32 %v2511, %v2517
    %v2520 = vmul.f32 %v2512, %v2517
    %v2522 = vlaneseq
    %v2523 = vshrl.u32 %v2522, 7
    %v2524 = vsub.s32 0, %v2523
    %v2525 = vrot.slane %v2486, %v2524
    %v2527 = vadd.f32 %v2519, %v2525
    %v2528 = vadd.f32 %v2520, %v2525
    %s2529 = scalar_lea.vmem [#allocation6], 32
    %v2530 = vld [vmem:[%s2529] sm:$0xff]
    %v2531 = vld [vmem:[%s2529 + $0x8] sm:$0xff]
    %v2532 = vld [vmem:[%s2529 + $0x10] sm:$0xff]
    %v2533 = vld [vmem:[%s2529 + $0x18] sm:$0xff]
    %s2534 = scalar_lea.vmem %s10, 1
    %v2535 = vld [vmem:[%s2534] sm:$0x1]
    %v2537 = vlaneseq
    %v2538 = vshrl.u32 %v2537, 7
    %v2539 = vsub.s32 0, %v2538
    %v2540 = vrot.slane %v2535, %v2539
    %v2543 = vsel %vm524, %v2527, 0
    %v2546 = vsel %vm524, %v2528, 0
    %2548 = vmatprep.subr.mxu0 0.0
    %2549 = vmatpush1.msra.mxu0 %v2530
    %2550 = vmatprep.subr.mxu0 0.0
    %2551 = vmatpush1.msra.mxu0 %v2531
    %2552 = vmatprep.subr.mxu0 0.0
    %2553 = vmatpush1.msra.mxu0 %v2532
    %2554 = vmatprep.subr.mxu0 0.0
    %2555 = vmatpush1.msra.mxu0 %v2533
    %2556 = vmatprep.subr.mxu0 0.0
    %2557 = vmatpush1.msra.mxu0 0.0
    %2558 = vmatprep.subr.mxu0 0.0
    %2559 = vmatpush1.msra.mxu0 0.0
    %2560 = vmatprep.subr.mxu0 0.0
    %2561 = vmatpush1.msra.mxu0 0.0
    %2562 = vmatprep.subr.mxu0 0.0
    %2563 = vmatpush1.msra.mxu0 0.0
    %2564 = vmatprep.subr.mxu0 0.0
    %2565 = vmatpush1.msra.mxu0 0.0
    %2566 = vmatprep.subr.mxu0 0.0
    %2567 = vmatpush1.msra.mxu0 0.0
    %2568 = vmatprep.subr.mxu0 0.0
    %2569 = vmatpush1.msra.mxu0 0.0
    %2570 = vmatprep.subr.mxu0 0.0
    %2571 = vmatpush1.msra.mxu0 0.0
    %2572 = vmatprep.subr.mxu0 0.0
    %2573 = vmatpush1.msra.mxu0 0.0
    %2574 = vmatprep.subr.mxu0 0.0
    %2575 = vmatpush1.msra.mxu0 0.0
    %2576 = vmatprep.subr.mxu0 0.0
    %2577 = vmatpush1.msra.mxu0 0.0
    %2578 = vmatprep.subr.mxu0 0.0
    %2579 = vmatpush1.msra.mxu0 0.0
    %2580 = vmatprep.subr.mxu0 0.0
    %2581 = vmatpush1.msra.mxu0 0.0
    %2582 = vmatprep.subr.mxu0 0.0
    %2583 = vmatpush1.msra.mxu0 0.0
    %2584 = vmatprep.subr.mxu0 0.0
    %2585 = vmatpush1.msra.mxu0 0.0
    %2586 = vmatprep.subr.mxu0 0.0
    %2587 = vmatpush1.msra.mxu0 0.0
    %2588 = vmatprep.subr.mxu0 0.0
    %2589 = vmatpush1.msra.mxu0 0.0
    %2590 = vmatprep.subr.mxu0 0.0
    %2591 = vmatpush1.msra.mxu0 0.0
    %2592 = vmatprep.subr.mxu0 0.0
    %2593 = vmatpush1.msra.mxu0 0.0
    %2594 = vmatprep.subr.mxu0 0.0
    %2595 = vmatpush1.msra.mxu0 0.0
    %2596 = vmatprep.subr.mxu0 0.0
    %2597 = vmatpush1.msra.mxu0 0.0
    %2598 = vmatprep.subr.mxu0 0.0
    %2599 = vmatpush1.msra.mxu0 0.0
    %2600 = vmatprep.subr.mxu0 0.0
    %2601 = vmatpush1.msra.mxu0 0.0
    %2602 = vmatprep.subr.mxu0 0.0
    %2603 = vmatpush1.msra.mxu0 0.0
    %2604 = vmatprep.subr.mxu0 0.0
    %2605 = vmatpush1.msra.mxu0 0.0
    %2606 = vmatprep.subr.mxu0 0.0
    %2607 = vmatpush1.msra.mxu0 0.0
    %2608 = vmatprep.subr.mxu0 0.0
    %2609 = vmatpush1.msra.mxu0 0.0
    %2610 = vmatprep.subr.mxu0 0.0
    %2611 = vmatpush1.msra.mxu0 0.0
    %2612 = vmatprep.mubr.f32.mxu0 0.0
    %2613 = vmatmul.mubr.f32.gmra.mrb[0].mxu0 %v2543
    %v2614 = vpop.f32.mrb[0].mxu0
    %v2615 = vadd.f32 %v2540, %v2614
    %v2616 = vpop.f32.mrb[0].mxu0
    %2617 = vmatprep.mubr.f32.mxu0 0.0
    %2618 = vmatmul.mubr.f32.gmra.mrb[0].mxu0 %v2546
    %v2619 = vpop.f32.mrb[0].mxu0
    %v2620 = vadd.f32 %v2540, %v2619
    %v2621 = vpop.f32.mrb[0].mxu0
    %2622 = vdwg.mxu0
    %s2623 = scalar_lea.vmem [#allocation7], 32
    %v2624 = vld [vmem:[%s2623] sm:$0xff]
    %v2625 = vld [vmem:[%s2623 + $0x8] sm:$0xff]
    %v2626 = vld [vmem:[%s2623 + $0x10] sm:$0xff]
    %v2627 = vld [vmem:[%s2623 + $0x18] sm:$0xff]
    %s2628 = scalar_lea.vmem %s12, 1
    %v2629 = vld [vmem:[%s2628] sm:$0x1]
    %v2631 = vlaneseq
    %v2632 = vshrl.u32 %v2631, 7
    %v2633 = vsub.s32 0, %v2632
    %v2634 = vrot.slane %v2629, %v2633
    %2636 = vmatprep.subr.mxu0 0.0
    %2637 = vmatpush1.msra.mxu0 %v2624
    %2638 = vmatprep.subr.mxu0 0.0
    %2639 = vmatpush1.msra.mxu0 %v2625
    %2640 = vmatprep.subr.mxu0 0.0
    %2641 = vmatpush1.msra.mxu0 %v2626
    %2642 = vmatprep.subr.mxu0 0.0
    %2643 = vmatpush1.msra.mxu0 %v2627
    %2644 = vmatprep.subr.mxu0 0.0
    %2645 = vmatpush1.msra.mxu0 0.0
    %2646 = vmatprep.subr.mxu0 0.0
    %2647 = vmatpush1.msra.mxu0 0.0
    %2648 = vmatprep.subr.mxu0 0.0
    %2649 = vmatpush1.msra.mxu0 0.0
    %2650 = vmatprep.subr.mxu0 0.0
    %2651 = vmatpush1.msra.mxu0 0.0
    %2652 = vmatprep.subr.mxu0 0.0
    %2653 = vmatpush1.msra.mxu0 0.0
    %2654 = vmatprep.subr.mxu0 0.0
    %2655 = vmatpush1.msra.mxu0 0.0
    %2656 = vmatprep.subr.mxu0 0.0
    %2657 = vmatpush1.msra.mxu0 0.0
    %2658 = vmatprep.subr.mxu0 0.0
    %2659 = vmatpush1.msra.mxu0 0.0
    %2660 = vmatprep.subr.mxu0 0.0
    %2661 = vmatpush1.msra.mxu0 0.0
    %2662 = vmatprep.subr.mxu0 0.0
    %2663 = vmatpush1.msra.mxu0 0.0
    %2664 = vmatprep.subr.mxu0 0.0
    %2665 = vmatpush1.msra.mxu0 0.0
    %2666 = vmatprep.subr.mxu0 0.0
    %2667 = vmatpush1.msra.mxu0 0.0
    %2668 = vmatprep.subr.mxu0 0.0
    %2669 = vmatpush1.msra.mxu0 0.0
    %2670 = vmatprep.subr.mxu0 0.0
    %2671 = vmatpush1.msra.mxu0 0.0
    %2672 = vmatprep.subr.mxu0 0.0
    %2673 = vmatpush1.msra.mxu0 0.0
    %2674 = vmatprep.subr.mxu0 0.0
    %2675 = vmatpush1.msra.mxu0 0.0
    %2676 = vmatprep.subr.mxu0 0.0
    %2677 = vmatpush1.msra.mxu0 0.0
    %2678 = vmatprep.subr.mxu0 0.0
    %2679 = vmatpush1.msra.mxu0 0.0
    %2680 = vmatprep.subr.mxu0 0.0
    %2681 = vmatpush1.msra.mxu0 0.0
    %2682 = vmatprep.subr.mxu0 0.0
    %2683 = vmatpush1.msra.mxu0 0.0
    %2684 = vmatprep.subr.mxu0 0.0
    %2685 = vmatpush1.msra.mxu0 0.0
    %2686 = vmatprep.subr.mxu0 0.0
    %2687 = vmatpush1.msra.mxu0 0.0
    %2688 = vmatprep.subr.mxu0 0.0
    %2689 = vmatpush1.msra.mxu0 0.0
    %2690 = vmatprep.subr.mxu0 0.0
    %2691 = vmatpush1.msra.mxu0 0.0
    %2692 = vmatprep.subr.mxu0 0.0
    %2693 = vmatpush1.msra.mxu0 0.0
    %2694 = vmatprep.subr.mxu0 0.0
    %2695 = vmatpush1.msra.mxu0 0.0
    %2696 = vmatprep.subr.mxu0 0.0
    %2697 = vmatpush1.msra.mxu0 0.0
    %2698 = vmatprep.subr.mxu0 0.0
    %2699 = vmatpush1.msra.mxu0 0.0
    %2700 = vmatprep.mubr.f32.mxu0 0.0
    %2701 = vmatmul.mubr.f32.gmra.mrb[0].mxu0 %v2543
    %v2702 = vpop.f32.mrb[0].mxu0
    %v2703 = vadd.f32 %v2634, %v2702
    %v2704 = vpop.f32.mrb[0].mxu0
    %2705 = vmatprep.mubr.f32.mxu0 0.0
    %2706 = vmatmul.mubr.f32.gmra.mrb[0].mxu0 %v2546
    %v2707 = vpop.f32.mrb[0].mxu0
    %v2708 = vadd.f32 %v2634, %v2707
    %v2709 = vpop.f32.mrb[0].mxu0
    %2710 = vdwg.mxu0
    %s2711 = scalar_lea.vmem [#allocation9], 32
    %v2712 = vld [vmem:[%s2711] sm:$0xff]
    %v2713 = vld [vmem:[%s2711 + $0x8] sm:$0xff]
    %v2714 = vld [vmem:[%s2711 + $0x10] sm:$0xff]
    %v2715 = vld [vmem:[%s2711 + $0x18] sm:$0xff]
    %s2716 = scalar_lea.vmem %s14, 1
    %v2717 = vld [vmem:[%s2716] sm:$0x1]
    %v2719 = vlaneseq
    %v2720 = vshrl.u32 %v2719, 7
    %v2721 = vsub.s32 0, %v2720
    %v2722 = vrot.slane %v2717, %v2721
    %2724 = vmatprep.subr.mxu0 0.0
    %2725 = vmatpush1.msra.mxu0 %v2712
    %2726 = vmatprep.subr.mxu0 0.0
    %2727 = vmatpush1.msra.mxu0 %v2713
    %2728 = vmatprep.subr.mxu0 0.0
    %2729 = vmatpush1.msra.mxu0 %v2714
    %2730 = vmatprep.subr.mxu0 0.0
    %2731 = vmatpush1.msra.mxu0 %v2715
    %2732 = vmatprep.subr.mxu0 0.0
    %2733 = vmatpush1.msra.mxu0 0.0
    %2734 = vmatprep.subr.mxu0 0.0
    %2735 = vmatpush1.msra.mxu0 0.0
    %2736 = vmatprep.subr.mxu0 0.0
    %2737 = vmatpush1.msra.mxu0 0.0
    %2738 = vmatprep.subr.mxu0 0.0
    %2739 = vmatpush1.msra.mxu0 0.0
    %2740 = vmatprep.subr.mxu0 0.0
    %2741 = vmatpush1.msra.mxu0 0.0
    %2742 = vmatprep.subr.mxu0 0.0
    %2743 = vmatpush1.msra.mxu0 0.0
    %2744 = vmatprep.subr.mxu0 0.0
    %2745 = vmatpush1.msra.mxu0 0.0
    %2746 = vmatprep.subr.mxu0 0.0
    %2747 = vmatpush1.msra.mxu0 0.0
    %2748 = vmatprep.subr.mxu0 0.0
    %2749 = vmatpush1.msra.mxu0 0.0
    %2750 = vmatprep.subr.mxu0 0.0
    %2751 = vmatpush1.msra.mxu0 0.0
    %2752 = vmatprep.subr.mxu0 0.0
    %2753 = vmatpush1.msra.mxu0 0.0
    %2754 = vmatprep.subr.mxu0 0.0
    %2755 = vmatpush1.msra.mxu0 0.0
    %2756 = vmatprep.subr.mxu0 0.0
    %2757 = vmatpush1.msra.mxu0 0.0
    %2758 = vmatprep.subr.mxu0 0.0
    %2759 = vmatpush1.msra.mxu0 0.0
    %2760 = vmatprep.subr.mxu0 0.0
    %2761 = vmatpush1.msra.mxu0 0.0
    %2762 = vmatprep.subr.mxu0 0.0
    %2763 = vmatpush1.msra.mxu0 0.0
    %2764 = vmatprep.subr.mxu0 0.0
    %2765 = vmatpush1.msra.mxu0 0.0
    %2766 = vmatprep.subr.mxu0 0.0
    %2767 = vmatpush1.msra.mxu0 0.0
    %2768 = vmatprep.subr.mxu0 0.0
    %2769 = vmatpush1.msra.mxu0 0.0
    %2770 = vmatprep.subr.mxu0 0.0
    %2771 = vmatpush1.msra.mxu0 0.0
    %2772 = vmatprep.subr.mxu0 0.0
    %2773 = vmatpush1.msra.mxu0 0.0
    %2774 = vmatprep.subr.mxu0 0.0
    %2775 = vmatpush1.msra.mxu0 0.0
    %2776 = vmatprep.subr.mxu0 0.0
    %2777 = vmatpush1.msra.mxu0 0.0
    %2778 = vmatprep.subr.mxu0 0.0
    %2779 = vmatpush1.msra.mxu0 0.0
    %2780 = vmatprep.subr.mxu0 0.0
    %2781 = vmatpush1.msra.mxu0 0.0
    %2782 = vmatprep.subr.mxu0 0.0
    %2783 = vmatpush1.msra.mxu0 0.0
    %2784 = vmatprep.subr.mxu0 0.0
    %2785 = vmatpush1.msra.mxu0 0.0
    %2786 = vmatprep.subr.mxu0 0.0
    %2787 = vmatpush1.msra.mxu0 0.0
    %2788 = vmatprep.mubr.f32.mxu0 0.0
    %2789 = vmatmul.mubr.f32.gmra.mrb[0].mxu0 %v2543
    %v2790 = vpop.f32.mrb[0].mxu0
    %v2791 = vadd.f32 %v2722, %v2790
    %v2792 = vpop.f32.mrb[0].mxu0
    %2793 = vmatprep.mubr.f32.mxu0 0.0
    %2794 = vmatmul.mubr.f32.gmra.mrb[0].mxu0 %v2546
    %v2795 = vpop.f32.mrb[0].mxu0
    %v2796 = vadd.f32 %v2722, %v2795
    %v2797 = vpop.f32.mrb[0].mxu0
    %2798 = vdwg.mxu0
    %v2800 = vsel %vm524, %v2615, 0
    %v2803 = vsel %vm524, %v2703, 0
    %2805 = vmatprep.subr.mxu0 0.0
    %2806 = vmatpush1.xpose.msra.mxu0 %v2803
    %2807 = vmatprep.subr.mxu0 0.0
    %2808 = vmatpush1.xpose.msra.mxu0 0.0
    %2809 = vmatprep.subr.mxu0 0.0
    %2810 = vmatpush1.xpose.msra.mxu0 0.0
    %2811 = vmatprep.subr.mxu0 0.0
    %2812 = vmatpush1.xpose.msra.mxu0 0.0
    %2813 = vmatprep.subr.mxu0 0.0
    %2814 = vmatpush1.xpose.msra.mxu0 0.0
    %2815 = vmatprep.subr.mxu0 0.0
    %2816 = vmatpush1.xpose.msra.mxu0 0.0
    %2817 = vmatprep.subr.mxu0 0.0
    %2818 = vmatpush1.xpose.msra.mxu0 0.0
    %2819 = vmatprep.subr.mxu0 0.0
    %2820 = vmatpush1.xpose.msra.mxu0 0.0
    %2821 = vmatprep.subr.mxu0 0.0
    %2822 = vmatpush1.xpose.msra.mxu0 0.0
    %2823 = vmatprep.subr.mxu0 0.0
    %2824 = vmatpush1.xpose.msra.mxu0 0.0
    %2825 = vmatprep.subr.mxu0 0.0
    %2826 = vmatpush1.xpose.msra.mxu0 0.0
    %2827 = vmatprep.subr.mxu0 0.0
    %2828 = vmatpush1.xpose.msra.mxu0 0.0
    %2829 = vmatprep.subr.mxu0 0.0
    %2830 = vmatpush1.xpose.msra.mxu0 0.0
    %2831 = vmatprep.subr.mxu0 0.0
    %2832 = vmatpush1.xpose.msra.mxu0 0.0
    %2833 = vmatprep.subr.mxu0 0.0
    %2834 = vmatpush1.xpose.msra.mxu0 0.0
    %2835 = vmatprep.subr.mxu0 0.0
    %2836 = vmatpush1.xpose.msra.mxu0 0.0
    %2837 = vmatprep.subr.mxu0 0.0
    %2838 = vmatpush1.xpose.msra.mxu0 0.0
    %2839 = vmatprep.subr.mxu0 0.0
    %2840 = vmatpush1.xpose.msra.mxu0 0.0
    %2841 = vmatprep.subr.mxu0 0.0
    %2842 = vmatpush1.xpose.msra.mxu0 0.0
    %2843 = vmatprep.subr.mxu0 0.0
    %2844 = vmatpush1.xpose.msra.mxu0 0.0
    %2845 = vmatprep.subr.mxu0 0.0
    %2846 = vmatpush1.xpose.msra.mxu0 0.0
    %2847 = vmatprep.subr.mxu0 0.0
    %2848 = vmatpush1.xpose.msra.mxu0 0.0
    %2849 = vmatprep.subr.mxu0 0.0
    %2850 = vmatpush1.xpose.msra.mxu0 0.0
    %2851 = vmatprep.subr.mxu0 0.0
    %2852 = vmatpush1.xpose.msra.mxu0 0.0
    %2853 = vmatprep.subr.mxu0 0.0
    %2854 = vmatpush1.xpose.msra.mxu0 0.0
    %2855 = vmatprep.subr.mxu0 0.0
    %2856 = vmatpush1.xpose.msra.mxu0 0.0
    %2857 = vmatprep.subr.mxu0 0.0
    %2858 = vmatpush1.xpose.msra.mxu0 0.0
    %2859 = vmatprep.subr.mxu0 0.0
    %2860 = vmatpush1.xpose.msra.mxu0 0.0
    %2861 = vmatprep.subr.mxu0 0.0
    %2862 = vmatpush1.xpose.msra.mxu0 0.0
    %2863 = vmatprep.subr.mxu0 0.0
    %2864 = vmatpush1.xpose.msra.mxu0 0.0
    %2865 = vmatprep.subr.mxu0 0.0
    %2866 = vmatpush1.xpose.msra.mxu0 0.0
    %2867 = vmatprep.subr.mxu0 0.0
    %2868 = vmatpush1.xpose.msra.mxu0 0.0
    %2869 = vmatprep.mubr.f32.mxu0 0.0
    %2870 = vmatmul.mubr.f32.gmra.mrb[0].mxu0 %v2800
    %v2871 = vpop.f32.mrb[0].mxu0
    %v2872 = vadd.f32 %v520, %v2871
    %v2873 = vpop.f32.mrb[0].mxu0
    %2874 = vdwg.mxu0
    %v2876 = vsel %vm524, %v2620, 0
    %v2879 = vsel %vm524, %v2708, 0
    %2881 = vmatprep.subr.mxu0 0.0
    %2882 = vmatpush1.xpose.msra.mxu0 %v2879
    %2883 = vmatprep.subr.mxu0 0.0
    %2884 = vmatpush1.xpose.msra.mxu0 0.0
    %2885 = vmatprep.subr.mxu0 0.0
    %2886 = vmatpush1.xpose.msra.mxu0 0.0
    %2887 = vmatprep.subr.mxu0 0.0
    %2888 = vmatpush1.xpose.msra.mxu0 0.0
    %2889 = vmatprep.subr.mxu0 0.0
    %2890 = vmatpush1.xpose.msra.mxu0 0.0
    %2891 = vmatprep.subr.mxu0 0.0
    %2892 = vmatpush1.xpose.msra.mxu0 0.0
    %2893 = vmatprep.subr.mxu0 0.0
    %2894 = vmatpush1.xpose.msra.mxu0 0.0
    %2895 = vmatprep.subr.mxu0 0.0
    %2896 = vmatpush1.xpose.msra.mxu0 0.0
    %2897 = vmatprep.subr.mxu0 0.0
    %2898 = vmatpush1.xpose.msra.mxu0 0.0
    %2899 = vmatprep.subr.mxu0 0.0
    %2900 = vmatpush1.xpose.msra.mxu0 0.0
    %2901 = vmatprep.subr.mxu0 0.0
    %2902 = vmatpush1.xpose.msra.mxu0 0.0
    %2903 = vmatprep.subr.mxu0 0.0
    %2904 = vmatpush1.xpose.msra.mxu0 0.0
    %2905 = vmatprep.subr.mxu0 0.0
    %2906 = vmatpush1.xpose.msra.mxu0 0.0
    %2907 = vmatprep.subr.mxu0 0.0
    %2908 = vmatpush1.xpose.msra.mxu0 0.0
    %2909 = vmatprep.subr.mxu0 0.0
    %2910 = vmatpush1.xpose.msra.mxu0 0.0
    %2911 = vmatprep.subr.mxu0 0.0
    %2912 = vmatpush1.xpose.msra.mxu0 0.0
    %2913 = vmatprep.subr.mxu0 0.0
    %2914 = vmatpush1.xpose.msra.mxu0 0.0
    %2915 = vmatprep.subr.mxu0 0.0
    %2916 = vmatpush1.xpose.msra.mxu0 0.0
    %2917 = vmatprep.subr.mxu0 0.0
    %2918 = vmatpush1.xpose.msra.mxu0 0.0
    %2919 = vmatprep.subr.mxu0 0.0
    %2920 = vmatpush1.xpose.msra.mxu0 0.0
    %2921 = vmatprep.subr.mxu0 0.0
    %2922 = vmatpush1.xpose.msra.mxu0 0.0
    %2923 = vmatprep.subr.mxu0 0.0
    %2924 = vmatpush1.xpose.msra.mxu0 0.0
    %2925 = vmatprep.subr.mxu0 0.0
    %2926 = vmatpush1.xpose.msra.mxu0 0.0
    %2927 = vmatprep.subr.mxu0 0.0
    %2928 = vmatpush1.xpose.msra.mxu0 0.0
    %2929 = vmatprep.subr.mxu0 0.0
    %2930 = vmatpush1.xpose.msra.mxu0 0.0
    %2931 = vmatprep.subr.mxu0 0.0
    %2932 = vmatpush1.xpose.msra.mxu0 0.0
    %2933 = vmatprep.subr.mxu0 0.0
    %2934 = vmatpush1.xpose.msra.mxu0 0.0
    %2935 = vmatprep.subr.mxu0 0.0
    %2936 = vmatpush1.xpose.msra.mxu0 0.0
    %2937 = vmatprep.subr.mxu0 0.0
    %2938 = vmatpush1.xpose.msra.mxu0 0.0
    %2939 = vmatprep.subr.mxu0 0.0
    %2940 = vmatpush1.xpose.msra.mxu0 0.0
    %2941 = vmatprep.subr.mxu0 0.0
    %2942 = vmatpush1.xpose.msra.mxu0 0.0
    %2943 = vmatprep.subr.mxu0 0.0
    %2944 = vmatpush1.xpose.msra.mxu0 0.0
    %2945 = vmatprep.mubr.f32.mxu0 0.0
    %2946 = vmatmul.mubr.f32.gmra.mrb[0].mxu0 %v2876
    %v2947 = vpop.f32.mrb[0].mxu0
    %v2948 = vadd.f32 %v521, %v2947
    %v2949 = vpop.f32.mrb[0].mxu0
    %2950 = vdwg.mxu0
    %v2951 = vsel %vm984, %v2872, -inf
    %2952 = vmax.xlane.f32.xlu0 %v2951
    %v2953 = vpop.xlane.xlu0 %2952
    %v2954 = vsel %vm984, %v2948, -inf
    %2955 = vmax.xlane.f32.xlu0 %v2954
    %v2956 = vpop.xlane.xlu0 %2955
    %v2957 = vsub.f32 %v2872, %v2953
    %v2958 = vsub.f32 %v2948, %v2956
    %v2959 = vmul.f32 %v2957, 1.442695
    %v2960 = vpow.pop %v2959
    %v2961 = vmul.f32 %v2958, 1.442695
    %v2962 = vpow.pop %v2961
    %v2963 = vmul.f32 %v2960, %v1002
    %v2964 = vmul.f32 %v2962, %v1006
    %v2965 = vsel %vm984, %v2963, 0.0
    %2966 = vadd.xlane.f32.xlu0 %v2965
    %v2967 = vpop.xlane.xlu0 %2966
    %v2968 = vsel %vm984, %v2964, 0.0
    %2969 = vadd.xlane.f32.xlu0 %v2968
    %v2970 = vpop.xlane.xlu0 %2969
    %v2971 = vrcp.pop %v2967
    %v2972 = vrcp.pop %v2970
    %v2973 = vmul.f32 %v2963, %v2971
    %v2974 = vmul.f32 %v2964, %v2972
    %v2976 = vsel %vm984, %v2973, 0
    %2978 = vmatprep.subr.mxu0 0.0
    %2979 = vmatpush1.msra.mxu0 %v2791
    %2980 = vmatprep.subr.mxu0 0.0
    %2981 = vmatpush1.msra.mxu0 0.0
    %2982 = vmatprep.subr.mxu0 0.0
    %2983 = vmatpush1.msra.mxu0 0.0
    %2984 = vmatprep.subr.mxu0 0.0
    %2985 = vmatpush1.msra.mxu0 0.0
    %2986 = vmatprep.subr.mxu0 0.0
    %2987 = vmatpush1.msra.mxu0 0.0
    %2988 = vmatprep.subr.mxu0 0.0
    %2989 = vmatpush1.msra.mxu0 0.0
    %2990 = vmatprep.subr.mxu0 0.0
    %2991 = vmatpush1.msra.mxu0 0.0
    %2992 = vmatprep.subr.mxu0 0.0
    %2993 = vmatpush1.msra.mxu0 0.0
    %2994 = vmatprep.subr.mxu0 0.0
    %2995 = vmatpush1.msra.mxu0 0.0
    %2996 = vmatprep.subr.mxu0 0.0
    %2997 = vmatpush1.msra.mxu0 0.0
    %2998 = vmatprep.subr.mxu0 0.0
    %2999 = vmatpush1.msra.mxu0 0.0
    %3000 = vmatprep.subr.mxu0 0.0
    %3001 = vmatpush1.msra.mxu0 0.0
    %3002 = vmatprep.subr.mxu0 0.0
    %3003 = vmatpush1.msra.mxu0 0.0
    %3004 = vmatprep.subr.mxu0 0.0
    %3005 = vmatpush1.msra.mxu0 0.0
    %3006 = vmatprep.subr.mxu0 0.0
    %3007 = vmatpush1.msra.mxu0 0.0
    %3008 = vmatprep.subr.mxu0 0.0
    %3009 = vmatpush1.msra.mxu0 0.0
    %3010 = vmatprep.subr.mxu0 0.0
    %3011 = vmatpush1.msra.mxu0 0.0
    %3012 = vmatprep.subr.mxu0 0.0
    %3013 = vmatpush1.msra.mxu0 0.0
    %3014 = vmatprep.subr.mxu0 0.0
    %3015 = vmatpush1.msra.mxu0 0.0
    %3016 = vmatprep.subr.mxu0 0.0
    %3017 = vmatpush1.msra.mxu0 0.0
    %3018 = vmatprep.subr.mxu0 0.0
    %3019 = vmatpush1.msra.mxu0 0.0
    %3020 = vmatprep.subr.mxu0 0.0
    %3021 = vmatpush1.msra.mxu0 0.0
    %3022 = vmatprep.subr.mxu0 0.0
    %3023 = vmatpush1.msra.mxu0 0.0
    %3024 = vmatprep.subr.mxu0 0.0
    %3025 = vmatpush1.msra.mxu0 0.0
    %3026 = vmatprep.subr.mxu0 0.0
    %3027 = vmatpush1.msra.mxu0 0.0
    %3028 = vmatprep.subr.mxu0 0.0
    %3029 = vmatpush1.msra.mxu0 0.0
    %3030 = vmatprep.subr.mxu0 0.0
    %3031 = vmatpush1.msra.mxu0 0.0
    %3032 = vmatprep.subr.mxu0 0.0
    %3033 = vmatpush1.msra.mxu0 0.0
    %3034 = vmatprep.subr.mxu0 0.0
    %3035 = vmatpush1.msra.mxu0 0.0
    %3036 = vmatprep.subr.mxu0 0.0
    %3037 = vmatpush1.msra.mxu0 0.0
    %3038 = vmatprep.subr.mxu0 0.0
    %3039 = vmatpush1.msra.mxu0 0.0
    %3040 = vmatprep.subr.mxu0 0.0
    %3041 = vmatpush1.msra.mxu0 0.0
    %3042 = vmatprep.mubr.f32.mxu0 0.0
    %3043 = vmatmul.mubr.f32.gmra.mrb[0].mxu0 %v2976
    %v3044 = vpop.f32.mrb[0].mxu0
    %v3045 = vadd.f32 0.0, %v3044
    %v3046 = vpop.f32.mrb[0].mxu0
    %3047 = vdwg.mxu0
    %v3049 = vsel %vm984, %v2974, 0
    %3051 = vmatprep.subr.mxu0 0.0
    %3052 = vmatpush1.msra.mxu0 %v2796
    %3053 = vmatprep.subr.mxu0 0.0
    %3054 = vmatpush1.msra.mxu0 0.0
    %3055 = vmatprep.subr.mxu0 0.0
    %3056 = vmatpush1.msra.mxu0 0.0
    %3057 = vmatprep.subr.mxu0 0.0
    %3058 = vmatpush1.msra.mxu0 0.0
    %3059 = vmatprep.subr.mxu0 0.0
    %3060 = vmatpush1.msra.mxu0 0.0
    %3061 = vmatprep.subr.mxu0 0.0
    %3062 = vmatpush1.msra.mxu0 0.0
    %3063 = vmatprep.subr.mxu0 0.0
    %3064 = vmatpush1.msra.mxu0 0.0
    %3065 = vmatprep.subr.mxu0 0.0
    %3066 = vmatpush1.msra.mxu0 0.0
    %3067 = vmatprep.subr.mxu0 0.0
    %3068 = vmatpush1.msra.mxu0 0.0
    %3069 = vmatprep.subr.mxu0 0.0
    %3070 = vmatpush1.msra.mxu0 0.0
    %3071 = vmatprep.subr.mxu0 0.0
    %3072 = vmatpush1.msra.mxu0 0.0
    %3073 = vmatprep.subr.mxu0 0.0
    %3074 = vmatpush1.msra.mxu0 0.0
    %3075 = vmatprep.subr.mxu0 0.0
    %3076 = vmatpush1.msra.mxu0 0.0
    %3077 = vmatprep.subr.mxu0 0.0
    %3078 = vmatpush1.msra.mxu0 0.0
    %3079 = vmatprep.subr.mxu0 0.0
    %3080 = vmatpush1.msra.mxu0 0.0
    %3081 = vmatprep.subr.mxu0 0.0
    %3082 = vmatpush1.msra.mxu0 0.0
    %3083 = vmatprep.subr.mxu0 0.0
    %3084 = vmatpush1.msra.mxu0 0.0
    %3085 = vmatprep.subr.mxu0 0.0
    %3086 = vmatpush1.msra.mxu0 0.0
    %3087 = vmatprep.subr.mxu0 0.0
    %3088 = vmatpush1.msra.mxu0 0.0
    %3089 = vmatprep.subr.mxu0 0.0
    %3090 = vmatpush1.msra.mxu0 0.0
    %3091 = vmatprep.subr.mxu0 0.0
    %3092 = vmatpush1.msra.mxu0 0.0
    %3093 = vmatprep.subr.mxu0 0.0
    %3094 = vmatpush1.msra.mxu0 0.0
    %3095 = vmatprep.subr.mxu0 0.0
    %3096 = vmatpush1.msra.mxu0 0.0
    %3097 = vmatprep.subr.mxu0 0.0
    %3098 = vmatpush1.msra.mxu0 0.0
    %3099 = vmatprep.subr.mxu0 0.0
    %3100 = vmatpush1.msra.mxu0 0.0
    %3101 = vmatprep.subr.mxu0 0.0
    %3102 = vmatpush1.msra.mxu0 0.0
    %3103 = vmatprep.subr.mxu0 0.0
    %3104 = vmatpush1.msra.mxu0 0.0
    %3105 = vmatprep.subr.mxu0 0.0
    %3106 = vmatpush1.msra.mxu0 0.0
    %3107 = vmatprep.subr.mxu0 0.0
    %3108 = vmatpush1.msra.mxu0 0.0
    %3109 = vmatprep.subr.mxu0 0.0
    %3110 = vmatpush1.msra.mxu0 0.0
    %3111 = vmatprep.subr.mxu0 0.0
    %3112 = vmatpush1.msra.mxu0 0.0
    %3113 = vmatprep.subr.mxu0 0.0
    %3114 = vmatpush1.msra.mxu0 0.0
    %3115 = vmatprep.mubr.f32.mxu0 0.0
    %3116 = vmatmul.mubr.f32.gmra.mrb[0].mxu0 %v3049
    %v3117 = vpop.f32.mrb[0].mxu0
    %v3118 = vadd.f32 0.0, %v3117
    %v3119 = vpop.f32.mrb[0].mxu0
    %3120 = vdwg.mxu0
    %3121 = vrot.lane.b32.xlu0 %v2615, 96
    %v3122 = vpop.permute.xlu0 %3121
    %3123 = vrot.lane.b32.xlu0 %v2703, 96
    %v3124 = vpop.permute.xlu0 %3123
    %v3125 = vsel %vm524, %v3122, 0
    %v3127 = vsel %vm524, %v3124, 0
    %3129 = vmatprep.subr.mxu0 0.0
    %3130 = vmatpush1.xpose.msra.mxu0 %v3127
    %3131 = vmatprep.subr.mxu0 0.0
    %3132 = vmatpush1.xpose.msra.mxu0 0.0
    %3133 = vmatprep.subr.mxu0 0.0
    %3134 = vmatpush1.xpose.msra.mxu0 0.0
    %3135 = vmatprep.subr.mxu0 0.0
    %3136 = vmatpush1.xpose.msra.mxu0 0.0
    %3137 = vmatprep.subr.mxu0 0.0
    %3138 = vmatpush1.xpose.msra.mxu0 0.0
    %3139 = vmatprep.subr.mxu0 0.0
    %3140 = vmatpush1.xpose.msra.mxu0 0.0
    %3141 = vmatprep.subr.mxu0 0.0
    %3142 = vmatpush1.xpose.msra.mxu0 0.0
    %3143 = vmatprep.subr.mxu0 0.0
    %3144 = vmatpush1.xpose.msra.mxu0 0.0
    %3145 = vmatprep.subr.mxu0 0.0
    %3146 = vmatpush1.xpose.msra.mxu0 0.0
    %3147 = vmatprep.subr.mxu0 0.0
    %3148 = vmatpush1.xpose.msra.mxu0 0.0
    %3149 = vmatprep.subr.mxu0 0.0
    %3150 = vmatpush1.xpose.msra.mxu0 0.0
    %3151 = vmatprep.subr.mxu0 0.0
    %3152 = vmatpush1.xpose.msra.mxu0 0.0
    %3153 = vmatprep.subr.mxu0 0.0
    %3154 = vmatpush1.xpose.msra.mxu0 0.0
    %3155 = vmatprep.subr.mxu0 0.0
    %3156 = vmatpush1.xpose.msra.mxu0 0.0
    %3157 = vmatprep.subr.mxu0 0.0
    %3158 = vmatpush1.xpose.msra.mxu0 0.0
    %3159 = vmatprep.subr.mxu0 0.0
    %3160 = vmatpush1.xpose.msra.mxu0 0.0
    %3161 = vmatprep.subr.mxu0 0.0
    %3162 = vmatpush1.xpose.msra.mxu0 0.0
    %3163 = vmatprep.subr.mxu0 0.0
    %3164 = vmatpush1.xpose.msra.mxu0 0.0
    %3165 = vmatprep.subr.mxu0 0.0
    %3166 = vmatpush1.xpose.msra.mxu0 0.0
    %3167 = vmatprep.subr.mxu0 0.0
    %3168 = vmatpush1.xpose.msra.mxu0 0.0
    %3169 = vmatprep.subr.mxu0 0.0
    %3170 = vmatpush1.xpose.msra.mxu0 0.0
    %3171 = vmatprep.subr.mxu0 0.0
    %3172 = vmatpush1.xpose.msra.mxu0 0.0
    %3173 = vmatprep.subr.mxu0 0.0
    %3174 = vmatpush1.xpose.msra.mxu0 0.0
    %3175 = vmatprep.subr.mxu0 0.0
    %3176 = vmatpush1.xpose.msra.mxu0 0.0
    %3177 = vmatprep.subr.mxu0 0.0
    %3178 = vmatpush1.xpose.msra.mxu0 0.0
    %3179 = vmatprep.subr.mxu0 0.0
    %3180 = vmatpush1.xpose.msra.mxu0 0.0
    %3181 = vmatprep.subr.mxu0 0.0
    %3182 = vmatpush1.xpose.msra.mxu0 0.0
    %3183 = vmatprep.subr.mxu0 0.0
    %3184 = vmatpush1.xpose.msra.mxu0 0.0
    %3185 = vmatprep.subr.mxu0 0.0
    %3186 = vmatpush1.xpose.msra.mxu0 0.0
    %3187 = vmatprep.subr.mxu0 0.0
    %3188 = vmatpush1.xpose.msra.mxu0 0.0
    %3189 = vmatprep.subr.mxu0 0.0
    %3190 = vmatpush1.xpose.msra.mxu0 0.0
    %3191 = vmatprep.subr.mxu0 0.0
    %3192 = vmatpush1.xpose.msra.mxu0 0.0
    %3193 = vmatprep.mubr.f32.mxu0 0.0
    %3194 = vmatmul.mubr.f32.gmra.mrb[0].mxu0 %v3125
    %v3195 = vpop.f32.mrb[0].mxu0
    %v3196 = vadd.f32 %v520, %v3195
    %v3197 = vpop.f32.mrb[0].mxu0
    %3198 = vdwg.mxu0
    %3199 = vrot.lane.b32.xlu0 %v2620, 96
    %v3200 = vpop.permute.xlu0 %3199
    %3201 = vrot.lane.b32.xlu0 %v2708, 96
    %v3202 = vpop.permute.xlu0 %3201
    %v3203 = vsel %vm524, %v3200, 0
    %v3205 = vsel %vm524, %v3202, 0
    %3207 = vmatprep.subr.mxu0 0.0
    %3208 = vmatpush1.xpose.msra.mxu0 %v3205
    %3209 = vmatprep.subr.mxu0 0.0
    %3210 = vmatpush1.xpose.msra.mxu0 0.0
    %3211 = vmatprep.subr.mxu0 0.0
    %3212 = vmatpush1.xpose.msra.mxu0 0.0
    %3213 = vmatprep.subr.mxu0 0.0
    %3214 = vmatpush1.xpose.msra.mxu0 0.0
    %3215 = vmatprep.subr.mxu0 0.0
    %3216 = vmatpush1.xpose.msra.mxu0 0.0
    %3217 = vmatprep.subr.mxu0 0.0
    %3218 = vmatpush1.xpose.msra.mxu0 0.0
    %3219 = vmatprep.subr.mxu0 0.0
    %3220 = vmatpush1.xpose.msra.mxu0 0.0
    %3221 = vmatprep.subr.mxu0 0.0
    %3222 = vmatpush1.xpose.msra.mxu0 0.0
    %3223 = vmatprep.subr.mxu0 0.0
    %3224 = vmatpush1.xpose.msra.mxu0 0.0
    %3225 = vmatprep.subr.mxu0 0.0
    %3226 = vmatpush1.xpose.msra.mxu0 0.0
    %3227 = vmatprep.subr.mxu0 0.0
    %3228 = vmatpush1.xpose.msra.mxu0 0.0
    %3229 = vmatprep.subr.mxu0 0.0
    %3230 = vmatpush1.xpose.msra.mxu0 0.0
    %3231 = vmatprep.subr.mxu0 0.0
    %3232 = vmatpush1.xpose.msra.mxu0 0.0
    %3233 = vmatprep.subr.mxu0 0.0
    %3234 = vmatpush1.xpose.msra.mxu0 0.0
    %3235 = vmatprep.subr.mxu0 0.0
    %3236 = vmatpush1.xpose.msra.mxu0 0.0
    %3237 = vmatprep.subr.mxu0 0.0
    %3238 = vmatpush1.xpose.msra.mxu0 0.0
    %3239 = vmatprep.subr.mxu0 0.0
    %3240 = vmatpush1.xpose.msra.mxu0 0.0
    %3241 = vmatprep.subr.mxu0 0.0
    %3242 = vmatpush1.xpose.msra.mxu0 0.0
    %3243 = vmatprep.subr.mxu0 0.0
    %3244 = vmatpush1.xpose.msra.mxu0 0.0
    %3245 = vmatprep.subr.mxu0 0.0
    %3246 = vmatpush1.xpose.msra.mxu0 0.0
    %3247 = vmatprep.subr.mxu0 0.0
    %3248 = vmatpush1.xpose.msra.mxu0 0.0
    %3249 = vmatprep.subr.mxu0 0.0
    %3250 = vmatpush1.xpose.msra.mxu0 0.0
    %3251 = vmatprep.subr.mxu0 0.0
    %3252 = vmatpush1.xpose.msra.mxu0 0.0
    %3253 = vmatprep.subr.mxu0 0.0
    %3254 = vmatpush1.xpose.msra.mxu0 0.0
    %3255 = vmatprep.subr.mxu0 0.0
    %3256 = vmatpush1.xpose.msra.mxu0 0.0
    %3257 = vmatprep.subr.mxu0 0.0
    %3258 = vmatpush1.xpose.msra.mxu0 0.0
    %3259 = vmatprep.subr.mxu0 0.0
    %3260 = vmatpush1.xpose.msra.mxu0 0.0
    %3261 = vmatprep.subr.mxu0 0.0
    %3262 = vmatpush1.xpose.msra.mxu0 0.0
    %3263 = vmatprep.subr.mxu0 0.0
    %3264 = vmatpush1.xpose.msra.mxu0 0.0
    %3265 = vmatprep.subr.mxu0 0.0
    %3266 = vmatpush1.xpose.msra.mxu0 0.0
    %3267 = vmatprep.subr.mxu0 0.0
    %3268 = vmatpush1.xpose.msra.mxu0 0.0
    %3269 = vmatprep.subr.mxu0 0.0
    %3270 = vmatpush1.xpose.msra.mxu0 0.0
    %3271 = vmatprep.mubr.f32.mxu0 0.0
    %3272 = vmatmul.mubr.f32.gmra.mrb[0].mxu0 %v3203
    %v3273 = vpop.f32.mrb[0].mxu0
    %v3274 = vadd.f32 %v521, %v3273
    %v3275 = vpop.f32.mrb[0].mxu0
    %3276 = vdwg.mxu0
    %v3277 = vsel %vm984, %v3196, -inf
    %3278 = vmax.xlane.f32.xlu0 %v3277
    %v3279 = vpop.xlane.xlu0 %3278
    %v3280 = vsel %vm984, %v3274, -inf
    %3281 = vmax.xlane.f32.xlu0 %v3280
    %v3282 = vpop.xlane.xlu0 %3281
    %v3283 = vsub.f32 %v3196, %v3279
    %v3284 = vsub.f32 %v3274, %v3282
    %v3285 = vmul.f32 %v3283, 1.442695
    %v3286 = vpow.pop %v3285
    %v3287 = vmul.f32 %v3284, 1.442695
    %v3288 = vpow.pop %v3287
    %v3289 = vmul.f32 %v3286, %v1002
    %v3290 = vmul.f32 %v3288, %v1006
    %v3291 = vsel %vm984, %v3289, 0.0
    %3292 = vadd.xlane.f32.xlu0 %v3291
    %v3293 = vpop.xlane.xlu0 %3292
    %v3294 = vsel %vm984, %v3290, 0.0
    %3295 = vadd.xlane.f32.xlu0 %v3294
    %v3296 = vpop.xlane.xlu0 %3295
    %v3297 = vrcp.pop %v3293
    %v3298 = vrcp.pop %v3296
    %v3299 = vmul.f32 %v3289, %v3297
    %v3300 = vmul.f32 %v3290, %v3298
    %3302 = vrot.lane.b32.xlu0 %v2791, 96
    %v3303 = vpop.permute.xlu0 %3302
    %v3306 = vsel %vm984, %v3299, 0
    %3308 = vmatprep.subr.mxu0 0.0
    %3309 = vmatpush1.msra.mxu0 %v3303
    %3310 = vmatprep.subr.mxu0 0.0
    %3311 = vmatpush1.msra.mxu0 0.0
    %3312 = vmatprep.subr.mxu0 0.0
    %3313 = vmatpush1.msra.mxu0 0.0
    %3314 = vmatprep.subr.mxu0 0.0
    %3315 = vmatpush1.msra.mxu0 0.0
    %3316 = vmatprep.subr.mxu0 0.0
    %3317 = vmatpush1.msra.mxu0 0.0
    %3318 = vmatprep.subr.mxu0 0.0
    %3319 = vmatpush1.msra.mxu0 0.0
    %3320 = vmatprep.subr.mxu0 0.0
    %3321 = vmatpush1.msra.mxu0 0.0
    %3322 = vmatprep.subr.mxu0 0.0
    %3323 = vmatpush1.msra.mxu0 0.0
    %3324 = vmatprep.subr.mxu0 0.0
    %3325 = vmatpush1.msra.mxu0 0.0
    %3326 = vmatprep.subr.mxu0 0.0
    %3327 = vmatpush1.msra.mxu0 0.0
    %3328 = vmatprep.subr.mxu0 0.0
    %3329 = vmatpush1.msra.mxu0 0.0
    %3330 = vmatprep.subr.mxu0 0.0
    %3331 = vmatpush1.msra.mxu0 0.0
    %3332 = vmatprep.subr.mxu0 0.0
    %3333 = vmatpush1.msra.mxu0 0.0
    %3334 = vmatprep.subr.mxu0 0.0
    %3335 = vmatpush1.msra.mxu0 0.0
    %3336 = vmatprep.subr.mxu0 0.0
    %3337 = vmatpush1.msra.mxu0 0.0
    %3338 = vmatprep.subr.mxu0 0.0
    %3339 = vmatpush1.msra.mxu0 0.0
    %3340 = vmatprep.subr.mxu0 0.0
    %3341 = vmatpush1.msra.mxu0 0.0
    %3342 = vmatprep.subr.mxu0 0.0
    %3343 = vmatpush1.msra.mxu0 0.0
    %3344 = vmatprep.subr.mxu0 0.0
    %3345 = vmatpush1.msra.mxu0 0.0
    %3346 = vmatprep.subr.mxu0 0.0
    %3347 = vmatpush1.msra.mxu0 0.0
    %3348 = vmatprep.subr.mxu0 0.0
    %3349 = vmatpush1.msra.mxu0 0.0
    %3350 = vmatprep.subr.mxu0 0.0
    %3351 = vmatpush1.msra.mxu0 0.0
    %3352 = vmatprep.subr.mxu0 0.0
    %3353 = vmatpush1.msra.mxu0 0.0
    %3354 = vmatprep.subr.mxu0 0.0
    %3355 = vmatpush1.msra.mxu0 0.0
    %3356 = vmatprep.subr.mxu0 0.0
    %3357 = vmatpush1.msra.mxu0 0.0
    %3358 = vmatprep.subr.mxu0 0.0
    %3359 = vmatpush1.msra.mxu0 0.0
    %3360 = vmatprep.subr.mxu0 0.0
    %3361 = vmatpush1.msra.mxu0 0.0
    %3362 = vmatprep.subr.mxu0 0.0
    %3363 = vmatpush1.msra.mxu0 0.0
    %3364 = vmatprep.subr.mxu0 0.0
    %3365 = vmatpush1.msra.mxu0 0.0
    %3366 = vmatprep.subr.mxu0 0.0
    %3367 = vmatpush1.msra.mxu0 0.0
    %3368 = vmatprep.subr.mxu0 0.0
    %3369 = vmatpush1.msra.mxu0 0.0
    %3370 = vmatprep.subr.mxu0 0.0
    %3371 = vmatpush1.msra.mxu0 0.0
    %3372 = vmatprep.mubr.f32.mxu0 0.0
    %3373 = vmatmul.mubr.f32.gmra.mrb[0].mxu0 %v3306
    %v3374 = vpop.f32.mrb[0].mxu0
    %v3375 = vadd.f32 0.0, %v3374
    %v3376 = vpop.f32.mrb[0].mxu0
    %3377 = vdwg.mxu0
    %3379 = vrot.lane.b32.xlu0 %v2796, 96
    %v3380 = vpop.permute.xlu0 %3379
    %v3383 = vsel %vm984, %v3300, 0
    %3385 = vmatprep.subr.mxu0 0.0
    %3386 = vmatpush1.msra.mxu0 %v3380
    %3387 = vmatprep.subr.mxu0 0.0
    %3388 = vmatpush1.msra.mxu0 0.0
    %3389 = vmatprep.subr.mxu0 0.0
    %3390 = vmatpush1.msra.mxu0 0.0
    %3391 = vmatprep.subr.mxu0 0.0
    %3392 = vmatpush1.msra.mxu0 0.0
    %3393 = vmatprep.subr.mxu0 0.0
    %3394 = vmatpush1.msra.mxu0 0.0
    %3395 = vmatprep.subr.mxu0 0.0
    %3396 = vmatpush1.msra.mxu0 0.0
    %3397 = vmatprep.subr.mxu0 0.0
    %3398 = vmatpush1.msra.mxu0 0.0
    %3399 = vmatprep.subr.mxu0 0.0
    %3400 = vmatpush1.msra.mxu0 0.0
    %3401 = vmatprep.subr.mxu0 0.0
    %3402 = vmatpush1.msra.mxu0 0.0
    %3403 = vmatprep.subr.mxu0 0.0
    %3404 = vmatpush1.msra.mxu0 0.0
    %3405 = vmatprep.subr.mxu0 0.0
    %3406 = vmatpush1.msra.mxu0 0.0
    %3407 = vmatprep.subr.mxu0 0.0
    %3408 = vmatpush1.msra.mxu0 0.0
    %3409 = vmatprep.subr.mxu0 0.0
    %3410 = vmatpush1.msra.mxu0 0.0
    %3411 = vmatprep.subr.mxu0 0.0
    %3412 = vmatpush1.msra.mxu0 0.0
    %3413 = vmatprep.subr.mxu0 0.0
    %3414 = vmatpush1.msra.mxu0 0.0
    %3415 = vmatprep.subr.mxu0 0.0
    %3416 = vmatpush1.msra.mxu0 0.0
    %3417 = vmatprep.subr.mxu0 0.0
    %3418 = vmatpush1.msra.mxu0 0.0
    %3419 = vmatprep.subr.mxu0 0.0
    %3420 = vmatpush1.msra.mxu0 0.0
    %3421 = vmatprep.subr.mxu0 0.0
    %3422 = vmatpush1.msra.mxu0 0.0
    %3423 = vmatprep.subr.mxu0 0.0
    %3424 = vmatpush1.msra.mxu0 0.0
    %3425 = vmatprep.subr.mxu0 0.0
    %3426 = vmatpush1.msra.mxu0 0.0
    %3427 = vmatprep.subr.mxu0 0.0
    %3428 = vmatpush1.msra.mxu0 0.0
    %3429 = vmatprep.subr.mxu0 0.0
    %3430 = vmatpush1.msra.mxu0 0.0
    %3431 = vmatprep.subr.mxu0 0.0
    %3432 = vmatpush1.msra.mxu0 0.0
    %3433 = vmatprep.subr.mxu0 0.0
    %3434 = vmatpush1.msra.mxu0 0.0
    %3435 = vmatprep.subr.mxu0 0.0
    %3436 = vmatpush1.msra.mxu0 0.0
    %3437 = vmatprep.subr.mxu0 0.0
    %3438 = vmatpush1.msra.mxu0 0.0
    %3439 = vmatprep.subr.mxu0 0.0
    %3440 = vmatpush1.msra.mxu0 0.0
    %3441 = vmatprep.subr.mxu0 0.0
    %3442 = vmatpush1.msra.mxu0 0.0
    %3443 = vmatprep.subr.mxu0 0.0
    %3444 = vmatpush1.msra.mxu0 0.0
    %3445 = vmatprep.subr.mxu0 0.0
    %3446 = vmatpush1.msra.mxu0 0.0
    %3447 = vmatprep.subr.mxu0 0.0
    %3448 = vmatpush1.msra.mxu0 0.0
    %3449 = vmatprep.mubr.f32.mxu0 0.0
    %3450 = vmatmul.mubr.f32.gmra.mrb[0].mxu0 %v3383
    %v3451 = vpop.f32.mrb[0].mxu0
    %v3452 = vadd.f32 0.0, %v3451
    %v3453 = vpop.f32.mrb[0].mxu0
    %3454 = vdwg.mxu0
    %3455 = vrot.lane.b32.xlu0 %v2615, 64
    %v3456 = vpop.permute.xlu0 %3455
    %3457 = vrot.lane.b32.xlu0 %v2703, 64
    %v3458 = vpop.permute.xlu0 %3457
    %v3459 = vsel %vm524, %v3456, 0
    %v3461 = vsel %vm524, %v3458, 0
    %3463 = vmatprep.subr.mxu0 0.0
    %3464 = vmatpush1.xpose.msra.mxu0 %v3461
    %3465 = vmatprep.subr.mxu0 0.0
    %3466 = vmatpush1.xpose.msra.mxu0 0.0
    %3467 = vmatprep.subr.mxu0 0.0
    %3468 = vmatpush1.xpose.msra.mxu0 0.0
    %3469 = vmatprep.subr.mxu0 0.0
    %3470 = vmatpush1.xpose.msra.mxu0 0.0
    %3471 = vmatprep.subr.mxu0 0.0
    %3472 = vmatpush1.xpose.msra.mxu0 0.0
    %3473 = vmatprep.subr.mxu0 0.0
    %3474 = vmatpush1.xpose.msra.mxu0 0.0
    %3475 = vmatprep.subr.mxu0 0.0
    %3476 = vmatpush1.xpose.msra.mxu0 0.0
    %3477 = vmatprep.subr.mxu0 0.0
    %3478 = vmatpush1.xpose.msra.mxu0 0.0
    %3479 = vmatprep.subr.mxu0 0.0
    %3480 = vmatpush1.xpose.msra.mxu0 0.0
    %3481 = vmatprep.subr.mxu0 0.0
    %3482 = vmatpush1.xpose.msra.mxu0 0.0
    %3483 = vmatprep.subr.mxu0 0.0
    %3484 = vmatpush1.xpose.msra.mxu0 0.0
    %3485 = vmatprep.subr.mxu0 0.0
    %3486 = vmatpush1.xpose.msra.mxu0 0.0
    %3487 = vmatprep.subr.mxu0 0.0
    %3488 = vmatpush1.xpose.msra.mxu0 0.0
    %3489 = vmatprep.subr.mxu0 0.0
    %3490 = vmatpush1.xpose.msra.mxu0 0.0
    %3491 = vmatprep.subr.mxu0 0.0
    %3492 = vmatpush1.xpose.msra.mxu0 0.0
    %3493 = vmatprep.subr.mxu0 0.0
    %3494 = vmatpush1.xpose.msra.mxu0 0.0
    %3495 = vmatprep.subr.mxu0 0.0
    %3496 = vmatpush1.xpose.msra.mxu0 0.0
    %3497 = vmatprep.subr.mxu0 0.0
    %3498 = vmatpush1.xpose.msra.mxu0 0.0
    %3499 = vmatprep.subr.mxu0 0.0
    %3500 = vmatpush1.xpose.msra.mxu0 0.0
    %3501 = vmatprep.subr.mxu0 0.0
    %3502 = vmatpush1.xpose.msra.mxu0 0.0
    %3503 = vmatprep.subr.mxu0 0.0
    %3504 = vmatpush1.xpose.msra.mxu0 0.0
    %3505 = vmatprep.subr.mxu0 0.0
    %3506 = vmatpush1.xpose.msra.mxu0 0.0
    %3507 = vmatprep.subr.mxu0 0.0
    %3508 = vmatpush1.xpose.msra.mxu0 0.0
    %3509 = vmatprep.subr.mxu0 0.0
    %3510 = vmatpush1.xpose.msra.mxu0 0.0
    %3511 = vmatprep.subr.mxu0 0.0
    %3512 = vmatpush1.xpose.msra.mxu0 0.0
    %3513 = vmatprep.subr.mxu0 0.0
    %3514 = vmatpush1.xpose.msra.mxu0 0.0
    %3515 = vmatprep.subr.mxu0 0.0
    %3516 = vmatpush1.xpose.msra.mxu0 0.0
    %3517 = vmatprep.subr.mxu0 0.0
    %3518 = vmatpush1.xpose.msra.mxu0 0.0
    %3519 = vmatprep.subr.mxu0 0.0
    %3520 = vmatpush1.xpose.msra.mxu0 0.0
    %3521 = vmatprep.subr.mxu0 0.0
    %3522 = vmatpush1.xpose.msra.mxu0 0.0
    %3523 = vmatprep.subr.mxu0 0.0
    %3524 = vmatpush1.xpose.msra.mxu0 0.0
    %3525 = vmatprep.subr.mxu0 0.0
    %3526 = vmatpush1.xpose.msra.mxu0 0.0
    %3527 = vmatprep.mubr.f32.mxu0 0.0
    %3528 = vmatmul.mubr.f32.gmra.mrb[0].mxu0 %v3459
    %v3529 = vpop.f32.mrb[0].mxu0
    %v3530 = vadd.f32 %v520, %v3529
    %v3531 = vpop.f32.mrb[0].mxu0
    %3532 = vdwg.mxu0
    %3533 = vrot.lane.b32.xlu0 %v2620, 64
    %v3534 = vpop.permute.xlu0 %3533
    %3535 = vrot.lane.b32.xlu0 %v2708, 64
    %v3536 = vpop.permute.xlu0 %3535
    %v3537 = vsel %vm524, %v3534, 0
    %v3539 = vsel %vm524, %v3536, 0
    %3541 = vmatprep.subr.mxu0 0.0
    %3542 = vmatpush1.xpose.msra.mxu0 %v3539
    %3543 = vmatprep.subr.mxu0 0.0
    %3544 = vmatpush1.xpose.msra.mxu0 0.0
    %3545 = vmatprep.subr.mxu0 0.0
    %3546 = vmatpush1.xpose.msra.mxu0 0.0
    %3547 = vmatprep.subr.mxu0 0.0
    %3548 = vmatpush1.xpose.msra.mxu0 0.0
    %3549 = vmatprep.subr.mxu0 0.0
    %3550 = vmatpush1.xpose.msra.mxu0 0.0
    %3551 = vmatprep.subr.mxu0 0.0
    %3552 = vmatpush1.xpose.msra.mxu0 0.0
    %3553 = vmatprep.subr.mxu0 0.0
    %3554 = vmatpush1.xpose.msra.mxu0 0.0
    %3555 = vmatprep.subr.mxu0 0.0
    %3556 = vmatpush1.xpose.msra.mxu0 0.0
    %3557 = vmatprep.subr.mxu0 0.0
    %3558 = vmatpush1.xpose.msra.mxu0 0.0
    %3559 = vmatprep.subr.mxu0 0.0
    %3560 = vmatpush1.xpose.msra.mxu0 0.0
    %3561 = vmatprep.subr.mxu0 0.0
    %3562 = vmatpush1.xpose.msra.mxu0 0.0
    %3563 = vmatprep.subr.mxu0 0.0
    %3564 = vmatpush1.xpose.msra.mxu0 0.0
    %3565 = vmatprep.subr.mxu0 0.0
    %3566 = vmatpush1.xpose.msra.mxu0 0.0
    %3567 = vmatprep.subr.mxu0 0.0
    %3568 = vmatpush1.xpose.msra.mxu0 0.0
    %3569 = vmatprep.subr.mxu0 0.0
    %3570 = vmatpush1.xpose.msra.mxu0 0.0
    %3571 = vmatprep.subr.mxu0 0.0
    %3572 = vmatpush1.xpose.msra.mxu0 0.0
    %3573 = vmatprep.subr.mxu0 0.0
    %3574 = vmatpush1.xpose.msra.mxu0 0.0
    %3575 = vmatprep.subr.mxu0 0.0
    %3576 = vmatpush1.xpose.msra.mxu0 0.0
    %3577 = vmatprep.subr.mxu0 0.0
    %3578 = vmatpush1.xpose.msra.mxu0 0.0
    %3579 = vmatprep.subr.mxu0 0.0
    %3580 = vmatpush1.xpose.msra.mxu0 0.0
    %3581 = vmatprep.subr.mxu0 0.0
    %3582 = vmatpush1.xpose.msra.mxu0 0.0
    %3583 = vmatprep.subr.mxu0 0.0
    %3584 = vmatpush1.xpose.msra.mxu0 0.0
    %3585 = vmatprep.subr.mxu0 0.0
    %3586 = vmatpush1.xpose.msra.mxu0 0.0
    %3587 = vmatprep.subr.mxu0 0.0
    %3588 = vmatpush1.xpose.msra.mxu0 0.0
    %3589 = vmatprep.subr.mxu0 0.0
    %3590 = vmatpush1.xpose.msra.mxu0 0.0
    %3591 = vmatprep.subr.mxu0 0.0
    %3592 = vmatpush1.xpose.msra.mxu0 0.0
    %3593 = vmatprep.subr.mxu0 0.0
    %3594 = vmatpush1.xpose.msra.mxu0 0.0
    %3595 = vmatprep.subr.mxu0 0.0
    %3596 = vmatpush1.xpose.msra.mxu0 0.0
    %3597 = vmatprep.subr.mxu0 0.0
    %3598 = vmatpush1.xpose.msra.mxu0 0.0
    %3599 = vmatprep.subr.mxu0 0.0
    %3600 = vmatpush1.xpose.msra.mxu0 0.0
    %3601 = vmatprep.subr.mxu0 0.0
    %3602 = vmatpush1.xpose.msra.mxu0 0.0
    %3603 = vmatprep.subr.mxu0 0.0
    %3604 = vmatpush1.xpose.msra.mxu0 0.0
    %3605 = vmatprep.mubr.f32.mxu0 0.0
    %3606 = vmatmul.mubr.f32.gmra.mrb[0].mxu0 %v3537
    %v3607 = vpop.f32.mrb[0].mxu0
    %v3608 = vadd.f32 %v521, %v3607
    %v3609 = vpop.f32.mrb[0].mxu0
    %3610 = vdwg.mxu0
    %v3611 = vsel %vm984, %v3530, -inf
    %3612 = vmax.xlane.f32.xlu0 %v3611
    %v3613 = vpop.xlane.xlu0 %3612
    %v3614 = vsel %vm984, %v3608, -inf
    %3615 = vmax.xlane.f32.xlu0 %v3614
    %v3616 = vpop.xlane.xlu0 %3615
    %v3617 = vsub.f32 %v3530, %v3613
    %v3618 = vsub.f32 %v3608, %v3616
    %v3619 = vmul.f32 %v3617, 1.442695
    %v3620 = vpow.pop %v3619
    %v3621 = vmul.f32 %v3618, 1.442695
    %v3622 = vpow.pop %v3621
    %v3623 = vmul.f32 %v3620, %v1002
    %v3624 = vmul.f32 %v3622, %v1006
    %v3625 = vsel %vm984, %v3623, 0.0
    %3626 = vadd.xlane.f32.xlu0 %v3625
    %v3627 = vpop.xlane.xlu0 %3626
    %v3628 = vsel %vm984, %v3624, 0.0
    %3629 = vadd.xlane.f32.xlu0 %v3628
    %v3630 = vpop.xlane.xlu0 %3629
    %v3631 = vrcp.pop %v3627
    %v3632 = vrcp.pop %v3630
    %v3633 = vmul.f32 %v3623, %v3631
    %v3634 = vmul.f32 %v3624, %v3632
    %3635 = vrot.lane.b32.xlu0 %v2791, 64
    %v3636 = vpop.permute.xlu0 %3635
    %v3639 = vsel %vm984, %v3633, 0
    %3641 = vmatprep.subr.mxu0 0.0
    %3642 = vmatpush1.msra.mxu0 %v3636
    %3643 = vmatprep.subr.mxu0 0.0
    %3644 = vmatpush1.msra.mxu0 0.0
    %3645 = vmatprep.subr.mxu0 0.0
    %3646 = vmatpush1.msra.mxu0 0.0
    %3647 = vmatprep.subr.mxu0 0.0
    %3648 = vmatpush1.msra.mxu0 0.0
    %3649 = vmatprep.subr.mxu0 0.0
    %3650 = vmatpush1.msra.mxu0 0.0
    %3651 = vmatprep.subr.mxu0 0.0
    %3652 = vmatpush1.msra.mxu0 0.0
    %3653 = vmatprep.subr.mxu0 0.0
    %3654 = vmatpush1.msra.mxu0 0.0
    %3655 = vmatprep.subr.mxu0 0.0
    %3656 = vmatpush1.msra.mxu0 0.0
    %3657 = vmatprep.subr.mxu0 0.0
    %3658 = vmatpush1.msra.mxu0 0.0
    %3659 = vmatprep.subr.mxu0 0.0
    %3660 = vmatpush1.msra.mxu0 0.0
    %3661 = vmatprep.subr.mxu0 0.0
    %3662 = vmatpush1.msra.mxu0 0.0
    %3663 = vmatprep.subr.mxu0 0.0
    %3664 = vmatpush1.msra.mxu0 0.0
    %3665 = vmatprep.subr.mxu0 0.0
    %3666 = vmatpush1.msra.mxu0 0.0
    %3667 = vmatprep.subr.mxu0 0.0
    %3668 = vmatpush1.msra.mxu0 0.0
    %3669 = vmatprep.subr.mxu0 0.0
    %3670 = vmatpush1.msra.mxu0 0.0
    %3671 = vmatprep.subr.mxu0 0.0
    %3672 = vmatpush1.msra.mxu0 0.0
    %3673 = vmatprep.subr.mxu0 0.0
    %3674 = vmatpush1.msra.mxu0 0.0
    %3675 = vmatprep.subr.mxu0 0.0
    %3676 = vmatpush1.msra.mxu0 0.0
    %3677 = vmatprep.subr.mxu0 0.0
    %3678 = vmatpush1.msra.mxu0 0.0
    %3679 = vmatprep.subr.mxu0 0.0
    %3680 = vmatpush1.msra.mxu0 0.0
    %3681 = vmatprep.subr.mxu0 0.0
    %3682 = vmatpush1.msra.mxu0 0.0
    %3683 = vmatprep.subr.mxu0 0.0
    %3684 = vmatpush1.msra.mxu0 0.0
    %3685 = vmatprep.subr.mxu0 0.0
    %3686 = vmatpush1.msra.mxu0 0.0
    %3687 = vmatprep.subr.mxu0 0.0
    %3688 = vmatpush1.msra.mxu0 0.0
    %3689 = vmatprep.subr.mxu0 0.0
    %3690 = vmatpush1.msra.mxu0 0.0
    %3691 = vmatprep.subr.mxu0 0.0
    %3692 = vmatpush1.msra.mxu0 0.0
    %3693 = vmatprep.subr.mxu0 0.0
    %3694 = vmatpush1.msra.mxu0 0.0
    %3695 = vmatprep.subr.mxu0 0.0
    %3696 = vmatpush1.msra.mxu0 0.0
    %3697 = vmatprep.subr.mxu0 0.0
    %3698 = vmatpush1.msra.mxu0 0.0
    %3699 = vmatprep.subr.mxu0 0.0
    %3700 = vmatpush1.msra.mxu0 0.0
    %3701 = vmatprep.subr.mxu0 0.0
    %3702 = vmatpush1.msra.mxu0 0.0
    %3703 = vmatprep.subr.mxu0 0.0
    %3704 = vmatpush1.msra.mxu0 0.0
    %3705 = vmatprep.mubr.f32.mxu0 0.0
    %3706 = vmatmul.mubr.f32.gmra.mrb[0].mxu0 %v3639
    %v3707 = vpop.f32.mrb[0].mxu0
    %v3708 = vadd.f32 0.0, %v3707
    %v3709 = vpop.f32.mrb[0].mxu0
    %3710 = vdwg.mxu0
    %3711 = vrot.lane.b32.xlu0 %v2796, 64
    %v3712 = vpop.permute.xlu0 %3711
    %v3715 = vsel %vm984, %v3634, 0
    %3717 = vmatprep.subr.mxu0 0.0
    %3718 = vmatpush1.msra.mxu0 %v3712
    %3719 = vmatprep.subr.mxu0 0.0
    %3720 = vmatpush1.msra.mxu0 0.0
    %3721 = vmatprep.subr.mxu0 0.0
    %3722 = vmatpush1.msra.mxu0 0.0
    %3723 = vmatprep.subr.mxu0 0.0
    %3724 = vmatpush1.msra.mxu0 0.0
    %3725 = vmatprep.subr.mxu0 0.0
    %3726 = vmatpush1.msra.mxu0 0.0
    %3727 = vmatprep.subr.mxu0 0.0
    %3728 = vmatpush1.msra.mxu0 0.0
    %3729 = vmatprep.subr.mxu0 0.0
    %3730 = vmatpush1.msra.mxu0 0.0
    %3731 = vmatprep.subr.mxu0 0.0
    %3732 = vmatpush1.msra.mxu0 0.0
    %3733 = vmatprep.subr.mxu0 0.0
    %3734 = vmatpush1.msra.mxu0 0.0
    %3735 = vmatprep.subr.mxu0 0.0
    %3736 = vmatpush1.msra.mxu0 0.0
    %3737 = vmatprep.subr.mxu0 0.0
    %3738 = vmatpush1.msra.mxu0 0.0
    %3739 = vmatprep.subr.mxu0 0.0
    %3740 = vmatpush1.msra.mxu0 0.0
    %3741 = vmatprep.subr.mxu0 0.0
    %3742 = vmatpush1.msra.mxu0 0.0
    %3743 = vmatprep.subr.mxu0 0.0
    %3744 = vmatpush1.msra.mxu0 0.0
    %3745 = vmatprep.subr.mxu0 0.0
    %3746 = vmatpush1.msra.mxu0 0.0
    %3747 = vmatprep.subr.mxu0 0.0
    %3748 = vmatpush1.msra.mxu0 0.0
    %3749 = vmatprep.subr.mxu0 0.0
    %3750 = vmatpush1.msra.mxu0 0.0
    %3751 = vmatprep.subr.mxu0 0.0
    %3752 = vmatpush1.msra.mxu0 0.0
    %3753 = vmatprep.subr.mxu0 0.0
    %3754 = vmatpush1.msra.mxu0 0.0
    %3755 = vmatprep.subr.mxu0 0.0
    %3756 = vmatpush1.msra.mxu0 0.0
    %3757 = vmatprep.subr.mxu0 0.0
    %3758 = vmatpush1.msra.mxu0 0.0
    %3759 = vmatprep.subr.mxu0 0.0
    %3760 = vmatpush1.msra.mxu0 0.0
    %3761 = vmatprep.subr.mxu0 0.0
    %3762 = vmatpush1.msra.mxu0 0.0
    %3763 = vmatprep.subr.mxu0 0.0
    %3764 = vmatpush1.msra.mxu0 0.0
    %3765 = vmatprep.subr.mxu0 0.0
    %3766 = vmatpush1.msra.mxu0 0.0
    %3767 = vmatprep.subr.mxu0 0.0
    %3768 = vmatpush1.msra.mxu0 0.0
    %3769 = vmatprep.subr.mxu0 0.0
    %3770 = vmatpush1.msra.mxu0 0.0
    %3771 = vmatprep.subr.mxu0 0.0
    %3772 = vmatpush1.msra.mxu0 0.0
    %3773 = vmatprep.subr.mxu0 0.0
    %3774 = vmatpush1.msra.mxu0 0.0
    %3775 = vmatprep.subr.mxu0 0.0
    %3776 = vmatpush1.msra.mxu0 0.0
    %3777 = vmatprep.subr.mxu0 0.0
    %3778 = vmatpush1.msra.mxu0 0.0
    %3779 = vmatprep.subr.mxu0 0.0
    %3780 = vmatpush1.msra.mxu0 0.0
    %3781 = vmatprep.mubr.f32.mxu0 0.0
    %3782 = vmatmul.mubr.f32.gmra.mrb[0].mxu0 %v3715
    %v3783 = vpop.f32.mrb[0].mxu0
    %v3784 = vadd.f32 0.0, %v3783
    %v3785 = vpop.f32.mrb[0].mxu0
    %3786 = vdwg.mxu0
    %3787 = vrot.lane.b32.xlu0 %v2615, 32
    %v3788 = vpop.permute.xlu0 %3787
    %3789 = vrot.lane.b32.xlu0 %v2703, 32
    %v3790 = vpop.permute.xlu0 %3789
    %v3791 = vsel %vm524, %v3788, 0
    %v3793 = vsel %vm524, %v3790, 0
    %3795 = vmatprep.subr.mxu0 0.0
    %3796 = vmatpush1.xpose.msra.mxu0 %v3793
    %3797 = vmatprep.subr.mxu0 0.0
    %3798 = vmatpush1.xpose.msra.mxu0 0.0
    %3799 = vmatprep.subr.mxu0 0.0
    %3800 = vmatpush1.xpose.msra.mxu0 0.0
    %3801 = vmatprep.subr.mxu0 0.0
    %3802 = vmatpush1.xpose.msra.mxu0 0.0
    %3803 = vmatprep.subr.mxu0 0.0
    %3804 = vmatpush1.xpose.msra.mxu0 0.0
    %3805 = vmatprep.subr.mxu0 0.0
    %3806 = vmatpush1.xpose.msra.mxu0 0.0
    %3807 = vmatprep.subr.mxu0 0.0
    %3808 = vmatpush1.xpose.msra.mxu0 0.0
    %3809 = vmatprep.subr.mxu0 0.0
    %3810 = vmatpush1.xpose.msra.mxu0 0.0
    %3811 = vmatprep.subr.mxu0 0.0
    %3812 = vmatpush1.xpose.msra.mxu0 0.0
    %3813 = vmatprep.subr.mxu0 0.0
    %3814 = vmatpush1.xpose.msra.mxu0 0.0
    %3815 = vmatprep.subr.mxu0 0.0
    %3816 = vmatpush1.xpose.msra.mxu0 0.0
    %3817 = vmatprep.subr.mxu0 0.0
    %3818 = vmatpush1.xpose.msra.mxu0 0.0
    %3819 = vmatprep.subr.mxu0 0.0
    %3820 = vmatpush1.xpose.msra.mxu0 0.0
    %3821 = vmatprep.subr.mxu0 0.0
    %3822 = vmatpush1.xpose.msra.mxu0 0.0
    %3823 = vmatprep.subr.mxu0 0.0
    %3824 = vmatpush1.xpose.msra.mxu0 0.0
    %3825 = vmatprep.subr.mxu0 0.0
    %3826 = vmatpush1.xpose.msra.mxu0 0.0
    %3827 = vmatprep.subr.mxu0 0.0
    %3828 = vmatpush1.xpose.msra.mxu0 0.0
    %3829 = vmatprep.subr.mxu0 0.0
    %3830 = vmatpush1.xpose.msra.mxu0 0.0
    %3831 = vmatprep.subr.mxu0 0.0
    %3832 = vmatpush1.xpose.msra.mxu0 0.0
    %3833 = vmatprep.subr.mxu0 0.0
    %3834 = vmatpush1.xpose.msra.mxu0 0.0
    %3835 = vmatprep.subr.mxu0 0.0
    %3836 = vmatpush1.xpose.msra.mxu0 0.0
    %3837 = vmatprep.subr.mxu0 0.0
    %3838 = vmatpush1.xpose.msra.mxu0 0.0
    %3839 = vmatprep.subr.mxu0 0.0
    %3840 = vmatpush1.xpose.msra.mxu0 0.0
    %3841 = vmatprep.subr.mxu0 0.0
    %3842 = vmatpush1.xpose.msra.mxu0 0.0
    %3843 = vmatprep.subr.mxu0 0.0
    %3844 = vmatpush1.xpose.msra.mxu0 0.0
    %3845 = vmatprep.subr.mxu0 0.0
    %3846 = vmatpush1.xpose.msra.mxu0 0.0
    %3847 = vmatprep.subr.mxu0 0.0
    %3848 = vmatpush1.xpose.msra.mxu0 0.0
    %3849 = vmatprep.subr.mxu0 0.0
    %3850 = vmatpush1.xpose.msra.mxu0 0.0
    %3851 = vmatprep.subr.mxu0 0.0
    %3852 = vmatpush1.xpose.msra.mxu0 0.0
    %3853 = vmatprep.subr.mxu0 0.0
    %3854 = vmatpush1.xpose.msra.mxu0 0.0
    %3855 = vmatprep.subr.mxu0 0.0
    %3856 = vmatpush1.xpose.msra.mxu0 0.0
    %3857 = vmatprep.subr.mxu0 0.0
    %3858 = vmatpush1.xpose.msra.mxu0 0.0
    %3859 = vmatprep.mubr.f32.mxu0 0.0
    %3860 = vmatmul.mubr.f32.gmra.mrb[0].mxu0 %v3791
    %v3861 = vpop.f32.mrb[0].mxu0
    %v3862 = vadd.f32 %v520, %v3861
    %v3863 = vpop.f32.mrb[0].mxu0
    %3864 = vdwg.mxu0
    %3865 = vrot.lane.b32.xlu0 %v2620, 32
    %v3866 = vpop.permute.xlu0 %3865
    %3867 = vrot.lane.b32.xlu0 %v2708, 32
    %v3868 = vpop.permute.xlu0 %3867
    %v3869 = vsel %vm524, %v3866, 0
    %v3871 = vsel %vm524, %v3868, 0
    %3873 = vmatprep.subr.mxu0 0.0
    %3874 = vmatpush1.xpose.msra.mxu0 %v3871
    %3875 = vmatprep.subr.mxu0 0.0
    %3876 = vmatpush1.xpose.msra.mxu0 0.0
    %3877 = vmatprep.subr.mxu0 0.0
    %3878 = vmatpush1.xpose.msra.mxu0 0.0
    %3879 = vmatprep.subr.mxu0 0.0
    %3880 = vmatpush1.xpose.msra.mxu0 0.0
    %3881 = vmatprep.subr.mxu0 0.0
    %3882 = vmatpush1.xpose.msra.mxu0 0.0
    %3883 = vmatprep.subr.mxu0 0.0
    %3884 = vmatpush1.xpose.msra.mxu0 0.0
    %3885 = vmatprep.subr.mxu0 0.0
    %3886 = vmatpush1.xpose.msra.mxu0 0.0
    %3887 = vmatprep.subr.mxu0 0.0
    %3888 = vmatpush1.xpose.msra.mxu0 0.0
    %3889 = vmatprep.subr.mxu0 0.0
    %3890 = vmatpush1.xpose.msra.mxu0 0.0
    %3891 = vmatprep.subr.mxu0 0.0
    %3892 = vmatpush1.xpose.msra.mxu0 0.0
    %3893 = vmatprep.subr.mxu0 0.0
    %3894 = vmatpush1.xpose.msra.mxu0 0.0
    %3895 = vmatprep.subr.mxu0 0.0
    %3896 = vmatpush1.xpose.msra.mxu0 0.0
    %3897 = vmatprep.subr.mxu0 0.0
    %3898 = vmatpush1.xpose.msra.mxu0 0.0
    %3899 = vmatprep.subr.mxu0 0.0
    %3900 = vmatpush1.xpose.msra.mxu0 0.0
    %3901 = vmatprep.subr.mxu0 0.0
    %3902 = vmatpush1.xpose.msra.mxu0 0.0
    %3903 = vmatprep.subr.mxu0 0.0
    %3904 = vmatpush1.xpose.msra.mxu0 0.0
    %3905 = vmatprep.subr.mxu0 0.0
    %3906 = vmatpush1.xpose.msra.mxu0 0.0
    %3907 = vmatprep.subr.mxu0 0.0
    %3908 = vmatpush1.xpose.msra.mxu0 0.0
    %3909 = vmatprep.subr.mxu0 0.0
    %3910 = vmatpush1.xpose.msra.mxu0 0.0
    %3911 = vmatprep.subr.mxu0 0.0
    %3912 = vmatpush1.xpose.msra.mxu0 0.0
    %3913 = vmatprep.subr.mxu0 0.0
    %3914 = vmatpush1.xpose.msra.mxu0 0.0
    %3915 = vmatprep.subr.mxu0 0.0
    %3916 = vmatpush1.xpose.msra.mxu0 0.0
    %3917 = vmatprep.subr.mxu0 0.0
    %3918 = vmatpush1.xpose.msra.mxu0 0.0
    %3919 = vmatprep.subr.mxu0 0.0
    %3920 = vmatpush1.xpose.msra.mxu0 0.0
    %3921 = vmatprep.subr.mxu0 0.0
    %3922 = vmatpush1.xpose.msra.mxu0 0.0
    %3923 = vmatprep.subr.mxu0 0.0
    %3924 = vmatpush1.xpose.msra.mxu0 0.0
    %3925 = vmatprep.subr.mxu0 0.0
    %3926 = vmatpush1.xpose.msra.mxu0 0.0
    %3927 = vmatprep.subr.mxu0 0.0
    %3928 = vmatpush1.xpose.msra.mxu0 0.0
    %3929 = vmatprep.subr.mxu0 0.0
    %3930 = vmatpush1.xpose.msra.mxu0 0.0
    %3931 = vmatprep.subr.mxu0 0.0
    %3932 = vmatpush1.xpose.msra.mxu0 0.0
    %3933 = vmatprep.subr.mxu0 0.0
    %3934 = vmatpush1.xpose.msra.mxu0 0.0
    %3935 = vmatprep.subr.mxu0 0.0
    %3936 = vmatpush1.xpose.msra.mxu0 0.0
    %3937 = vmatprep.mubr.f32.mxu0 0.0
    %3938 = vmatmul.mubr.f32.gmra.mrb[0].mxu0 %v3869
    %v3939 = vpop.f32.mrb[0].mxu0
    %v3940 = vadd.f32 %v521, %v3939
    %v3941 = vpop.f32.mrb[0].mxu0
    %3942 = vdwg.mxu0
    %v3943 = vsel %vm984, %v3862, -inf
    %3944 = vmax.xlane.f32.xlu0 %v3943
    %v3945 = vpop.xlane.xlu0 %3944
    %v3946 = vsel %vm984, %v3940, -inf
    %3947 = vmax.xlane.f32.xlu0 %v3946
    %v3948 = vpop.xlane.xlu0 %3947
    %v3949 = vsub.f32 %v3862, %v3945
    %v3950 = vsub.f32 %v3940, %v3948
    %v3951 = vmul.f32 %v3949, 1.442695
    %v3952 = vpow.pop %v3951
    %v3953 = vmul.f32 %v3950, 1.442695
    %v3954 = vpow.pop %v3953
    %v3955 = vmul.f32 %v3952, %v1002
    %v3956 = vmul.f32 %v3954, %v1006
    %v3957 = vsel %vm984, %v3955, 0.0
    %3958 = vadd.xlane.f32.xlu0 %v3957
    %v3959 = vpop.xlane.xlu0 %3958
    %v3960 = vsel %vm984, %v3956, 0.0
    %3961 = vadd.xlane.f32.xlu0 %v3960
    %v3962 = vpop.xlane.xlu0 %3961
    %v3963 = vrcp.pop %v3959
    %v3964 = vrcp.pop %v3962
    %v3965 = vmul.f32 %v3955, %v3963
    %v3966 = vmul.f32 %v3956, %v3964
    %3967 = vrot.lane.b32.xlu0 %v2791, 32
    %v3968 = vpop.permute.xlu0 %3967
    %v3971 = vsel %vm984, %v3965, 0
    %3973 = vmatprep.subr.mxu0 0.0
    %3974 = vmatpush1.msra.mxu0 %v3968
    %3975 = vmatprep.subr.mxu0 0.0
    %3976 = vmatpush1.msra.mxu0 0.0
    %3977 = vmatprep.subr.mxu0 0.0
    %3978 = vmatpush1.msra.mxu0 0.0
    %3979 = vmatprep.subr.mxu0 0.0
    %3980 = vmatpush1.msra.mxu0 0.0
    %3981 = vmatprep.subr.mxu0 0.0
    %3982 = vmatpush1.msra.mxu0 0.0
    %3983 = vmatprep.subr.mxu0 0.0
    %3984 = vmatpush1.msra.mxu0 0.0
    %3985 = vmatprep.subr.mxu0 0.0
    %3986 = vmatpush1.msra.mxu0 0.0
    %3987 = vmatprep.subr.mxu0 0.0
    %3988 = vmatpush1.msra.mxu0 0.0
    %3989 = vmatprep.subr.mxu0 0.0
    %3990 = vmatpush1.msra.mxu0 0.0
    %3991 = vmatprep.subr.mxu0 0.0
    %3992 = vmatpush1.msra.mxu0 0.0
    %3993 = vmatprep.subr.mxu0 0.0
    %3994 = vmatpush1.msra.mxu0 0.0
    %3995 = vmatprep.subr.mxu0 0.0
    %3996 = vmatpush1.msra.mxu0 0.0
    %3997 = vmatprep.subr.mxu0 0.0
    %3998 = vmatpush1.msra.mxu0 0.0
    %3999 = vmatprep.subr.mxu0 0.0
    %4000 = vmatpush1.msra.mxu0 0.0
    %4001 = vmatprep.subr.mxu0 0.0
    %4002 = vmatpush1.msra.mxu0 0.0
    %4003 = vmatprep.subr.mxu0 0.0
    %4004 = vmatpush1.msra.mxu0 0.0
    %4005 = vmatprep.subr.mxu0 0.0
    %4006 = vmatpush1.msra.mxu0 0.0
    %4007 = vmatprep.subr.mxu0 0.0
    %4008 = vmatpush1.msra.mxu0 0.0
    %4009 = vmatprep.subr.mxu0 0.0
    %4010 = vmatpush1.msra.mxu0 0.0
    %4011 = vmatprep.subr.mxu0 0.0
    %4012 = vmatpush1.msra.mxu0 0.0
    %4013 = vmatprep.subr.mxu0 0.0
    %4014 = vmatpush1.msra.mxu0 0.0
    %4015 = vmatprep.subr.mxu0 0.0
    %4016 = vmatpush1.msra.mxu0 0.0
    %4017 = vmatprep.subr.mxu0 0.0
    %4018 = vmatpush1.msra.mxu0 0.0
    %4019 = vmatprep.subr.mxu0 0.0
    %4020 = vmatpush1.msra.mxu0 0.0
    %4021 = vmatprep.subr.mxu0 0.0
    %4022 = vmatpush1.msra.mxu0 0.0
    %4023 = vmatprep.subr.mxu0 0.0
    %4024 = vmatpush1.msra.mxu0 0.0
    %4025 = vmatprep.subr.mxu0 0.0
    %4026 = vmatpush1.msra.mxu0 0.0
    %4027 = vmatprep.subr.mxu0 0.0
    %4028 = vmatpush1.msra.mxu0 0.0
    %4029 = vmatprep.subr.mxu0 0.0
    %4030 = vmatpush1.msra.mxu0 0.0
    %4031 = vmatprep.subr.mxu0 0.0
    %4032 = vmatpush1.msra.mxu0 0.0
    %4033 = vmatprep.subr.mxu0 0.0
    %4034 = vmatpush1.msra.mxu0 0.0
    %4035 = vmatprep.subr.mxu0 0.0
    %4036 = vmatpush1.msra.mxu0 0.0
    %4037 = vmatprep.mubr.f32.mxu0 0.0
    %4038 = vmatmul.mubr.f32.gmra.mrb[0].mxu0 %v3971
    %v4039 = vpop.f32.mrb[0].mxu0
    %v4040 = vadd.f32 0.0, %v4039
    %v4041 = vpop.f32.mrb[0].mxu0
    %4042 = vdwg.mxu0
    %4043 = vrot.lane.b32.xlu0 %v2796, 32
    %v4044 = vpop.permute.xlu0 %4043
    %v4047 = vsel %vm984, %v3966, 0
    %4049 = vmatprep.subr.mxu0 0.0
    %4050 = vmatpush1.msra.mxu0 %v4044
    %4051 = vmatprep.subr.mxu0 0.0
    %4052 = vmatpush1.msra.mxu0 0.0
    %4053 = vmatprep.subr.mxu0 0.0
    %4054 = vmatpush1.msra.mxu0 0.0
    %4055 = vmatprep.subr.mxu0 0.0
    %4056 = vmatpush1.msra.mxu0 0.0
    %4057 = vmatprep.subr.mxu0 0.0
    %4058 = vmatpush1.msra.mxu0 0.0
    %4059 = vmatprep.subr.mxu0 0.0
    %4060 = vmatpush1.msra.mxu0 0.0
    %4061 = vmatprep.subr.mxu0 0.0
    %4062 = vmatpush1.msra.mxu0 0.0
    %4063 = vmatprep.subr.mxu0 0.0
    %4064 = vmatpush1.msra.mxu0 0.0
    %4065 = vmatprep.subr.mxu0 0.0
    %4066 = vmatpush1.msra.mxu0 0.0
    %4067 = vmatprep.subr.mxu0 0.0
    %4068 = vmatpush1.msra.mxu0 0.0
    %4069 = vmatprep.subr.mxu0 0.0
    %4070 = vmatpush1.msra.mxu0 0.0
    %4071 = vmatprep.subr.mxu0 0.0
    %4072 = vmatpush1.msra.mxu0 0.0
    %4073 = vmatprep.subr.mxu0 0.0
    %4074 = vmatpush1.msra.mxu0 0.0
    %4075 = vmatprep.subr.mxu0 0.0
    %4076 = vmatpush1.msra.mxu0 0.0
    %4077 = vmatprep.subr.mxu0 0.0
    %4078 = vmatpush1.msra.mxu0 0.0
    %4079 = vmatprep.subr.mxu0 0.0
    %4080 = vmatpush1.msra.mxu0 0.0
    %4081 = vmatprep.subr.mxu0 0.0
    %4082 = vmatpush1.msra.mxu0 0.0
    %4083 = vmatprep.subr.mxu0 0.0
    %4084 = vmatpush1.msra.mxu0 0.0
    %4085 = vmatprep.subr.mxu0 0.0
    %4086 = vmatpush1.msra.mxu0 0.0
    %4087 = vmatprep.subr.mxu0 0.0
    %4088 = vmatpush1.msra.mxu0 0.0
    %4089 = vmatprep.subr.mxu0 0.0
    %4090 = vmatpush1.msra.mxu0 0.0
    %4091 = vmatprep.subr.mxu0 0.0
    %4092 = vmatpush1.msra.mxu0 0.0
    %4093 = vmatprep.subr.mxu0 0.0
    %4094 = vmatpush1.msra.mxu0 0.0
    %4095 = vmatprep.subr.mxu0 0.0
    %4096 = vmatpush1.msra.mxu0 0.0
    %4097 = vmatprep.subr.mxu0 0.0
    %4098 = vmatpush1.msra.mxu0 0.0
    %4099 = vmatprep.subr.mxu0 0.0
    %4100 = vmatpush1.msra.mxu0 0.0
    %4101 = vmatprep.subr.mxu0 0.0
    %4102 = vmatpush1.msra.mxu0 0.0
    %4103 = vmatprep.subr.mxu0 0.0
    %4104 = vmatpush1.msra.mxu0 0.0
    %4105 = vmatprep.subr.mxu0 0.0
    %4106 = vmatpush1.msra.mxu0 0.0
    %4107 = vmatprep.subr.mxu0 0.0
    %4108 = vmatpush1.msra.mxu0 0.0
    %4109 = vmatprep.subr.mxu0 0.0
    %4110 = vmatpush1.msra.mxu0 0.0
    %4111 = vmatprep.subr.mxu0 0.0
    %4112 = vmatpush1.msra.mxu0 0.0
    %4113 = vmatprep.mubr.f32.mxu0 0.0
    %4114 = vmatmul.mubr.f32.gmra.mrb[0].mxu0 %v4047
    %v4115 = vpop.f32.mrb[0].mxu0
    %v4116 = vadd.f32 0.0, %v4115
    %v4117 = vpop.f32.mrb[0].mxu0
    %4118 = vdwg.mxu0
    %4121 = vrot.lane.b32.xlu0 %v3375, 32
    %v4122 = vpop.permute.xlu0 %4121
    %4123 = vrot.lane.b32.xlu0 %v3452, 32
    %v4124 = vpop.permute.xlu0 %4123
    %4129 = vrot.lane.b32.xlu0 %v3708, 64
    %v4130 = vpop.permute.xlu0 %4129
    %4131 = vrot.lane.b32.xlu0 %v3784, 64
    %v4132 = vpop.permute.xlu0 %4131
    %4137 = vrot.lane.b32.xlu0 %v4040, 96
    %v4138 = vpop.permute.xlu0 %4137
    %4139 = vrot.lane.b32.xlu0 %v4116, 96
    %v4140 = vpop.permute.xlu0 %4139
    %v4143 = vsel %vm524, %v3045, %v4122
    %v4144 = vsel %vm524, %v3118, %v4124
    %v4145 = vsel %vm2191, %v4143, %v4130
    %v4146 = vsel %vm2191, %v4144, %v4132
    %v4147 = vsel %vm2194, %v4145, %v4138
    %v4148 = vsel %vm2194, %v4146, %v4140
    %s4149 = scalar_lea.vmem %s15, 128
    %v4150 = vld [vmem:[%s4149] sm:$0xff]
    %v4151 = vld [vmem:[%s4149 + $0x8] sm:$0xff]
    %v4152 = vld [vmem:[%s4149 + $0x10] sm:$0xff]
    %v4153 = vld [vmem:[%s4149 + $0x18] sm:$0xff]
    %v4154 = vld [vmem:[%s4149 + $0x20] sm:$0xff]
    %v4155 = vld [vmem:[%s4149 + $0x28] sm:$0xff]
    %v4156 = vld [vmem:[%s4149 + $0x30] sm:$0xff]
    %v4157 = vld [vmem:[%s4149 + $0x38] sm:$0xff]
    %v4158 = vld [vmem:[%s4149 + $0x40] sm:$0xff]
    %v4159 = vld [vmem:[%s4149 + $0x48] sm:$0xff]
    %v4160 = vld [vmem:[%s4149 + $0x50] sm:$0xff]
    %v4161 = vld [vmem:[%s4149 + $0x58] sm:$0xff]
    %v4162 = vld [vmem:[%s4149 + $0x60] sm:$0xff]
    %v4163 = vld [vmem:[%s4149 + $0x68] sm:$0xff]
    %v4164 = vld [vmem:[%s4149 + $0x70] sm:$0xff]
    %v4165 = vld [vmem:[%s4149 + $0x78] sm:$0xff]
    %s4166 = scalar_lea.vmem [#allocation10], 1
    %v4167 = vld [vmem:[%s4166] sm:$0x1]
    %v4169 = vlaneseq
    %v4170 = vshrl.u32 %v4169, 7
    %v4171 = vsub.s32 0, %v4170
    %v4172 = vrot.slane %v4167, %v4171
    %4174 = vmatprep.subr.mxu0 0.0
    %4175 = vmatpush1.msra.mxu0 %v4150
    %4176 = vmatprep.subr.mxu0 0.0
    %4177 = vmatpush1.msra.mxu0 %v4151
    %4178 = vmatprep.subr.mxu0 0.0
    %4179 = vmatpush1.msra.mxu0 %v4152
    %4180 = vmatprep.subr.mxu0 0.0
    %4181 = vmatpush1.msra.mxu0 %v4153
    %4182 = vmatprep.subr.mxu0 0.0
    %4183 = vmatpush1.msra.mxu0 %v4154
    %4184 = vmatprep.subr.mxu0 0.0
    %4185 = vmatpush1.msra.mxu0 %v4155
    %4186 = vmatprep.subr.mxu0 0.0
    %4187 = vmatpush1.msra.mxu0 %v4156
    %4188 = vmatprep.subr.mxu0 0.0
    %4189 = vmatpush1.msra.mxu0 %v4157
    %4190 = vmatprep.subr.mxu0 0.0
    %4191 = vmatpush1.msra.mxu0 %v4158
    %4192 = vmatprep.subr.mxu0 0.0
    %4193 = vmatpush1.msra.mxu0 %v4159
    %4194 = vmatprep.subr.mxu0 0.0
    %4195 = vmatpush1.msra.mxu0 %v4160
    %4196 = vmatprep.subr.mxu0 0.0
    %4197 = vmatpush1.msra.mxu0 %v4161
    %4198 = vmatprep.subr.mxu0 0.0
    %4199 = vmatpush1.msra.mxu0 %v4162
    %4200 = vmatprep.subr.mxu0 0.0
    %4201 = vmatpush1.msra.mxu0 %v4163
    %4202 = vmatprep.subr.mxu0 0.0
    %4203 = vmatpush1.msra.mxu0 %v4164
    %4204 = vmatprep.subr.mxu0 0.0
    %4205 = vmatpush1.msra.mxu0 %v4165
    %4206 = vmatprep.subr.mxu0 0.0
    %4207 = vmatpush1.msra.mxu0 0.0
    %4208 = vmatprep.subr.mxu0 0.0
    %4209 = vmatpush1.msra.mxu0 0.0
    %4210 = vmatprep.subr.mxu0 0.0
    %4211 = vmatpush1.msra.mxu0 0.0
    %4212 = vmatprep.subr.mxu0 0.0
    %4213 = vmatpush1.msra.mxu0 0.0
    %4214 = vmatprep.subr.mxu0 0.0
    %4215 = vmatpush1.msra.mxu0 0.0
    %4216 = vmatprep.subr.mxu0 0.0
    %4217 = vmatpush1.msra.mxu0 0.0
    %4218 = vmatprep.subr.mxu0 0.0
    %4219 = vmatpush1.msra.mxu0 0.0
    %4220 = vmatprep.subr.mxu0 0.0
    %4221 = vmatpush1.msra.mxu0 0.0
    %4222 = vmatprep.subr.mxu0 0.0
    %4223 = vmatpush1.msra.mxu0 0.0
    %4224 = vmatprep.subr.mxu0 0.0
    %4225 = vmatpush1.msra.mxu0 0.0
    %4226 = vmatprep.subr.mxu0 0.0
    %4227 = vmatpush1.msra.mxu0 0.0
    %4228 = vmatprep.subr.mxu0 0.0
    %4229 = vmatpush1.msra.mxu0 0.0
    %4230 = vmatprep.subr.mxu0 0.0
    %4231 = vmatpush1.msra.mxu0 0.0
    %4232 = vmatprep.subr.mxu0 0.0
    %4233 = vmatpush1.msra.mxu0 0.0
    %4234 = vmatprep.subr.mxu0 0.0
    %4235 = vmatpush1.msra.mxu0 0.0
    %4236 = vmatprep.subr.mxu0 0.0
    %4237 = vmatpush1.msra.mxu0 0.0
    %4238 = vmatprep.mubr.f32.mxu0 0.0
    %4239 = vmatmul.mubr.f32.gmra.mrb[0].mxu0 %v4147
    %v4240 = vpop.f32.mrb[0].mxu0
    %v4241 = vadd.f32 %v4172, %v4240
    %v4242 = vpop.f32.mrb[0].mxu0
    %4243 = vmatprep.mubr.f32.mxu0 0.0
    %4244 = vmatmul.mubr.f32.gmra.mrb[0].mxu0 %v4148
    %v4245 = vpop.f32.mrb[0].mxu0
    %v4246 = vadd.f32 %v4172, %v4245
    %v4247 = vpop.f32.mrb[0].mxu0
    %4248 = vdwg.mxu0
    %v4249 = vadd.f32 %v2481, %v4241
    %v4250 = vadd.f32 %v2482, %v4246
    %v4251 = vsel %vm524, %v4249, 0.0
    %4252 = vadd.xlane.f32.xlu0 %v4251
    %v4253 = vpop.xlane.xlu0 %4252
    %v4254 = vsel %vm524, %v4250, 0.0
    %4255 = vadd.xlane.f32.xlu0 %v4254
    %v4256 = vpop.xlane.xlu0 %4255
    %v4257 = vmul.f32 %v4253, %v531
    %v4258 = vmul.f32 %v4256, %v531
    %v4259 = vsub.f32 %v4249, %v4257
    %v4260 = vsub.f32 %v4250, %v4258
    %v4261 = vmul.f32 %v4259, %v4259
    %v4262 = vmul.f32 %v4260, %v4260
    %v4263 = vsel %vm524, %v4261, 0.0
    %4264 = vadd.xlane.f32.xlu0 %v4263
    %v4265 = vpop.xlane.xlu0 %4264
    %v4266 = vsel %vm524, %v4262, 0.0
    %4267 = vadd.xlane.f32.xlu0 %v4266
    %v4268 = vpop.xlane.xlu0 %4267
    %v4269 = vmul.f32 %v4265, %v531
    %v4270 = vmul.f32 %v4268, %v531
    %v4271 = vadd.f32 %v4269, 1e-05
    %v4272 = vadd.f32 %v4270, 1e-05
    %v4273 = vrsqrt.pop %v4271
    %v4274 = vrsqrt.pop %v4272
    %v4275 = vmul.f32 %v4259, %v4273
    %v4276 = vmul.f32 %v4260, %v4274
    %v4277 = vmul.f32 %v4275, %v2517
    %v4278 = vmul.f32 %v4276, %v2517
    %v4279 = vadd.f32 %v4277, %v2525
    %v4280 = vadd.f32 %v4278, %v2525
    %s4281 = scalar_lea.vmem %s17, 32
    %v4282 = vld [vmem:[%s4281] sm:$0xff]
    %v4283 = vld [vmem:[%s4281 + $0x8] sm:$0xff]
    %v4284 = vld [vmem:[%s4281 + $0x10] sm:$0xff]
    %v4285 = vld [vmem:[%s4281 + $0x18] sm:$0xff]
    %s4286 = scalar_lea.vmem [#allocation12], 1
    %v4287 = vld [vmem:[%s4286] sm:$0x1]
    %v4289 = vlaneseq
    %v4290 = vshrl.u32 %v4289, 7
    %v4291 = vsub.s32 0, %v4290
    %v4292 = vrot.slane %v4287, %v4291
    %v4295 = vsel %vm524, %v4279, 0
    %v4298 = vsel %vm524, %v4280, 0
    %4300 = vmatprep.subr.mxu0 0.0
    %4301 = vmatpush1.msra.mxu0 %v4282
    %4302 = vmatprep.subr.mxu0 0.0
    %4303 = vmatpush1.msra.mxu0 %v4283
    %4304 = vmatprep.subr.mxu0 0.0
    %4305 = vmatpush1.msra.mxu0 %v4284
    %4306 = vmatprep.subr.mxu0 0.0
    %4307 = vmatpush1.msra.mxu0 %v4285
    %4308 = vmatprep.subr.mxu0 0.0
    %4309 = vmatpush1.msra.mxu0 0.0
    %4310 = vmatprep.subr.mxu0 0.0
    %4311 = vmatpush1.msra.mxu0 0.0
    %4312 = vmatprep.subr.mxu0 0.0
    %4313 = vmatpush1.msra.mxu0 0.0
    %4314 = vmatprep.subr.mxu0 0.0
    %4315 = vmatpush1.msra.mxu0 0.0
    %4316 = vmatprep.subr.mxu0 0.0
    %4317 = vmatpush1.msra.mxu0 0.0
    %4318 = vmatprep.subr.mxu0 0.0
    %4319 = vmatpush1.msra.mxu0 0.0
    %4320 = vmatprep.subr.mxu0 0.0
    %4321 = vmatpush1.msra.mxu0 0.0
    %4322 = vmatprep.subr.mxu0 0.0
    %4323 = vmatpush1.msra.mxu0 0.0
    %4324 = vmatprep.subr.mxu0 0.0
    %4325 = vmatpush1.msra.mxu0 0.0
    %4326 = vmatprep.subr.mxu0 0.0
    %4327 = vmatpush1.msra.mxu0 0.0
    %4328 = vmatprep.subr.mxu0 0.0
    %4329 = vmatpush1.msra.mxu0 0.0
    %4330 = vmatprep.subr.mxu0 0.0
    %4331 = vmatpush1.msra.mxu0 0.0
    %4332 = vmatprep.subr.mxu0 0.0
    %4333 = vmatpush1.msra.mxu0 0.0
    %4334 = vmatprep.subr.mxu0 0.0
    %4335 = vmatpush1.msra.mxu0 0.0
    %4336 = vmatprep.subr.mxu0 0.0
    %4337 = vmatpush1.msra.mxu0 0.0
    %4338 = vmatprep.subr.mxu0 0.0
    %4339 = vmatpush1.msra.mxu0 0.0
    %4340 = vmatprep.subr.mxu0 0.0
    %4341 = vmatpush1.msra.mxu0 0.0
    %4342 = vmatprep.subr.mxu0 0.0
    %4343 = vmatpush1.msra.mxu0 0.0
    %4344 = vmatprep.subr.mxu0 0.0
    %4345 = vmatpush1.msra.mxu0 0.0
    %4346 = vmatprep.subr.mxu0 0.0
    %4347 = vmatpush1.msra.mxu0 0.0
    %4348 = vmatprep.subr.mxu0 0.0
    %4349 = vmatpush1.msra.mxu0 0.0
    %4350 = vmatprep.subr.mxu0 0.0
    %4351 = vmatpush1.msra.mxu0 0.0
    %4352 = vmatprep.subr.mxu0 0.0
    %4353 = vmatpush1.msra.mxu0 0.0
    %4354 = vmatprep.subr.mxu0 0.0
    %4355 = vmatpush1.msra.mxu0 0.0
    %4356 = vmatprep.subr.mxu0 0.0
    %4357 = vmatpush1.msra.mxu0 0.0
    %4358 = vmatprep.subr.mxu0 0.0
    %4359 = vmatpush1.msra.mxu0 0.0
    %4360 = vmatprep.subr.mxu0 0.0
    %4361 = vmatpush1.msra.mxu0 0.0
    %4362 = vmatprep.subr.mxu0 0.0
    %4363 = vmatpush1.msra.mxu0 0.0
    %4364 = vmatprep.mubr.f32.mxu0 0.0
    %4365 = vmatmul.mubr.f32.gmra.mrb[0].mxu0 %v4295
    %v4366 = vpop.f32.mrb[0].mxu0
    %v4367 = vadd.f32 %v4292, %v4366
    %v4368 = vpop.f32.mrb[0].mxu0
    %4369 = vmatprep.mubr.f32.mxu0 0.0
    %4370 = vmatmul.mubr.f32.gmra.mrb[0].mxu0 %v4298
    %v4371 = vpop.f32.mrb[0].mxu0
    %v4372 = vadd.f32 %v4292, %v4371
    %v4373 = vpop.f32.mrb[0].mxu0
    %4374 = vdwg.mxu0
    %vm4375 = vcmp.gt.f32.partialorder %v4367, 20.0
    %vm4376 = vcmp.gt.f32.partialorder %v4372, 20.0
    %v4377 = vmin.f32 %v4367, 20.0
    %v4378 = vmin.f32 %v4372, 20.0
    %v4379 = vmul.f32 %v4377, 1.442695
    %v4380 = vpow.pop %v4379
    %v4381 = vmul.f32 %v4378, 1.442695
    %v4382 = vpow.pop %v4381
    %v4383 = vadd.f32 %v4380, 1.0
    %v4384 = vlog2.pop %v4383
    %v4385 = vmul.f32 %v4384, 0.6931472
    %v4386 = vmul.f32 -0.5, %v4380
    %v4387 = vadd.f32 %v4386, 1.0
    %v4388 = vmul.f32 %v4387, %v4380
    %v4389 = vand.u32 2147483647, %v4380
    %vm4390 = vcmp.lt.f32.partialorder %v4389, 0.0004427343
    %v4391 = vsel %vm4390, %v4388, %v4385
    %v4392 = vadd.f32 %v4382, 1.0
    %v4393 = vlog2.pop %v4392
    %v4394 = vmul.f32 %v4393, 0.6931472
    %v4395 = vmul.f32 -0.5, %v4382
    %v4396 = vadd.f32 %v4395, 1.0
    %v4397 = vmul.f32 %v4396, %v4382
    %v4398 = vand.u32 2147483647, %v4382
    %vm4399 = vcmp.lt.f32.partialorder %v4398, 0.0004427343
    %v4400 = vsel %vm4399, %v4397, %v4394
    %v4401 = vsel %vm4375, %v4367, %v4391
    %v4402 = vsel %vm4376, %v4372, %v4400
    %v4403 = vtanh.pop %v4401
    %v4404 = vtanh.pop %v4402
    %v4405 = vmul.f32 %v4367, %v4403
    %v4406 = vmul.f32 %v4372, %v4404
    %v4407 = vadd.f32 %v4249, %v4405
    %v4408 = vadd.f32 %v4250, %v4406
    %v4409 = vsel %vm524, %v4407, 0.0
    %4410 = vadd.xlane.f32.xlu0 %v4409
    %v4411 = vpop.xlane.xlu0 %4410
    %v4412 = vsel %vm524, %v4408, 0.0
    %4413 = vadd.xlane.f32.xlu0 %v4412
    %v4414 = vpop.xlane.xlu0 %4413
    %v4415 = vmul.f32 %v4411, %v531
    %v4416 = vmul.f32 %v4414, %v531
    %v4417 = vsub.f32 %v4407, %v4415
    %v4418 = vsub.f32 %v4408, %v4416
    %v4419 = vmul.f32 %v4417, %v4417
    %v4420 = vmul.f32 %v4418, %v4418
    %v4421 = vsel %vm524, %v4419, 0.0
    %4422 = vadd.xlane.f32.xlu0 %v4421
    %v4423 = vpop.xlane.xlu0 %4422
    %v4424 = vsel %vm524, %v4420, 0.0
    %4425 = vadd.xlane.f32.xlu0 %v4424
    %v4426 = vpop.xlane.xlu0 %4425
    %v4427 = vmul.f32 %v4423, %v531
    %v4428 = vmul.f32 %v4426, %v531
    %v4429 = vadd.f32 %v4427, 1e-05
    %v4430 = vadd.f32 %v4428, 1e-05
    %v4431 = vrsqrt.pop %v4429
    %v4432 = vrsqrt.pop %v4430
    %v4433 = vmul.f32 %v4417, %v4431
    %v4434 = vmul.f32 %v4418, %v4432
    %v4435 = vmul.f32 %v4433, %v2517
    %v4436 = vmul.f32 %v4434, %v2517
    %v4437 = vadd.f32 %v4435, %v2525
    %v4438 = vadd.f32 %v4436, %v2525
    %v4439 = vadd.f32 %v4437, %v490
    %v4440 = vadd.f32 %v4438, %v491
    %4441 = vset.pattern.permute.xlu0 0
    %4442 = vperm.xlu0 %4441, %v198
    %v4443 = vpop.permute.xlu0 %4442
    %4445 = vset.pattern.permute.xlu0 0
    %4446 = vperm.xlu0 %4445, %v199
    %v4447 = vpop.permute.xlu0 %4446
    %v4449 = vmul.f32 %v4443, %v4439
    %v4450 = vmul.f32 %v4447, %v4440
    %v4451 = vsel %vm524, %v4449, 0.0
    %v4452 = vrot.slane %v4451, 4
    %v4453 = vadd.f32 %v4451, %v4452
    %v4454 = vrot.slane %v4453, 2
    %v4455 = vadd.f32 %v4453, %v4454
    %v4456 = vrot.slane %v4455, 1
    %v4457 = vadd.f32 %v4455, %v4456
    %v4458 = vsel %vm524, %v4450, 0.0
    %v4459 = vrot.slane %v4458, 4
    %v4460 = vadd.f32 %v4458, %v4459
    %v4461 = vrot.slane %v4460, 2
    %v4462 = vadd.f32 %v4460, %v4461
    %v4463 = vrot.slane %v4462, 1
    %v4464 = vadd.f32 %v4462, %v4463
    %v4465 = vld [vmem:[%s19] sm:$0x1]
    %v4466 = vld [vmem:[%s20] sm:$0x1]
    %vm4469 = vcmask 1041409
    %v4470 = vsel %vm4469, %v4464, %v4457
    %vm4472 = vcmask 254976
    %v4473 = vsel %vm4472, %v4470, 0.0
    %4474 = vadd.xlane.f32.xlu0 %v4473
    %v4475 = vpop.xlane.xlu0 %4474
    %v4476 = vmul.f32 %v4475, %v531
    %v4478 = vrot.slane %v4476, 1
    %v4481 = vsub.f32 %v4457, %v4476
    %v4482 = vsub.f32 %v4464, %v4478
    %v4483 = vmul.f32 %v4481, %v4481
    %v4484 = vmul.f32 %v4482, %v4482
    %v4487 = vrot.slane %v4484, 7
    %v4488 = vsel %vm4469, %v4487, %v4483
    %v4490 = vsel %vm4472, %v4488, 0.0
    %4491 = vadd.xlane.f32.xlu0 %v4490
    %v4492 = vpop.xlane.xlu0 %4491
    %v4493 = vmul.f32 %v4492, %v531
    %v4494 = vadd.f32 %v4493, 1e-05
    %v4495 = vrsqrt.pop %v4494
    %v4497 = vrot.slane %v4495, 1
    %v4500 = vmul.f32 %v4481, %v4495
    %v4501 = vmul.f32 %v4482, %v4497
    %v4503 = vlaneseq
    %v4504 = vshrl.u32 %v4503, 7
    %v4505 = vsub.s32 0, %v4504
    %v4506 = vrot.slane %v4465, %v4505
    %v4508 = vmul.f32 %v4500, %v4506
    %v4509 = vmul.f32 %v4501, %v4506
    %v4511 = vlaneseq
    %v4512 = vshrl.u32 %v4511, 7
    %v4513 = vsub.s32 0, %v4512
    %v4514 = vrot.slane %v4466, %v4513
    %v4516 = vadd.f32 %v4508, %v4514
    %v4517 = vadd.f32 %v4509, %v4514
    %v4518 = vld [vmem:[#allocation13] sm:$0xff]
    %v4519 = vld [vmem:[#allocation13 + $0x8] sm:$0xff]
    %v4520 = vld [vmem:[#allocation13 + $0x10] sm:$0xff]
    %v4521 = vld [vmem:[#allocation13 + $0x18] sm:$0xff]
    %v4522 = vld [vmem:[#allocation15] sm:$0x1]
    %v4524 = vlaneseq
    %v4525 = vshrl.u32 %v4524, 7
    %v4526 = vsub.s32 0, %v4525
    %v4527 = vrot.slane %v4522, %v4526
    %v4531 = vrot.slane %v4517, 7
    %v4532 = vsel %vm4469, %v4531, %v4516
    %v4533 = vsel %vm524, %v4532, 0
    %4535 = vmatprep.subr.mxu0 0.0
    %4536 = vmatpush1.msra.mxu0 %v4518
    %4537 = vmatprep.subr.mxu0 0.0
    %4538 = vmatpush1.msra.mxu0 %v4519
    %4539 = vmatprep.subr.mxu0 0.0
    %4540 = vmatpush1.msra.mxu0 %v4520
    %4541 = vmatprep.subr.mxu0 0.0
    %4542 = vmatpush1.msra.mxu0 %v4521
    %4543 = vmatprep.subr.mxu0 0.0
    %4544 = vmatpush1.msra.mxu0 0.0
    %4545 = vmatprep.subr.mxu0 0.0
    %4546 = vmatpush1.msra.mxu0 0.0
    %4547 = vmatprep.subr.mxu0 0.0
    %4548 = vmatpush1.msra.mxu0 0.0
    %4549 = vmatprep.subr.mxu0 0.0
    %4550 = vmatpush1.msra.mxu0 0.0
    %4551 = vmatprep.subr.mxu0 0.0
    %4552 = vmatpush1.msra.mxu0 0.0
    %4553 = vmatprep.subr.mxu0 0.0
    %4554 = vmatpush1.msra.mxu0 0.0
    %4555 = vmatprep.subr.mxu0 0.0
    %4556 = vmatpush1.msra.mxu0 0.0
    %4557 = vmatprep.subr.mxu0 0.0
    %4558 = vmatpush1.msra.mxu0 0.0
    %4559 = vmatprep.subr.mxu0 0.0
    %4560 = vmatpush1.msra.mxu0 0.0
    %4561 = vmatprep.subr.mxu0 0.0
    %4562 = vmatpush1.msra.mxu0 0.0
    %4563 = vmatprep.subr.mxu0 0.0
    %4564 = vmatpush1.msra.mxu0 0.0
    %4565 = vmatprep.subr.mxu0 0.0
    %4566 = vmatpush1.msra.mxu0 0.0
    %4567 = vmatprep.subr.mxu0 0.0
    %4568 = vmatpush1.msra.mxu0 0.0
    %4569 = vmatprep.subr.mxu0 0.0
    %4570 = vmatpush1.msra.mxu0 0.0
    %4571 = vmatprep.subr.mxu0 0.0
    %4572 = vmatpush1.msra.mxu0 0.0
    %4573 = vmatprep.subr.mxu0 0.0
    %4574 = vmatpush1.msra.mxu0 0.0
    %4575 = vmatprep.subr.mxu0 0.0
    %4576 = vmatpush1.msra.mxu0 0.0
    %4577 = vmatprep.subr.mxu0 0.0
    %4578 = vmatpush1.msra.mxu0 0.0
    %4579 = vmatprep.subr.mxu0 0.0
    %4580 = vmatpush1.msra.mxu0 0.0
    %4581 = vmatprep.subr.mxu0 0.0
    %4582 = vmatpush1.msra.mxu0 0.0
    %4583 = vmatprep.subr.mxu0 0.0
    %4584 = vmatpush1.msra.mxu0 0.0
    %4585 = vmatprep.subr.mxu0 0.0
    %4586 = vmatpush1.msra.mxu0 0.0
    %4587 = vmatprep.subr.mxu0 0.0
    %4588 = vmatpush1.msra.mxu0 0.0
    %4589 = vmatprep.subr.mxu0 0.0
    %4590 = vmatpush1.msra.mxu0 0.0
    %4591 = vmatprep.subr.mxu0 0.0
    %4592 = vmatpush1.msra.mxu0 0.0
    %4593 = vmatprep.subr.mxu0 0.0
    %4594 = vmatpush1.msra.mxu0 0.0
    %4595 = vmatprep.subr.mxu0 0.0
    %4596 = vmatpush1.msra.mxu0 0.0
    %4597 = vmatprep.subr.mxu0 0.0
    %4598 = vmatpush1.msra.mxu0 0.0
    %4599 = vmatprep.mubr.f32.mxu0 0.0
    %4600 = vmatmul.mubr.f32.gmra.mrb[0].mxu0 %v4533
    %v4601 = vpop.f32.mrb[0].mxu0
    %v4602 = vadd.f32 %v4527, %v4601
    %v4603 = vpop.f32.mrb[0].mxu0
    %4604 = vdwg.mxu0
    %vm4605 = vcmp.gt.f32.partialorder %v4602, 20.0
    %v4606 = vmin.f32 %v4602, 20.0
    %v4607 = vmul.f32 %v4606, 1.442695
    %v4608 = vpow.pop %v4607
    %v4609 = vadd.f32 %v4608, 1.0
    %v4610 = vlog2.pop %v4609
    %v4611 = vmul.f32 %v4610, 0.6931472
    %v4612 = vmul.f32 -0.5, %v4608
    %v4613 = vadd.f32 %v4612, 1.0
    %v4614 = vmul.f32 %v4613, %v4608
    %v4615 = vand.u32 2147483647, %v4608
    %vm4616 = vcmp.lt.f32.partialorder %v4615, 0.0004427343
    %v4617 = vsel %vm4616, %v4614, %v4611
    %v4618 = vsel %vm4605, %v4602, %v4617
    %v4619 = vtanh.pop %v4618
    %v4620 = vmul.f32 %v4602, %v4619
    %v4621 = vld [vmem:[%s23] sm:$0xff]
    %v4622 = vld [vmem:[%s23 + $0x8] sm:$0xff]
    %v4623 = vld [vmem:[%s23 + $0x10] sm:$0xff]
    %v4624 = vld [vmem:[%s23 + $0x18] sm:$0xff]
    %v4625 = vld [vmem:[%s24] sm:$0x1]
    %v4627 = vlaneseq
    %v4628 = vshrl.u32 %v4627, 7
    %v4629 = vsub.s32 0, %v4628
    %v4630 = vrot.slane %v4625, %v4629
    %v4633 = vsel %vm524, %v4620, 0
    %4635 = vmatprep.subr.mxu0 0.0
    %4636 = vmatpush1.msra.mxu0 %v4621
    %4637 = vmatprep.subr.mxu0 0.0
    %4638 = vmatpush1.msra.mxu0 %v4622
    %4639 = vmatprep.subr.mxu0 0.0
    %4640 = vmatpush1.msra.mxu0 %v4623
    %4641 = vmatprep.subr.mxu0 0.0
    %4642 = vmatpush1.msra.mxu0 %v4624
    %4643 = vmatprep.subr.mxu0 0.0
    %4644 = vmatpush1.msra.mxu0 0.0
    %4645 = vmatprep.subr.mxu0 0.0
    %4646 = vmatpush1.msra.mxu0 0.0
    %4647 = vmatprep.subr.mxu0 0.0
    %4648 = vmatpush1.msra.mxu0 0.0
    %4649 = vmatprep.subr.mxu0 0.0
    %4650 = vmatpush1.msra.mxu0 0.0
    %4651 = vmatprep.subr.mxu0 0.0
    %4652 = vmatpush1.msra.mxu0 0.0
    %4653 = vmatprep.subr.mxu0 0.0
    %4654 = vmatpush1.msra.mxu0 0.0
    %4655 = vmatprep.subr.mxu0 0.0
    %4656 = vmatpush1.msra.mxu0 0.0
    %4657 = vmatprep.subr.mxu0 0.0
    %4658 = vmatpush1.msra.mxu0 0.0
    %4659 = vmatprep.subr.mxu0 0.0
    %4660 = vmatpush1.msra.mxu0 0.0
    %4661 = vmatprep.subr.mxu0 0.0
    %4662 = vmatpush1.msra.mxu0 0.0
    %4663 = vmatprep.subr.mxu0 0.0
    %4664 = vmatpush1.msra.mxu0 0.0
    %4665 = vmatprep.subr.mxu0 0.0
    %4666 = vmatpush1.msra.mxu0 0.0
    %4667 = vmatprep.subr.mxu0 0.0
    %4668 = vmatpush1.msra.mxu0 0.0
    %4669 = vmatprep.subr.mxu0 0.0
    %4670 = vmatpush1.msra.mxu0 0.0
    %4671 = vmatprep.subr.mxu0 0.0
    %4672 = vmatpush1.msra.mxu0 0.0
    %4673 = vmatprep.subr.mxu0 0.0
    %4674 = vmatpush1.msra.mxu0 0.0
    %4675 = vmatprep.subr.mxu0 0.0
    %4676 = vmatpush1.msra.mxu0 0.0
    %4677 = vmatprep.subr.mxu0 0.0
    %4678 = vmatpush1.msra.mxu0 0.0
    %4679 = vmatprep.subr.mxu0 0.0
    %4680 = vmatpush1.msra.mxu0 0.0
    %4681 = vmatprep.subr.mxu0 0.0
    %4682 = vmatpush1.msra.mxu0 0.0
    %4683 = vmatprep.subr.mxu0 0.0
    %4684 = vmatpush1.msra.mxu0 0.0
    %4685 = vmatprep.subr.mxu0 0.0
    %4686 = vmatpush1.msra.mxu0 0.0
    %4687 = vmatprep.subr.mxu0 0.0
    %4688 = vmatpush1.msra.mxu0 0.0
    %4689 = vmatprep.subr.mxu0 0.0
    %4690 = vmatpush1.msra.mxu0 0.0
    %4691 = vmatprep.subr.mxu0 0.0
    %4692 = vmatpush1.msra.mxu0 0.0
    %4693 = vmatprep.subr.mxu0 0.0
    %4694 = vmatpush1.msra.mxu0 0.0
    %4695 = vmatprep.subr.mxu0 0.0
    %4696 = vmatpush1.msra.mxu0 0.0
    %4697 = vmatprep.subr.mxu0 0.0
    %4698 = vmatpush1.msra.mxu0 0.0
    %4699 = vmatprep.mubr.f32.mxu0 0.0
    %4700 = vmatmul.mubr.f32.gmra.mrb[0].mxu0 %v4633
    %v4701 = vpop.f32.mrb[0].mxu0
    %v4702 = vadd.f32 %v4630, %v4701
    %v4703 = vpop.f32.mrb[0].mxu0
    %4704 = vdwg.mxu0
    %4705 = vst [vmem:[%s25] sm:$0x3] %v4702
    // Predicated region
    $region138: #{_lambda_.1} parent=1 // pred_check
      _
    $region139: #{_lambda_.1} parent=1 // pred_check_branch
      %4707 = sbr.rel (0) target = $region141
    $region140: #{_lambda_.1} parent=1 // pred_region
      _
    $region141: #{_lambda_.1} parent=1 // pred_fallthru
      _
    // Predicated region
    $region142: #{_lambda_.1} parent=1 // pred_check
      _
    $region143: #{_lambda_.1} parent=1 // pred_check_branch
      %4709 = sbr.rel (0) target = $region145
    $region144: #{_lambda_.1} parent=1 // pred_region
      _
    $region145: #{_lambda_.1} parent=1 // pred_fallthru
      _
    %4710 = vsyncpa [#allocation3], 1
    %4711 = vsyncpa [#allocation5], 1
    %4712 = vsyncpa [#allocation8], 1
    %4713 = vsyncpa [#allocation11], 1
    %4714 = vsyncpa [#allocation14], 1

</llo_original>
